<compile_context>
chip_gen: v5e
topology: v5e:2x2
jax: 0.10.0
libtpu: 0.0.40
codegen_flags: <defaults>
</compile_context>

<pallas_src>
import functools

import jax
import jax.numpy as jnp
from jax.experimental import pallas as pl
from jax.experimental.pallas import tpu as pltpu

LANE = 128   # lane width: pad all feature dims to a multiple of this
SUB = 16     # sublane packing for bf16: pad seq to a multiple of this


# --------------------------------------------------------------------------
# Small helpers
# --------------------------------------------------------------------------
def _rup(x, m):
    return (x + m - 1) // m * m


def _pad_to(a, shape):
    return jnp.pad(a, [(0, t - s) for s, t in zip(a.shape, shape)])


def _layernorm_padded(v, w, b, d_real, eps=1e-5):
    # v: (S, Dp) f32 with padded lanes exactly zero; w/b padded with zeros.
    inv_d = 1.0 / d_real
    mu = jnp.sum(v, axis=-1, keepdims=True) * inv_d
    ex2 = jnp.sum(v * v, axis=-1, keepdims=True) * inv_d
    var = ex2 - mu * mu
    return (v - mu) * jax.lax.rsqrt(var + eps) * w + b


def _gelu_tanh(x):
    # GELU(approximate='tanh')
    c = 0.7978845608028654  # sqrt(2/pi)
    return 0.5 * x * (1.0 + jnp.tanh(c * (x + 0.044715 * x * x * x)))


# --------------------------------------------------------------------------
# Fused encoder kernel: grid = (batch, layer)
# --------------------------------------------------------------------------
def encoder_kernel(patches_ref, wp_ref, bp_ref, pos_ref, lnf_w_ref, lnf_b_ref,
                   ln1w_ref, ln1b_ref, wqkv_ref, bqkv_ref, wo_ref, bo_ref,
                   ln2w_ref, ln2b_ref, w1_ref, b1_ref, w2_ref, b2_ref,
                   o_ref, x_sc, res_sc, *, n_heads, dh_p, d_real, s_real):
    l = pl.program_id(1)
    H = n_heads

    # ---- patch embedding + positional embedding (first layer step only) ----
    @pl.when(l == 0)
    def _():
        y = jnp.dot(patches_ref[0], wp_ref[...],
                    preferred_element_type=jnp.float32)
        x0 = y + bp_ref[...] + pos_ref[...]
        # TODO(synk): dropout after patch embedding omitted (eval mode).
        x_sc[...] = x0
        res_sc[...] = x0

    x = x_sc[...]                                   # (Sp, Dp) f32
    Sp = x.shape[0]

    # ---- x = x + attn(layernorm1(x)) ----
    h = _layernorm_padded(x, ln1w_ref[0], ln1b_ref[0], d_real)
    qkv = (jnp.dot(h.astype(jnp.bfloat16), wqkv_ref[0],
                   preferred_element_type=jnp.float32) + bqkv_ref[0])

    def split_heads(t):                             # -> (H, Sp, dh_p) bf16
        base = t * H * dh_p
        return jnp.stack(
            [qkv[:, base + hh * dh_p: base + (hh + 1) * dh_p]
             for hh in range(H)], axis=0).astype(jnp.bfloat16)

    q3, k3, v3 = split_heads(0), split_heads(1), split_heads(2)

    # scale 1/sqrt(dh) folded into the Q projection weights at pack time.
    s = jnp.einsum('hqd,hkd->hqk', q3, k3,
                   preferred_element_type=jnp.float32)      # (H, Sp, Sp)
    if s_real != Sp:  # mask padded key positions (static no-op when Sp == S)
        kmask = jax.lax.broadcasted_iota(jnp.int32, (1, 1, Sp), 2) < s_real
        s = jnp.where(kmask, s, -1e30)
    s = s - jnp.max(s, axis=-1, keepdims=True)
    p = jnp.exp(s)
    p = p * pl.reciprocal(jnp.sum(p, axis=-1, keepdims=True), approx=True)
    # TODO(synk): attention / residual dropout omitted (eval mode).

    o3 = jnp.einsum('hqk,hkd->hqd', p.astype(jnp.bfloat16), v3,
                    preferred_element_type=jnp.float32)     # (H, Sp, dh_p)
    merged = jnp.concatenate([o3[hh] for hh in range(H)], axis=-1)
    attn = (jnp.dot(merged.astype(jnp.bfloat16), wo_ref[0],
                    preferred_element_type=jnp.float32) + bo_ref[0])
    x = x + attn

    # ---- x = x + ff(layernorm2(x)) ----
    h2 = _layernorm_padded(x, ln2w_ref[0], ln2b_ref[0], d_real)
    f = (jnp.dot(h2.astype(jnp.bfloat16), w1_ref[0],
                 preferred_element_type=jnp.float32) + b1_ref[0])
    f = _gelu_tanh(f)
    f = (jnp.dot(f.astype(jnp.bfloat16), w2_ref[0],
                 preferred_element_type=jnp.float32) + b2_ref[0])
    x = x + f
    x_sc[...] = x

    # ---- final residual + layernorm (last layer step only) ----
    @pl.when(l == pl.num_programs(1) - 1)
    def _():
        y = x + res_sc[...]
        o_ref[0] = _layernorm_padded(y, lnf_w_ref[...], lnf_b_ref[...], d_real)


# --------------------------------------------------------------------------
# Wrapper
# --------------------------------------------------------------------------
def extract_patches(x_nchw, patch_size):
    # (B, C, H, W) -> (B, S, C*P*P); flatten order (c, ph, pw) matches Conv2d.
    B, C, Hh, Ww = x_nchw.shape
    P = patch_size
    x = x_nchw.reshape(B, C, Hh // P, P, Ww // P, P)
    x = jnp.transpose(x, (0, 2, 4, 1, 3, 5))
    return x.reshape(B, (Hh // P) * (Ww // P), C * P * P)


def encoder_forward(packed, meta, x_nchw, patch_size):
    B = x_nchw.shape[0]
    S, D = meta["S"], meta["D"]
    Sp, Dp, PDp = meta["Sp"], meta["Dp"], meta["PDp"]
    L, H, dh_p = meta["L"], meta["n_heads"], meta["dh_p"]

    patches = extract_patches(x_nchw, patch_size)
    patches = _pad_to(patches, (B, Sp, PDp)).astype(jnp.bfloat16)

    def const_spec(a):
        nd = a.ndim
        return pl.BlockSpec(tuple(a.shape), lambda b, l, _nd=nd: (0,) * _nd)

    def layer_spec(a):
        return pl.BlockSpec((1,) + tuple(a.shape[1:]), lambda b, l: (l, 0, 0))

    in_specs = [
        pl.BlockSpec((1, Sp, PDp), lambda b, l: (b, 0, 0)),   # patches
        const_spec(packed["wp"]), const_spec(packed["bp"]),
        const_spec(packed["pos"]),
        const_spec(packed["ln_w"]), const_spec(packed["ln_b"]),
        layer_spec(packed["ln1_w"]), layer_spec(packed["ln1_b"]),
        layer_spec(packed["wqkv"]), layer_spec(packed["bqkv"]),
        layer_spec(packed["wo"]), layer_spec(packed["bo"]),
        layer_spec(packed["ln2_w"]), layer_spec(packed["ln2_b"]),
        layer_spec(packed["w1"]), layer_spec(packed["b1"]),
        layer_spec(packed["w2"]), layer_spec(packed["b2"]),
    ]
    out_spec = pl.BlockSpec((1, Sp, Dp), lambda b, l: (b, 0, 0))

    kern = functools.partial(encoder_kernel, n_heads=H, dh_p=dh_p,
                             d_real=D, s_real=S)
    out_p = pl.pallas_call(
        kern,
        out_shape=jax.ShapeDtypeStruct((B, Sp, Dp), jnp.float32),
        grid_spec=pltpu.PrefetchScalarGridSpec(
            num_scalar_prefetch=0,
            grid=(B, L),
            in_specs=in_specs,
            out_specs=out_spec,
            scratch_shapes=[pltpu.VMEM((Sp, Dp), jnp.float32),   # x state
                            pltpu.VMEM((Sp, Dp), jnp.float32)],  # residual
        ),
        compiler_params=pltpu.CompilerParams(
            dimension_semantics=("parallel", "arbitrary"),
            vmem_limit_bytes=48 * 1024 * 1024),
    )(patches, packed["wp"], packed["bp"], packed["pos"],
      packed["ln_w"], packed["ln_b"],
      packed["ln1_w"], packed["ln1_b"], packed["wqkv"], packed["bqkv"],
      packed["wo"], packed["bo"], packed["ln2_w"], packed["ln2_b"],
      packed["w1"], packed["b1"], packed["w2"], packed["b2"])

    return out_p[:, :S, :D]


# --------------------------------------------------------------------------
# Parameter init (torch-like logical shapes) + packing into padded bf16 stacks
# --------------------------------------------------------------------------
def init_params(key, img_size, patch_size, n_layers, n_heads, emb_dim, ff_dim,
                in_chans=3):
    S = (img_size // patch_size) ** 2
    PD = in_chans * patch_size * patch_size
    keys = jax.random.split(key, 3 + n_layers)

    def nrm(k, shape, scale=0.02):
        return (scale * jax.random.normal(k, shape)).astype(jnp.float32)

    params = {
        "wp": nrm(keys[0], (PD, emb_dim)),     # conv weight, flattened (c,ph,pw)
        "bp": nrm(keys[1], (emb_dim,)),
        "pos": nrm(keys[2], (S, emb_dim)),
        "ln_w": jnp.ones((emb_dim,), jnp.float32),
        "ln_b": jnp.zeros((emb_dim,), jnp.float32),
        "layers": [],
    }
    for i in range(n_layers):
        ks = jax.random.split(keys[3 + i], 8)
        params["layers"].append({
            "ln1_w": jnp.ones((emb_dim,), jnp.float32),
            "ln1_b": jnp.zeros((emb_dim,), jnp.float32),
            "wqkv": nrm(ks[0], (emb_dim, 3 * emb_dim)),
            "bqkv": nrm(ks[1], (3 * emb_dim,)),
            "wo": nrm(ks[2], (emb_dim, emb_dim)),
            "bo": nrm(ks[3], (emb_dim,)),
            "ln2_w": jnp.ones((emb_dim,), jnp.float32),
            "ln2_b": jnp.zeros((emb_dim,), jnp.float32),
            "w1": nrm(ks[4], (emb_dim, ff_dim)),
            "b1": nrm(ks[5], (ff_dim,)),
            "w2": nrm(ks[6], (ff_dim, emb_dim)),
            "b2": nrm(ks[7], (emb_dim,)),
        })
    return params


def _prep_qkv(wqkv, bqkv, D, H, dh, dh_p, Dp, scale):
    # (D, 3D) -> (Dp, 3*H*dh_p) with per-head dh padded to dh_p, scale folded
    # into the Q block (weights AND bias).
    w = wqkv.reshape(D, 3, H, dh)
    b = bqkv.reshape(3, H, dh)
    w = w.at[:, 0].multiply(scale)
    b = b.at[0].multiply(scale)
    w = jnp.pad(w, ((0, Dp - D), (0, 0), (0, 0), (0, dh_p - dh)))
    b = jnp.pad(b, ((0, 0), (0, 0), (0, dh_p - dh)))
    return (w.reshape(Dp, 3 * H * dh_p).astype(jnp.bfloat16),
            b.reshape(1, 3 * H * dh_p).astype(jnp.float32))


def _prep_wo(wo, D, H, dh, dh_p, Dp):
    w = wo.reshape(H, dh, D)
    w = jnp.pad(w, ((0, 0), (0, dh_p - dh), (0, Dp - D)))
    return w.reshape(H * dh_p, Dp).astype(jnp.bfloat16)


def pack_params(params, n_heads):
    PD, D = params["wp"].shape
    S = params["pos"].shape[0]
    F = params["layers"][0]["w1"].shape[1]
    L = len(params["layers"])
    assert D % n_heads == 0
    dh = D // n_heads
    Dp, Fp, PDp = _rup(D, LANE), _rup(F, LANE), _rup(PD, LANE)
    dh_p = _rup(dh, LANE)
    Sp = _rup(S, SUB)
    scale = 1.0 / (dh ** 0.5)

    def vecp(v, n):                       # (m,) -> (1, n) f32 zero-padded
        return jnp.pad(v, (0, n - v.shape[0])).reshape(1, n).astype(jnp.float32)

    packed = {
        "wp": _pad_to(params["wp"], (PDp, Dp)).astype(jnp.bfloat16),
        "bp": vecp(params["bp"], Dp),
        "pos": _pad_to(params["pos"], (Sp, Dp)).astype(jnp.float32),
        "ln_w": vecp(params["ln_w"], Dp),
        "ln_b": vecp(params["ln_b"], Dp),
    }
    per = {k: [] for k in ("ln1_w", "ln1_b", "wqkv", "bqkv", "wo", "bo",
                           "ln2_w", "ln2_b", "w1", "b1", "w2", "b2")}
    for lp in params["layers"]:
        wq, bq = _prep_qkv(lp["wqkv"], lp["bqkv"], D, n_heads, dh, dh_p, Dp,
                           scale)
        per["wqkv"].append(wq)
        per["bqkv"].append(bq)
        per["wo"].append(_prep_wo(lp["wo"], D, n_heads, dh, dh_p, Dp))
        per["bo"].append(vecp(lp["bo"], Dp))
        per["ln1_w"].append(vecp(lp["ln1_w"], Dp))
        per["ln1_b"].append(vecp(lp["ln1_b"], Dp))
        per["ln2_w"].append(vecp(lp["ln2_w"], Dp))
        per["ln2_b"].append(vecp(lp["ln2_b"], Dp))
        per["w1"].append(_pad_to(lp["w1"], (Dp, Fp)).astype(jnp.bfloat16))
        per["b1"].append(vecp(lp["b1"], Fp))
        per["w2"].append(_pad_to(lp["w2"], (Fp, Dp)).astype(jnp.bfloat16))
        per["b2"].append(vecp(lp["b2"], Dp))
    for k, v in per.items():
        packed[k] = jnp.stack(v, axis=0)

    meta = dict(D=D, S=S, F=F, PD=PD, L=L, dh=dh, Dp=Dp, Fp=Fp, PDp=PDp,
                dh_p=dh_p, Sp=Sp, n_heads=n_heads)
    return packed, meta


# --------------------------------------------------------------------------
if __name__ == "__main__":
    img_size, patch_size = 16, 4
    n_layers, n_heads = 2, 4
    emb_dim, ff_dim = 32, 64
    B, C = 2, 3

    key = jax.random.PRNGKey(0)
    k_param, k_x = jax.random.split(key)
    params = init_params(k_param, img_size, patch_size, n_layers, n_heads,
                         emb_dim, ff_dim, in_chans=C)
    packed, meta = pack_params(params, n_heads)
    x = jax.random.normal(k_x, (B, C, img_size, img_size), dtype=jnp.float32)

    out = encoder_forward(packed, meta, x, patch_size)
    out = jax.block_until_ready(out)
    assert out.shape == (B, (img_size // patch_size) ** 2, emb_dim)
    assert bool(jnp.all(jnp.isfinite(out)))
    print("KERNEL_OK")
</pallas_src>

<mosaic_0001>
module attributes {stable_mosaic.version = 11 : i64} {
  func.func @encoder_kernel(%arg0: i32, %arg1: i32, %arg2: memref<1x16x128xbf16, #tpu.memory_space<vmem>>, %arg3: memref<128x128xbf16, #tpu.memory_space<vmem>>, %arg4: memref<1x128xf32, #tpu.memory_space<vmem>>, %arg5: memref<16x128xf32, #tpu.memory_space<vmem>>, %arg6: memref<1x128xf32, #tpu.memory_space<vmem>>, %arg7: memref<1x128xf32, #tpu.memory_space<vmem>>, %arg8: memref<1x1x128xf32, #tpu.memory_space<vmem>>, %arg9: memref<1x1x128xf32, #tpu.memory_space<vmem>>, %arg10: memref<1x128x1536xbf16, #tpu.memory_space<vmem>>, %arg11: memref<1x1x1536xf32, #tpu.memory_space<vmem>>, %arg12: memref<1x512x128xbf16, #tpu.memory_space<vmem>>, %arg13: memref<1x1x128xf32, #tpu.memory_space<vmem>>, %arg14: memref<1x1x128xf32, #tpu.memory_space<vmem>>, %arg15: memref<1x1x128xf32, #tpu.memory_space<vmem>>, %arg16: memref<1x128x128xbf16, #tpu.memory_space<vmem>>, %arg17: memref<1x1x128xf32, #tpu.memory_space<vmem>>, %arg18: memref<1x128x128xbf16, #tpu.memory_space<vmem>>, %arg19: memref<1x1x128xf32, #tpu.memory_space<vmem>>, %arg20: memref<1x16x128xf32, #tpu.memory_space<vmem>>, %arg21: memref<16x128xf32, #tpu.memory_space<vmem>>, %arg22: memref<16x128xf32, #tpu.memory_space<vmem>>) attributes {dimension_semantics = [#tpu.dimension_semantics<parallel>, #tpu.dimension_semantics<arbitrary>], iteration_bounds = array<i64: 2, 2>, scalar_prefetch = 0 : i64, scratch_operands = 2 : i64, tpu.core_type = #tpu.core_type<tc>, window_params = [{transform_indices = @transform_0, window_bounds = array<i64: 1, 16, 128>}, {pipeline_mode = #tpu.pipeline_mode<synchronous>, transform_indices = @transform_1, window_bounds = array<i64: 128, 128>}, {pipeline_mode = #tpu.pipeline_mode<synchronous>, transform_indices = @transform_2, window_bounds = array<i64: 1, 128>}, {pipeline_mode = #tpu.pipeline_mode<synchronous>, transform_indices = @transform_3, window_bounds = array<i64: 16, 128>}, {pipeline_mode = #tpu.pipeline_mode<synchronous>, transform_indices = @transform_4, window_bounds = array<i64: 1, 128>}, {pipeline_mode = #tpu.pipeline_mode<synchronous>, transform_indices = @transform_5, window_bounds = array<i64: 1, 128>}, {transform_indices = @transform_6, window_bounds = array<i64: 1, 1, 128>}, {transform_indices = @transform_7, window_bounds = array<i64: 1, 1, 128>}, {transform_indices = @transform_8, window_bounds = array<i64: 1, 128, 1536>}, {transform_indices = @transform_9, window_bounds = array<i64: 1, 1, 1536>}, {transform_indices = @transform_10, window_bounds = array<i64: 1, 512, 128>}, {transform_indices = @transform_11, window_bounds = array<i64: 1, 1, 128>}, {transform_indices = @transform_12, window_bounds = array<i64: 1, 1, 128>}, {transform_indices = @transform_13, window_bounds = array<i64: 1, 1, 128>}, {transform_indices = @transform_14, window_bounds = array<i64: 1, 128, 128>}, {transform_indices = @transform_15, window_bounds = array<i64: 1, 1, 128>}, {transform_indices = @transform_16, window_bounds = array<i64: 1, 128, 128>}, {transform_indices = @transform_17, window_bounds = array<i64: 1, 1, 128>}, {transform_indices = @transform_18, window_bounds = array<i64: 1, 16, 128>}]} {
    %c0_i32 = arith.constant 0 : i32
    %0 = arith.cmpi eq, %arg1, %c0_i32 : i32
    %1 = arith.extui %0 : i1 to i32
    %c0_i32_0 = arith.constant 0 : i32
    %2 = arith.cmpi ne, %1, %c0_i32_0 : i32
    scf.if %2 {
      %c0_62 = arith.constant 0 : index
      %c0_63 = arith.constant 0 : index
      %c0_64 = arith.constant 0 : index
      %159 = vector.load %arg2[%c0_62, %c0_63, %c0_64] : memref<1x16x128xbf16, #tpu.memory_space<vmem>>, vector<1x16x128xbf16>
      %160 = vector.shape_cast %159 : vector<1x16x128xbf16> to vector<16x128xbf16>
      %c0_65 = arith.constant 0 : index
      %c0_66 = arith.constant 0 : index
      %161 = vector.load %arg3[%c0_65, %c0_66] : memref<128x128xbf16, #tpu.memory_space<vmem>>, vector<128x128xbf16>
      %cst_67 = arith.constant dense<0.000000e+00> : vector<16x128xf32>
      %162 = tpu.matmul %160, %161, %cst_67 {dimension_numbers = #tpu.dot_dimension_numbers<[1], [0], [0], [1], [0, 0, 1, 1], [], []>} : vector<16x128xbf16>, vector<128x128xbf16>, vector<16x128xf32> -> vector<16x128xf32>
      %c0_68 = arith.constant 0 : index
      %c0_69 = arith.constant 0 : index
      %163 = vector.load %arg4[%c0_68, %c0_69] : memref<1x128xf32, #tpu.memory_space<vmem>>, vector<1x128xf32>
      %164 = vector.broadcast %163 : vector<1x128xf32> to vector<16x128xf32>
      %165 = arith.addf %162, %164 : vector<16x128xf32>
      %c0_70 = arith.constant 0 : index
      %c0_71 = arith.constant 0 : index
      %166 = vector.load %arg5[%c0_70, %c0_71] : memref<16x128xf32, #tpu.memory_space<vmem>>, vector<16x128xf32>
      %167 = arith.addf %165, %166 : vector<16x128xf32>
      %c0_72 = arith.constant 0 : index
      %c0_73 = arith.constant 0 : index
      %168 = vector.load %arg21[%c0_72, %c0_73] : memref<16x128xf32, #tpu.memory_space<vmem>>, vector<16x128xf32>
      tpu.vector_store %arg21[%c0_72, %c0_73], %167 {strides = array<i32>} : memref<16x128xf32, #tpu.memory_space<vmem>>, vector<16x128xf32>,
      %c0_74 = arith.constant 0 : index
      %c0_75 = arith.constant 0 : index
      %169 = vector.load %arg22[%c0_74, %c0_75] : memref<16x128xf32, #tpu.memory_space<vmem>>, vector<16x128xf32>
      tpu.vector_store %arg22[%c0_74, %c0_75], %167 {strides = array<i32>} : memref<16x128xf32, #tpu.memory_space<vmem>>, vector<16x128xf32>,
    } else {
    }
    %c0 = arith.constant 0 : index
    %c0_1 = arith.constant 0 : index
    %3 = vector.load %arg21[%c0, %c0_1] : memref<16x128xf32, #tpu.memory_space<vmem>>, vector<16x128xf32>
    %c0_2 = arith.constant 0 : index
    %c0_3 = arith.constant 0 : index
    %c0_4 = arith.constant 0 : index
    %4 = vector.load %arg8[%c0_2, %c0_3, %c0_4] : memref<1x1x128xf32, #tpu.memory_space<vmem>>, vector<1x1x128xf32>
    %5 = vector.shape_cast %4 : vector<1x1x128xf32> to vector<1x128xf32>
    %c0_5 = arith.constant 0 : index
    %c0_6 = arith.constant 0 : index
    %c0_7 = arith.constant 0 : index
    %6 = vector.load %arg9[%c0_5, %c0_6, %c0_7] : memref<1x1x128xf32, #tpu.memory_space<vmem>>, vector<1x1x128xf32>
    %7 = vector.shape_cast %6 : vector<1x1x128xf32> to vector<1x128xf32>
    %cst = arith.constant dense<0.000000e+00> : vector<16xf32>
    %8 = vector.multi_reduction <add>, %3, %cst [1] : vector<16x128xf32> to vector<16xf32>
    %9 = vector.shape_cast %8 : vector<16xf32> to vector<16x1xf32>
    %cst_8 = arith.constant 3.125000e-02 : f32
    %10 = vector.broadcast %cst_8 : f32 to vector<16x1xf32>
    %11 = arith.mulf %9, %10 : vector<16x1xf32>
    %12 = arith.mulf %3, %3 : vector<16x128xf32>
    %cst_9 = arith.constant dense<0.000000e+00> : vector<16xf32>
    %13 = vector.multi_reduction <add>, %12, %cst_9 [1] : vector<16x128xf32> to vector<16xf32>
    %14 = vector.shape_cast %13 : vector<16xf32> to vector<16x1xf32>
    %cst_10 = arith.constant 3.125000e-02 : f32
    %15 = vector.broadcast %cst_10 : f32 to vector<16x1xf32>
    %16 = arith.mulf %14, %15 : vector<16x1xf32>
    %17 = arith.mulf %11, %11 : vector<16x1xf32>
    %18 = arith.subf %16, %17 : vector<16x1xf32>
    %19 = vector.broadcast %11 : vector<16x1xf32> to vector<16x128xf32>
    %20 = arith.subf %3, %19 : vector<16x128xf32>
    %cst_11 = arith.constant 9.99999974E-6 : f32
    %21 = vector.broadcast %cst_11 : f32 to vector<16x1xf32>
    %22 = arith.addf %18, %21 : vector<16x1xf32>
    %23 = math.rsqrt %22 : vector<16x1xf32>
    %24 = vector.broadcast %23 : vector<16x1xf32> to vector<16x128xf32>
    %25 = arith.mulf %20, %24 : vector<16x128xf32>
    %26 = vector.broadcast %5 : vector<1x128xf32> to vector<16x128xf32>
    %27 = arith.mulf %25, %26 : vector<16x128xf32>
    %28 = vector.broadcast %7 : vector<1x128xf32> to vector<16x128xf32>
    %29 = arith.addf %27, %28 : vector<16x128xf32>
    %30 = arith.truncf %29 : vector<16x128xf32> to vector<16x128xbf16>
    %c0_12 = arith.constant 0 : index
    %c0_13 = arith.constant 0 : index
    %c0_14 = arith.constant 0 : index
    %31 = vector.load %arg10[%c0_12, %c0_13, %c0_14] : memref<1x128x1536xbf16, #tpu.memory_space<vmem>>, vector<1x128x1536xbf16>
    %32 = vector.shape_cast %31 : vector<1x128x1536xbf16> to vector<128x1536xbf16>
    %cst_15 = arith.constant dense<0.000000e+00> : vector<16x1536xf32>
    %33 = tpu.matmul %30, %32, %cst_15 {dimension_numbers = #tpu.dot_dimension_numbers<[1], [0], [0], [1], [0, 0, 1, 1], [], []>} : vector<16x128xbf16>, vector<128x1536xbf16>, vector<16x1536xf32> -> vector<16x1536xf32>
    %c0_16 = arith.constant 0 : index
    %c0_17 = arith.constant 0 : index
    %c0_18 = arith.constant 0 : index
    %34 = vector.load %arg11[%c0_16, %c0_17, %c0_18] : memref<1x1x1536xf32, #tpu.memory_space<vmem>>, vector<1x1x1536xf32>
    %35 = vector.shape_cast %34 : vector<1x1x1536xf32> to vector<1x1536xf32>
    %36 = vector.broadcast %35 : vector<1x1536xf32> to vector<16x1536xf32>
    %37 = arith.addf %33, %36 : vector<16x1536xf32>
    %38 = vector.extract_strided_slice %37 {offsets = [0, 0], sizes = [16, 128], strides = [1, 1]} : vector<16x1536xf32> to vector<16x128xf32>
    %39 = vector.extract_strided_slice %37 {offsets = [0, 128], sizes = [16, 128], strides = [1, 1]} : vector<16x1536xf32> to vector<16x128xf32>
    %40 = vector.extract_strided_slice %37 {offsets = [0, 256], sizes = [16, 128], strides = [1, 1]} : vector<16x1536xf32> to vector<16x128xf32>
    %41 = vector.extract_strided_slice %37 {offsets = [0, 384], sizes = [16, 128], strides = [1, 1]} : vector<16x1536xf32> to vector<16x128xf32>
    %42 = vector.shape_cast %38 : vector<16x128xf32> to vector<1x16x128xf32>
    %43 = vector.shape_cast %39 : vector<16x128xf32> to vector<1x16x128xf32>
    %44 = vector.shape_cast %40 : vector<16x128xf32> to vector<1x16x128xf32>
    %45 = vector.shape_cast %41 : vector<16x128xf32> to vector<1x16x128xf32>
    %46 = tpu.concatenate %42, %43, %44, %45 in 0 : vector<1x16x128xf32>, vector<1x16x128xf32>, vector<1x16x128xf32>, vector<1x16x128xf32> -> vector<4x16x128xf32>
    %47 = arith.truncf %46 : vector<4x16x128xf32> to vector<4x16x128xbf16>
    %48 = vector.extract_strided_slice %37 {offsets = [0, 512], sizes = [16, 128], strides = [1, 1]} : vector<16x1536xf32> to vector<16x128xf32>
    %49 = vector.extract_strided_slice %37 {offsets = [0, 640], sizes = [16, 128], strides = [1, 1]} : vector<16x1536xf32> to vector<16x128xf32>
    %50 = vector.extract_strided_slice %37 {offsets = [0, 768], sizes = [16, 128], strides = [1, 1]} : vector<16x1536xf32> to vector<16x128xf32>
    %51 = vector.extract_strided_slice %37 {offsets = [0, 896], sizes = [16, 128], strides = [1, 1]} : vector<16x1536xf32> to vector<16x128xf32>
    %52 = vector.shape_cast %48 : vector<16x128xf32> to vector<1x16x128xf32>
    %53 = vector.shape_cast %49 : vector<16x128xf32> to vector<1x16x128xf32>
    %54 = vector.shape_cast %50 : vector<16x128xf32> to vector<1x16x128xf32>
    %55 = vector.shape_cast %51 : vector<16x128xf32> to vector<1x16x128xf32>
    %56 = tpu.concatenate %52, %53, %54, %55 in 0 : vector<1x16x128xf32>, vector<1x16x128xf32>, vector<1x16x128xf32>, vector<1x16x128xf32> -> vector<4x16x128xf32>
    %57 = arith.truncf %56 : vector<4x16x128xf32> to vector<4x16x128xbf16>
    %58 = vector.extract_strided_slice %37 {offsets = [0, 1024], sizes = [16, 128], strides = [1, 1]} : vector<16x1536xf32> to vector<16x128xf32>
    %59 = vector.extract_strided_slice %37 {offsets = [0, 1152], sizes = [16, 128], strides = [1, 1]} : vector<16x1536xf32> to vector<16x128xf32>
    %60 = vector.extract_strided_slice %37 {offsets = [0, 1280], sizes = [16, 128], strides = [1, 1]} : vector<16x1536xf32> to vector<16x128xf32>
    %61 = vector.extract_strided_slice %37 {offsets = [0, 1408], sizes = [16, 128], strides = [1, 1]} : vector<16x1536xf32> to vector<16x128xf32>
    %62 = vector.shape_cast %58 : vector<16x128xf32> to vector<1x16x128xf32>
    %63 = vector.shape_cast %59 : vector<16x128xf32> to vector<1x16x128xf32>
    %64 = vector.shape_cast %60 : vector<16x128xf32> to vector<1x16x128xf32>
    %65 = vector.shape_cast %61 : vector<16x128xf32> to vector<1x16x128xf32>
    %66 = tpu.concatenate %62, %63, %64, %65 in 0 : vector<1x16x128xf32>, vector<1x16x128xf32>, vector<1x16x128xf32>, vector<1x16x128xf32> -> vector<4x16x128xf32>
    %67 = arith.truncf %66 : vector<4x16x128xf32> to vector<4x16x128xbf16>
    "tpu.trace_start"() <{level = 10 : i32, message = "hqd,hkd->hqk"}> : () -> ()
    %cst_19 = arith.constant dense<0.000000e+00> : vector<4x16x16xf32>
    %68 = tpu.matmul %47, %57, %cst_19 {dimension_numbers = #tpu.dot_dimension_numbers<[2], [2], [1], [1], [0, 0, 0, 1, 1, 1], [0], [0]>} : vector<4x16x128xbf16>, vector<4x16x128xbf16>, vector<4x16x16xf32> -> vector<4x16x16xf32>
    "tpu.trace_stop"() : () -> ()
    %cst_20 = arith.constant dense<0xFF800000> : vector<4x16xf32>
    %69 = vector.multi_reduction <maximumf>, %68, %cst_20 [2] : vector<4x16x16xf32> to vector<4x16xf32>
    %70 = vector.shape_cast %69 : vector<4x16xf32> to vector<4x16x1xf32>
    %71 = vector.broadcast %70 : vector<4x16x1xf32> to vector<4x16x16xf32>
    %72 = arith.subf %68, %71 : vector<4x16x16xf32>
    %73 = math.exp %72 : vector<4x16x16xf32>
    %cst_21 = arith.constant dense<0.000000e+00> : vector<4x16xf32>
    %74 = vector.multi_reduction <add>, %73, %cst_21 [2] : vector<4x16x16xf32> to vector<4x16xf32>
    %75 = vector.shape_cast %74 : vector<4x16xf32> to vector<4x16x1xf32>
    %76 = tpu.reciprocal %75 {approx = true} : vector<4x16x1xf32> -> vector<4x16x1xf32>
    %77 = vector.broadcast %76 : vector<4x16x1xf32> to vector<4x16x16xf32>
    %78 = arith.mulf %73, %77 : vector<4x16x16xf32>
    %79 = arith.truncf %78 : vector<4x16x16xf32> to vector<4x16x16xbf16>
    "tpu.trace_start"() <{level = 10 : i32, message = "hqk,hkd->hqd"}> : () -> ()
    %cst_22 = arith.constant dense<0.000000e+00> : vector<4x16x128xf32>
    %80 = tpu.matmul %79, %67, %cst_22 {dimension_numbers = #tpu.dot_dimension_numbers<[2], [1], [1], [2], [0, 0, 0, 1, 1, 2], [0], [0]>} : vector<4x16x16xbf16>, vector<4x16x128xbf16>, vector<4x16x128xf32> -> vector<4x16x128xf32>
    "tpu.trace_stop"() : () -> ()
    %81 = vector.extract_strided_slice %80 {offsets = [0, 0, 0], sizes = [1, 16, 128], strides = [1, 1, 1]} : vector<4x16x128xf32> to vector<1x16x128xf32>
    %82 = vector.shape_cast %81 : vector<1x16x128xf32> to vector<16x128xf32>
    %83 = vector.extract_strided_slice %80 {offsets = [1, 0, 0], sizes = [1, 16, 128], strides = [1, 1, 1]} : vector<4x16x128xf32> to vector<1x16x128xf32>
    %84 = vector.shape_cast %83 : vector<1x16x128xf32> to vector<16x128xf32>
    %85 = vector.extract_strided_slice %80 {offsets = [2, 0, 0], sizes = [1, 16, 128], strides = [1, 1, 1]} : vector<4x16x128xf32> to vector<1x16x128xf32>
    %86 = vector.shape_cast %85 : vector<1x16x128xf32> to vector<16x128xf32>
    %87 = vector.extract_strided_slice %80 {offsets = [3, 0, 0], sizes = [1, 16, 128], strides = [1, 1, 1]} : vector<4x16x128xf32> to vector<1x16x128xf32>
    %88 = vector.shape_cast %87 : vector<1x16x128xf32> to vector<16x128xf32>
    %89 = tpu.concatenate %82, %84, %86, %88 in 1 : vector<16x128xf32>, vector<16x128xf32>, vector<16x128xf32>, vector<16x128xf32> -> vector<16x512xf32>
    %90 = arith.truncf %89 : vector<16x512xf32> to vector<16x512xbf16>
    %c0_23 = arith.constant 0 : index
    %c0_24 = arith.constant 0 : index
    %c0_25 = arith.constant 0 : index
    %91 = vector.load %arg12[%c0_23, %c0_24, %c0_25] : memref<1x512x128xbf16, #tpu.memory_space<vmem>>, vector<1x512x128xbf16>
    %92 = vector.shape_cast %91 : vector<1x512x128xbf16> to vector<512x128xbf16>
    %cst_26 = arith.constant dense<0.000000e+00> : vector<16x128xf32>
    %93 = tpu.matmul %90, %92, %cst_26 {dimension_numbers = #tpu.dot_dimension_numbers<[1], [0], [0], [1], [0, 0, 1, 1], [], []>} : vector<16x512xbf16>, vector<512x128xbf16>, vector<16x128xf32> -> vector<16x128xf32>
    %c0_27 = arith.constant 0 : index
    %c0_28 = arith.constant 0 : index
    %c0_29 = arith.constant 0 : index
    %94 = vector.load %arg13[%c0_27, %c0_28, %c0_29] : memref<1x1x128xf32, #tpu.memory_space<vmem>>, vector<1x1x128xf32>
    %95 = vector.shape_cast %94 : vector<1x1x128xf32> to vector<1x128xf32>
    %96 = vector.broadcast %95 : vector<1x128xf32> to vector<16x128xf32>
    %97 = arith.addf %93, %96 : vector<16x128xf32>
    %98 = arith.addf %3, %97 : vector<16x128xf32>
    %c0_30 = arith.constant 0 : index
    %c0_31 = arith.constant 0 : index
    %c0_32 = arith.constant 0 : index
    %99 = vector.load %arg14[%c0_30, %c0_31, %c0_32] : memref<1x1x128xf32, #tpu.memory_space<vmem>>, vector<1x1x128xf32>
    %100 = vector.shape_cast %99 : vector<1x1x128xf32> to vector<1x128xf32>
    %c0_33 = arith.constant 0 : index
    %c0_34 = arith.constant 0 : index
    %c0_35 = arith.constant 0 : index
    %101 = vector.load %arg15[%c0_33, %c0_34, %c0_35] : memref<1x1x128xf32, #tpu.memory_space<vmem>>, vector<1x1x128xf32>
    %102 = vector.shape_cast %101 : vector<1x1x128xf32> to vector<1x128xf32>
    %cst_36 = arith.constant dense<0.000000e+00> : vector<16xf32>
    %103 = vector.multi_reduction <add>, %98, %cst_36 [1] : vector<16x128xf32> to vector<16xf32>
    %104 = vector.shape_cast %103 : vector<16xf32> to vector<16x1xf32>
    %cst_37 = arith.constant 3.125000e-02 : f32
    %105 = vector.broadcast %cst_37 : f32 to vector<16x1xf32>
    %106 = arith.mulf %104, %105 : vector<16x1xf32>
    %107 = arith.mulf %98, %98 : vector<16x128xf32>
    %cst_38 = arith.constant dense<0.000000e+00> : vector<16xf32>
    %108 = vector.multi_reduction <add>, %107, %cst_38 [1] : vector<16x128xf32> to vector<16xf32>
    %109 = vector.shape_cast %108 : vector<16xf32> to vector<16x1xf32>
    %cst_39 = arith.constant 3.125000e-02 : f32
    %110 = vector.broadcast %cst_39 : f32 to vector<16x1xf32>
    %111 = arith.mulf %109, %110 : vector<16x1xf32>
    %112 = arith.mulf %106, %106 : vector<16x1xf32>
    %113 = arith.subf %111, %112 : vector<16x1xf32>
    %114 = vector.broadcast %106 : vector<16x1xf32> to vector<16x128xf32>
    %115 = arith.subf %98, %114 : vector<16x128xf32>
    %cst_40 = arith.constant 9.99999974E-6 : f32
    %116 = vector.broadcast %cst_40 : f32 to vector<16x1xf32>
    %117 = arith.addf %113, %116 : vector<16x1xf32>
    %118 = math.rsqrt %117 : vector<16x1xf32>
    %119 = vector.broadcast %118 : vector<16x1xf32> to vector<16x128xf32>
    %120 = arith.mulf %115, %119 : vector<16x128xf32>
    %121 = vector.broadcast %100 : vector<1x128xf32> to vector<16x128xf32>
    %122 = arith.mulf %120, %121 : vector<16x128xf32>
    %123 = vector.broadcast %102 : vector<1x128xf32> to vector<16x128xf32>
    %124 = arith.addf %122, %123 : vector<16x128xf32>
    %125 = arith.truncf %124 : vector<16x128xf32> to vector<16x128xbf16>
    %c0_41 = arith.constant 0 : index
    %c0_42 = arith.constant 0 : index
    %c0_43 = arith.constant 0 : index
    %126 = vector.load %arg16[%c0_41, %c0_42, %c0_43] : memref<1x128x128xbf16, #tpu.memory_space<vmem>>, vector<1x128x128xbf16>
    %127 = vector.shape_cast %126 : vector<1x128x128xbf16> to vector<128x128xbf16>
    %cst_44 = arith.constant dense<0.000000e+00> : vector<16x128xf32>
    %128 = tpu.matmul %125, %127, %cst_44 {dimension_numbers = #tpu.dot_dimension_numbers<[1], [0], [0], [1], [0, 0, 1, 1], [], []>} : vector<16x128xbf16>, vector<128x128xbf16>, vector<16x128xf32> -> vector<16x128xf32>
    %c0_45 = arith.constant 0 : index
    %c0_46 = arith.constant 0 : index
    %c0_47 = arith.constant 0 : index
    %129 = vector.load %arg17[%c0_45, %c0_46, %c0_47] : memref<1x1x128xf32, #tpu.memory_space<vmem>>, vector<1x1x128xf32>
    %130 = vector.shape_cast %129 : vector<1x1x128xf32> to vector<1x128xf32>
    %131 = vector.broadcast %130 : vector<1x128xf32> to vector<16x128xf32>
    %132 = arith.addf %128, %131 : vector<16x128xf32>
    %cst_48 = arith.constant 5.000000e-01 : f32
    %133 = vector.broadcast %cst_48 : f32 to vector<16x128xf32>
    %134 = arith.mulf %133, %132 : vector<16x128xf32>
    %cst_49 = arith.constant 4.471500e-02 : f32
    %135 = vector.broadcast %cst_49 : f32 to vector<16x128xf32>
    %136 = arith.mulf %135, %132 : vector<16x128xf32>
    %137 = arith.mulf %136, %132 : vector<16x128xf32>
    %138 = arith.mulf %137, %132 : vector<16x128xf32>
    %139 = arith.addf %132, %138 : vector<16x128xf32>
    %cst_50 = arith.constant 0.797884583 : f32
    %140 = vector.broadcast %cst_50 : f32 to vector<16x128xf32>
    %141 = arith.mulf %140, %139 : vector<16x128xf32>
    %142 = math.tanh %141 : vector<16x128xf32>
    %cst_51 = arith.constant 1.000000e+00 : f32
    %143 = vector.broadcast %cst_51 : f32 to vector<16x128xf32>
    %144 = arith.addf %143, %142 : vector<16x128xf32>
    %145 = arith.mulf %134, %144 : vector<16x128xf32>
    %146 = arith.truncf %145 : vector<16x128xf32> to vector<16x128xbf16>
    %c0_52 = arith.constant 0 : index
    %c0_53 = arith.constant 0 : index
    %c0_54 = arith.constant 0 : index
    %147 = vector.load %arg18[%c0_52, %c0_53, %c0_54] : memref<1x128x128xbf16, #tpu.memory_space<vmem>>, vector<1x128x128xbf16>
    %148 = vector.shape_cast %147 : vector<1x128x128xbf16> to vector<128x128xbf16>
    %cst_55 = arith.constant dense<0.000000e+00> : vector<16x128xf32>
    %149 = tpu.matmul %146, %148, %cst_55 {dimension_numbers = #tpu.dot_dimension_numbers<[1], [0], [0], [1], [0, 0, 1, 1], [], []>} : vector<16x128xbf16>, vector<128x128xbf16>, vector<16x128xf32> -> vector<16x128xf32>
    %c0_56 = arith.constant 0 : index
    %c0_57 = arith.constant 0 : index
    %c0_58 = arith.constant 0 : index
    %150 = vector.load %arg19[%c0_56, %c0_57, %c0_58] : memref<1x1x128xf32, #tpu.memory_space<vmem>>, vector<1x1x128xf32>
    %151 = vector.shape_cast %150 : vector<1x1x128xf32> to vector<1x128xf32>
    %152 = vector.broadcast %151 : vector<1x128xf32> to vector<16x128xf32>
    %153 = arith.addf %149, %152 : vector<16x128xf32>
    %154 = arith.addf %98, %153 : vector<16x128xf32>
    %c0_59 = arith.constant 0 : index
    %c0_60 = arith.constant 0 : index
    %155 = vector.load %arg21[%c0_59, %c0_60] : memref<16x128xf32, #tpu.memory_space<vmem>>, vector<16x128xf32>
    tpu.vector_store %arg21[%c0_59, %c0_60], %154 {strides = array<i32>} : memref<16x128xf32, #tpu.memory_space<vmem>>, vector<16x128xf32>,
    %c1_i32 = arith.constant 1 : i32
    %156 = arith.cmpi eq, %arg1, %c1_i32 : i32
    %157 = arith.extui %156 : i1 to i32
    %c0_i32_61 = arith.constant 0 : i32
    %158 = arith.cmpi ne, %157, %c0_i32_61 : i32
    scf.if %158 {
      %c0_62 = arith.constant 0 : index
      %c0_63 = arith.constant 0 : index
      %159 = vector.load %arg22[%c0_62, %c0_63] : memref<16x128xf32, #tpu.memory_space<vmem>>, vector<16x128xf32>
      %160 = arith.addf %154, %159 : vector<16x128xf32>
      %c0_64 = arith.constant 0 : index
      %c0_65 = arith.constant 0 : index
      %161 = vector.load %arg6[%c0_64, %c0_65] : memref<1x128xf32, #tpu.memory_space<vmem>>, vector<1x128xf32>
      %c0_66 = arith.constant 0 : index
      %c0_67 = arith.constant 0 : index
      %162 = vector.load %arg7[%c0_66, %c0_67] : memref<1x128xf32, #tpu.memory_space<vmem>>, vector<1x128xf32>
      %cst_68 = arith.constant dense<0.000000e+00> : vector<16xf32>
      %163 = vector.multi_reduction <add>, %160, %cst_68 [1] : vector<16x128xf32> to vector<16xf32>
      %164 = vector.shape_cast %163 : vector<16xf32> to vector<16x1xf32>
      %cst_69 = arith.constant 3.125000e-02 : f32
      %165 = vector.broadcast %cst_69 : f32 to vector<16x1xf32>
      %166 = arith.mulf %164, %165 : vector<16x1xf32>
      %167 = arith.mulf %160, %160 : vector<16x128xf32>
      %cst_70 = arith.constant dense<0.000000e+00> : vector<16xf32>
      %168 = vector.multi_reduction <add>, %167, %cst_70 [1] : vector<16x128xf32> to vector<16xf32>
      %169 = vector.shape_cast %168 : vector<16xf32> to vector<16x1xf32>
      %cst_71 = arith.constant 3.125000e-02 : f32
      %170 = vector.broadcast %cst_71 : f32 to vector<16x1xf32>
      %171 = arith.mulf %169, %170 : vector<16x1xf32>
      %172 = arith.mulf %166, %166 : vector<16x1xf32>
      %173 = arith.subf %171, %172 : vector<16x1xf32>
      %174 = vector.broadcast %166 : vector<16x1xf32> to vector<16x128xf32>
      %175 = arith.subf %160, %174 : vector<16x128xf32>
      %cst_72 = arith.constant 9.99999974E-6 : f32
      %176 = vector.broadcast %cst_72 : f32 to vector<16x1xf32>
      %177 = arith.addf %173, %176 : vector<16x1xf32>
      %178 = math.rsqrt %177 : vector<16x1xf32>
      %179 = vector.broadcast %178 : vector<16x1xf32> to vector<16x128xf32>
      %180 = arith.mulf %175, %179 : vector<16x128xf32>
      %181 = vector.broadcast %161 : vector<1x128xf32> to vector<16x128xf32>
      %182 = arith.mulf %180, %181 : vector<16x128xf32>
      %183 = vector.broadcast %162 : vector<1x128xf32> to vector<16x128xf32>
      %184 = arith.addf %182, %183 : vector<16x128xf32>
      %c0_73 = arith.constant 0 : index
      %c0_74 = arith.constant 0 : index
      %c0_75 = arith.constant 0 : index
      %185 = vector.load %arg20[%c0_73, %c0_74, %c0_75] : memref<1x16x128xf32, #tpu.memory_space<vmem>>, vector<1x16x128xf32>
      %186 = vector.shape_cast %185 : vector<1x16x128xf32> to vector<16x128xf32>
      %187 = vector.shape_cast %184 : vector<16x128xf32> to vector<1x16x128xf32>
      tpu.vector_store %arg20[%c0_73, %c0_74, %c0_75], %187 {strides = array<i32>} : memref<1x16x128xf32, #tpu.memory_space<vmem>>, vector<1x16x128xf32>,
    } else {
    }
    return
  }
  func.func @transform_0(%arg0: i32, %arg1: i32) -> (i32, i32, i32) {
    %c0_i32 = arith.constant 0 : i32
    %c0_i32_0 = arith.constant 0 : i32
    %c0_i32_1 = arith.constant 0 : i32
    return %arg0, %c0_i32, %c0_i32_0 : i32, i32, i32
  }
  func.func @transform_1(%arg0: i32, %arg1: i32) -> (i32, i32) {
    %c0_i32 = arith.constant 0 : i32
    %c0_i32_0 = arith.constant 0 : i32
    %c0_i32_1 = arith.constant 0 : i32
    return %c0_i32, %c0_i32_0 : i32, i32
  }
  func.func @transform_2(%arg0: i32, %arg1: i32) -> (i32, i32) {
    %c0_i32 = arith.constant 0 : i32
    %c0_i32_0 = arith.constant 0 : i32
    %c0_i32_1 = arith.constant 0 : i32
    return %c0_i32, %c0_i32_0 : i32, i32
  }
  func.func @transform_3(%arg0: i32, %arg1: i32) -> (i32, i32) {
    %c0_i32 = arith.constant 0 : i32
    %c0_i32_0 = arith.constant 0 : i32
    %c0_i32_1 = arith.constant 0 : i32
    return %c0_i32, %c0_i32_0 : i32, i32
  }
  func.func @transform_4(%arg0: i32, %arg1: i32) -> (i32, i32) {
    %c0_i32 = arith.constant 0 : i32
    %c0_i32_0 = arith.constant 0 : i32
    %c0_i32_1 = arith.constant 0 : i32
    return %c0_i32, %c0_i32_0 : i32, i32
  }
  func.func @transform_5(%arg0: i32, %arg1: i32) -> (i32, i32) {
    %c0_i32 = arith.constant 0 : i32
    %c0_i32_0 = arith.constant 0 : i32
    %c0_i32_1 = arith.constant 0 : i32
    return %c0_i32, %c0_i32_0 : i32, i32
  }
  func.func @transform_6(%arg0: i32, %arg1: i32) -> (i32, i32, i32) {
    %c0_i32 = arith.constant 0 : i32
    %c0_i32_0 = arith.constant 0 : i32
    %c0_i32_1 = arith.constant 0 : i32
    return %arg1, %c0_i32, %c0_i32_0 : i32, i32, i32
  }
  func.func @transform_7(%arg0: i32, %arg1: i32) -> (i32, i32, i32) {
    %c0_i32 = arith.constant 0 : i32
    %c0_i32_0 = arith.constant 0 : i32
    %c0_i32_1 = arith.constant 0 : i32
    return %arg1, %c0_i32, %c0_i32_0 : i32, i32, i32
  }
  func.func @transform_8(%arg0: i32, %arg1: i32) -> (i32, i32, i32) {
    %c0_i32 = arith.constant 0 : i32
    %c0_i32_0 = arith.constant 0 : i32
    %c0_i32_1 = arith.constant 0 : i32
    return %arg1, %c0_i32, %c0_i32_0 : i32, i32, i32
  }
  func.func @transform_9(%arg0: i32, %arg1: i32) -> (i32, i32, i32) {
    %c0_i32 = arith.constant 0 : i32
    %c0_i32_0 = arith.constant 0 : i32
    %c0_i32_1 = arith.constant 0 : i32
    return %arg1, %c0_i32, %c0_i32_0 : i32, i32, i32
  }
  func.func @transform_10(%arg0: i32, %arg1: i32) -> (i32, i32, i32) {
    %c0_i32 = arith.constant 0 : i32
    %c0_i32_0 = arith.constant 0 : i32
    %c0_i32_1 = arith.constant 0 : i32
    return %arg1, %c0_i32, %c0_i32_0 : i32, i32, i32
  }
  func.func @transform_11(%arg0: i32, %arg1: i32) -> (i32, i32, i32) {
    %c0_i32 = arith.constant 0 : i32
    %c0_i32_0 = arith.constant 0 : i32
    %c0_i32_1 = arith.constant 0 : i32
    return %arg1, %c0_i32, %c0_i32_0 : i32, i32, i32
  }
  func.func @transform_12(%arg0: i32, %arg1: i32) -> (i32, i32, i32) {
    %c0_i32 = arith.constant 0 : i32
    %c0_i32_0 = arith.constant 0 : i32
    %c0_i32_1 = arith.constant 0 : i32
    return %arg1, %c0_i32, %c0_i32_0 : i32, i32, i32
  }
  func.func @transform_13(%arg0: i32, %arg1: i32) -> (i32, i32, i32) {
    %c0_i32 = arith.constant 0 : i32
    %c0_i32_0 = arith.constant 0 : i32
    %c0_i32_1 = arith.constant 0 : i32
    return %arg1, %c0_i32, %c0_i32_0 : i32, i32, i32
  }
  func.func @transform_14(%arg0: i32, %arg1: i32) -> (i32, i32, i32) {
    %c0_i32 = arith.constant 0 : i32
    %c0_i32_0 = arith.constant 0 : i32
    %c0_i32_1 = arith.constant 0 : i32
    return %arg1, %c0_i32, %c0_i32_0 : i32, i32, i32
  }
  func.func @transform_15(%arg0: i32, %arg1: i32) -> (i32, i32, i32) {
    %c0_i32 = arith.constant 0 : i32
    %c0_i32_0 = arith.constant 0 : i32
    %c0_i32_1 = arith.constant 0 : i32
    return %arg1, %c0_i32, %c0_i32_0 : i32, i32, i32
  }
  func.func @transform_16(%arg0: i32, %arg1: i32) -> (i32, i32, i32) {
    %c0_i32 = arith.constant 0 : i32
    %c0_i32_0 = arith.constant 0 : i32
    %c0_i32_1 = arith.constant 0 : i32
    return %arg1, %c0_i32, %c0_i32_0 : i32, i32, i32
  }
  func.func @transform_17(%arg0: i32, %arg1: i32) -> (i32, i32, i32) {
    %c0_i32 = arith.constant 0 : i32
    %c0_i32_0 = arith.constant 0 : i32
    %c0_i32_1 = arith.constant 0 : i32
    return %arg1, %c0_i32, %c0_i32_0 : i32, i32, i32
  }
  func.func @transform_18(%arg0: i32, %arg1: i32) -> (i32, i32, i32) {
    %c0_i32 = arith.constant 0 : i32
    %c0_i32_0 = arith.constant 0 : i32
    %c0_i32_1 = arith.constant 0 : i32
    return %arg0, %c0_i32, %c0_i32_0 : i32, i32, i32
  }
}

</mosaic_0001>

<llo_original>
// kernel: tpu_custom_call.1
$region0: #{tpu_custom_call.1}
  #allocation0 [shape = 'u32[]', space=smem, size = 0x4, offset = 0x4, fixed_abs, tag = 'smem constant byte address 0x4 - core index']
  #allocation1 [shape = 'u32[72,128]{1,0:T(1,128)}', space=vmem, size = 0x9000, scoped, tag = 'internal scratch']
  #allocation2 [shape = 'f32[16,128]{1,0:T(8,128)}', space=vmem, size = 0x2000, scoped, tag = 'scratch operand']
  #allocation3 [shape = 'f32[16,128]{1,0:T(8,128)}', space=vmem, size = 0x2000, scoped, tag = 'scratch operand']
  %s0 = inlined_call_operand.hbm [shape: bf16[2,16,128], index: 0, kind: input, shape index: {}]
  %s1 = inlined_call_operand.hbm [shape: bf16[128,128], index: 1, kind: input, shape index: {}]
  %s2 = inlined_call_operand.hbm [shape: f32[1,128], index: 2, kind: input, shape index: {}]
  %s3 = inlined_call_operand.hbm [shape: f32[16,128], index: 3, kind: input, shape index: {}]
  %s4 = inlined_call_operand.hbm [shape: f32[1,128], index: 4, kind: input, shape index: {}]
  %s5 = inlined_call_operand.hbm [shape: f32[1,128], index: 5, kind: input, shape index: {}]
  %s6 = inlined_call_operand.vmem [shape: f32[2,1,128], index: 6, kind: input, shape index: {}]
  %s7 = inlined_call_operand.vmem [shape: f32[2,1,128], index: 7, kind: input, shape index: {}]
  %s8 = inlined_call_operand.hbm [shape: bf16[2,128,1536], index: 8, kind: input, shape index: {}]
  %s9 = inlined_call_operand.hbm [shape: f32[2,1,1536], index: 9, kind: input, shape index: {}]
  %s10 = inlined_call_operand.hbm [shape: bf16[2,512,128], index: 10, kind: input, shape index: {}]
  %s11 = inlined_call_operand.vmem [shape: f32[2,1,128], index: 11, kind: input, shape index: {}]
  %s12 = inlined_call_operand.vmem [shape: f32[2,1,128], index: 12, kind: input, shape index: {}]
  %s13 = inlined_call_operand.vmem [shape: f32[2,1,128], index: 13, kind: input, shape index: {}]
  %s14 = inlined_call_operand.hbm [shape: bf16[2,128,128], index: 14, kind: input, shape index: {}]
  %s15 = inlined_call_operand.vmem [shape: f32[2,1,128], index: 15, kind: input, shape index: {}]
  %s16 = inlined_call_operand.hbm [shape: bf16[2,128,128], index: 16, kind: input, shape index: {}]
  %s17 = inlined_call_operand.vmem [shape: f32[2,1,128], index: 17, kind: input, shape index: {}]
  %s18 = inlined_call_operand.hbm [shape: f32[2,16,128], index: 18, kind: output, shape index: {}]
  %s19 = sld [smem:[#allocation0]]
  $region157: #{tpu_custom_call.1} parent=0
    _
  %s21 = ssub.s32 1, %s19
  %s22 = scalar_select 0, %s21, %s19
  $region1: #{tpu_custom_call.1} parent=0
    #allocation4 [shape = 'u8[8192]{0}', space=vmem, size = 0x2000, scoped, tag = 'input window, operand 0']
    #allocation5 [shape = 's32[2]{0}', space=sflag, size = 0x8, scoped, tag = 'scoped memory for tpu_custom_call.1']
    #allocation6 [shape = 's32[2]{0}', space=sflag, size = 0x8, scoped, tag = 'scoped memory for tpu_custom_call.1']
    #allocation7 [shape = 'u8[32768]{0}', space=vmem, size = 0x8000, scoped, tag = 'input window, operand 1, single buffered']
    #allocation8 [shape = 's32[1]{0}', space=sflag, size = 0x4, scoped, tag = 'scoped memory for tpu_custom_call.1']
    #allocation9 [shape = 'u8[512]{0}', space=vmem, size = 0x400, scoped, tag = 'input window, operand 2, single buffered']
    #allocation10 [shape = 'u8[8192]{0}', space=vmem, size = 0x2000, scoped, tag = 'input window, operand 3, single buffered']
    #allocation11 [shape = 's32[1]{0}', space=sflag, size = 0x4, scoped, tag = 'scoped memory for tpu_custom_call.1']
    #allocation12 [shape = 'u8[512]{0}', space=vmem, size = 0x400, scoped, tag = 'input window, operand 4, single buffered']
    #allocation13 [shape = 'u8[512]{0}', space=vmem, size = 0x400, scoped, tag = 'input window, operand 5, single buffered']
    #allocation14 [shape = 's32[1]{0}', space=sflag, size = 0x4, scoped, tag = 'scoped memory for tpu_custom_call.1']
    #allocation15 [shape = 'u8[786432]{0}', space=vmem, size = 0xc0000, scoped, tag = 'input window, operand 8']
    #allocation16 [shape = 'u8[12288]{0}', space=vmem, size = 0x3000, scoped, tag = 'input window, operand 9']
    #allocation17 [shape = 'u8[262144]{0}', space=vmem, size = 0x40000, scoped, tag = 'input window, operand 10']
    #allocation18 [shape = 'u8[65536]{0}', space=vmem, size = 0x10000, scoped, tag = 'input window, operand 14']
    #allocation19 [shape = 'u8[65536]{0}', space=vmem, size = 0x10000, scoped, tag = 'input window, operand 16']
    #allocation20 [shape = 'u8[16384]{0}', space=vmem, size = 0x4000, scoped, tag = 'output window, operand 0']
    %23 = vsyncpa [#allocation5], 0
    %s24 = scalar_lea.sflag [#allocation5], 1
    %25 = vsyncpa %s24, 0
    %26 = vsyncpa [#allocation8], 0
    %27 = vsyncpa [#allocation11], 0
    %28 = vsyncpa [#allocation14], 0
    %29 = vsyncpa [#allocation6], 0
    %s30 = scalar_lea.sflag [#allocation6], 1
    %31 = vsyncpa %s30, 0
    loop: start=0, step=1, limit=6
    $region2: #{tpu_custom_call.1} parent=1 // loop_pre_header
      _
    $region3: #{tpu_custom_call.1} parent=1 // loop_header
      %s33 = sphi 0, %s37
      %p34 = scmp.ge.s32.totalorder %s33, 6
      %s40 = sphi 0, %s52
      %s41 = sphi 0, %s48
      %s42 = sphi 0, %s40
      %s43 = sphi 0, %s41
      %s44 = sphi 0, %s42
      %s45 = sphi 0, %s43
      %s55 = sphi 0, %s57
      %s58 = sphi 0, %s55
      %s59 = sphi 0, %s58
      %s75 = sphi 0, %s59
      %s79 = sphi 0, %s79
      %s81 = sphi 0, %s79
      %s82 = sphi 0, %s81
      %s96 = sphi 0, %s82
      %s100 = sphi 0, %s100
      %s102 = sphi 0, %s100
      %s103 = sphi 0, %s102
      %s117 = sphi 0, %s103
      %s121 = sphi 0, %s121
      %s123 = sphi 0, %s121
      %s124 = sphi 0, %s123
      %s138 = sphi 0, %s124
      %s142 = sphi 0, %s142
      %s144 = sphi 0, %s142
      %s145 = sphi 0, %s144
      %s159 = sphi 0, %s145
      %s163 = sphi 0, %s163
      %s165 = sphi 0, %s163
      %s166 = sphi 0, %s165
      %s180 = sphi 0, %s166
      %s186 = sphi 0, %s188
      %s189 = sphi 0, %s186
      %s190 = sphi 0, %s189
      %s206 = sphi 0, %s190
      %s212 = sphi 0, %s214
      %s215 = sphi 0, %s212
      %s216 = sphi 0, %s215
      %s232 = sphi 0, %s216
      %s238 = sphi 0, %s240
      %s241 = sphi 0, %s238
      %s242 = sphi 0, %s241
      %s258 = sphi 0, %s242
      %s264 = sphi 0, %s266
      %s267 = sphi 0, %s264
      %s268 = sphi 0, %s267
      %s284 = sphi 0, %s268
      %s290 = sphi 0, %s292
      %s293 = sphi 0, %s290
      %s294 = sphi 0, %s293
      %s310 = sphi 0, %s294
      %s316 = sphi 0, %s318
      %s319 = sphi 0, %s316
      %s320 = sphi 0, %s319
      %s336 = sphi 0, %s320
      %s342 = sphi 0, %s344
      %s345 = sphi 0, %s342
      %s346 = sphi 0, %s345
      %s362 = sphi 0, %s346
      %s368 = sphi 0, %s370
      %s371 = sphi 0, %s368
      %s372 = sphi 0, %s371
      %s388 = sphi 0, %s372
      %s394 = sphi 0, %s396
      %s397 = sphi 0, %s394
      %s398 = sphi 0, %s397
      %s414 = sphi 0, %s398
      %s420 = sphi 0, %s422
      %s423 = sphi 0, %s420
      %s424 = sphi 0, %s423
      %s440 = sphi 0, %s424
      %s446 = sphi 0, %s448
      %s449 = sphi 0, %s446
      %s450 = sphi 0, %s449
      %s466 = sphi 0, %s450
      %s472 = sphi 0, %s474
      %s475 = sphi 0, %s472
      %s476 = sphi 0, %s475
      %s492 = sphi 0, %s476
      %s498 = sphi 0, %s500
      %s501 = sphi 0, %s498
      %s502 = sphi 0, %s501
      %s518 = sphi 0, %s502
    $region4: #{tpu_custom_call.1} parent=1 // loop_header_branch
      %36 = sbr.rel (%p34) target = $region8
    $region5: #{tpu_custom_call.1} parent=1 // loop_body
      %s38 = ssub.s32 %s33, 1
      %s39 = ssub.s32 %s33, 2
      %s46 = sadd.s32 1, %s41
      %p47 = scmp.ge.s32.totalorder %s46, 2
      %s48 = scalar_select %p47, 0, %s46
      %s49 = sadd.s32 1, %s40
      %s50 = scalar_select %p47, %s49, %s40
      %p51 = scmp.ge.s32.totalorder %s50, 2
      %s52 = scalar_select %p51, 0, %s50
      %s53 = ssub.s32 %s40, %s52
      %p54 = scmp.eq.s32.totalorder %s53, 0
      %s56 = sadd.s32 %s55, 1
      %s57 = scalar_select %p54, %s55, %s56
      %p60 = pneg %p54
      %p61 = scmp.eq.s32.totalorder %s33, 3
      %p62 = por %p60, %p61
      %p63 = scmp.ne.s32.totalorder %s55, %s58
      %p64 = scmp.eq.s32.totalorder %s33, 0
      %p65 = por %p63, %p64
      %p66 = scmp.ne.s32.totalorder %s55, %s58
      %p67 = scmp.eq.s32.totalorder %s38, 3
      %p68 = por %p66, %p67
      %p69 = scmp.ne.s32.totalorder %s58, %s59
      %p70 = scmp.eq.s32.totalorder %s38, 0
      %p71 = por %p69, %p70
      %p72 = scmp.ne.s32.totalorder %s58, %s59
      %p73 = scmp.eq.s32.totalorder %s39, 3
      %p74 = por %p72, %p73
      %p76 = scmp.ne.s32.totalorder %s59, %s75
      %p77 = scmp.eq.s32.totalorder %s39, 0
      %p78 = por %p76, %p77
      %s80 = sadd.s32 %s79, 1
      %p83 = scmp.eq.s32.totalorder %s33, 3
      %p84 = scmp.ne.s32.totalorder %s79, %s81
      %p85 = scmp.eq.s32.totalorder %s33, 0
      %p86 = por %p84, %p85
      %p87 = scmp.ne.s32.totalorder %s79, %s81
      %p88 = scmp.eq.s32.totalorder %s38, 3
      %p89 = por %p87, %p88
      %p90 = scmp.ne.s32.totalorder %s81, %s82
      %p91 = scmp.eq.s32.totalorder %s38, 0
      %p92 = por %p90, %p91
      %p93 = scmp.ne.s32.totalorder %s81, %s82
      %p94 = scmp.eq.s32.totalorder %s39, 3
      %p95 = por %p93, %p94
      %p97 = scmp.ne.s32.totalorder %s82, %s96
      %p98 = scmp.eq.s32.totalorder %s39, 0
      %p99 = por %p97, %p98
      %s101 = sadd.s32 %s100, 1
      %p104 = scmp.eq.s32.totalorder %s33, 3
      %p105 = scmp.ne.s32.totalorder %s100, %s102
      %p106 = scmp.eq.s32.totalorder %s33, 0
      %p107 = por %p105, %p106
      %p108 = scmp.ne.s32.totalorder %s100, %s102
      %p109 = scmp.eq.s32.totalorder %s38, 3
      %p110 = por %p108, %p109
      %p111 = scmp.ne.s32.totalorder %s102, %s103
      %p112 = scmp.eq.s32.totalorder %s38, 0
      %p113 = por %p111, %p112
      %p114 = scmp.ne.s32.totalorder %s102, %s103
      %p115 = scmp.eq.s32.totalorder %s39, 3
      %p116 = por %p114, %p115
      %p118 = scmp.ne.s32.totalorder %s103, %s117
      %p119 = scmp.eq.s32.totalorder %s39, 0
      %p120 = por %p118, %p119
      %s122 = sadd.s32 %s121, 1
      %p125 = scmp.eq.s32.totalorder %s33, 3
      %p126 = scmp.ne.s32.totalorder %s121, %s123
      %p127 = scmp.eq.s32.totalorder %s33, 0
      %p128 = por %p126, %p127
      %p129 = scmp.ne.s32.totalorder %s121, %s123
      %p130 = scmp.eq.s32.totalorder %s38, 3
      %p131 = por %p129, %p130
      %p132 = scmp.ne.s32.totalorder %s123, %s124
      %p133 = scmp.eq.s32.totalorder %s38, 0
      %p134 = por %p132, %p133
      %p135 = scmp.ne.s32.totalorder %s123, %s124
      %p136 = scmp.eq.s32.totalorder %s39, 3
      %p137 = por %p135, %p136
      %p139 = scmp.ne.s32.totalorder %s124, %s138
      %p140 = scmp.eq.s32.totalorder %s39, 0
      %p141 = por %p139, %p140
      %s143 = sadd.s32 %s142, 1
      %p146 = scmp.eq.s32.totalorder %s33, 3
      %p147 = scmp.ne.s32.totalorder %s142, %s144
      %p148 = scmp.eq.s32.totalorder %s33, 0
      %p149 = por %p147, %p148
      %p150 = scmp.ne.s32.totalorder %s142, %s144
      %p151 = scmp.eq.s32.totalorder %s38, 3
      %p152 = por %p150, %p151
      %p153 = scmp.ne.s32.totalorder %s144, %s145
      %p154 = scmp.eq.s32.totalorder %s38, 0
      %p155 = por %p153, %p154
      %p156 = scmp.ne.s32.totalorder %s144, %s145
      %p157 = scmp.eq.s32.totalorder %s39, 3
      %p158 = por %p156, %p157
      %p160 = scmp.ne.s32.totalorder %s145, %s159
      %p161 = scmp.eq.s32.totalorder %s39, 0
      %p162 = por %p160, %p161
      %s164 = sadd.s32 %s163, 1
      %p167 = scmp.eq.s32.totalorder %s33, 3
      %p168 = scmp.ne.s32.totalorder %s163, %s165
      %p169 = scmp.eq.s32.totalorder %s33, 0
      %p170 = por %p168, %p169
      %p171 = scmp.ne.s32.totalorder %s163, %s165
      %p172 = scmp.eq.s32.totalorder %s38, 3
      %p173 = por %p171, %p172
      %p174 = scmp.ne.s32.totalorder %s165, %s166
      %p175 = scmp.eq.s32.totalorder %s38, 0
      %p176 = por %p174, %p175
      %p177 = scmp.ne.s32.totalorder %s165, %s166
      %p178 = scmp.eq.s32.totalorder %s39, 3
      %p179 = por %p177, %p178
      %p181 = scmp.ne.s32.totalorder %s166, %s180
      %p182 = scmp.eq.s32.totalorder %s39, 0
      %p183 = por %p181, %p182
      %s184 = ssub.s32 %s41, %s48
      %p185 = scmp.eq.s32.totalorder %s184, 0
      %s187 = sadd.s32 %s186, 1
      %s188 = scalar_select %p185, %s186, %s187
      %p191 = pneg %p185
      %p192 = scmp.eq.s32.totalorder %s33, 3
      %p193 = por %p191, %p192
      %p194 = scmp.ne.s32.totalorder %s186, %s189
      %p195 = scmp.eq.s32.totalorder %s33, 0
      %p196 = por %p194, %p195
      %p197 = scmp.ne.s32.totalorder %s186, %s189
      %p198 = scmp.eq.s32.totalorder %s38, 3
      %p199 = por %p197, %p198
      %p200 = scmp.ne.s32.totalorder %s189, %s190
      %p201 = scmp.eq.s32.totalorder %s38, 0
      %p202 = por %p200, %p201
      %p203 = scmp.ne.s32.totalorder %s189, %s190
      %p204 = scmp.eq.s32.totalorder %s39, 3
      %p205 = por %p203, %p204
      %p207 = scmp.ne.s32.totalorder %s190, %s206
      %p208 = scmp.eq.s32.totalorder %s39, 0
      %p209 = por %p207, %p208
      %s210 = ssub.s32 %s41, %s48
      %p211 = scmp.eq.s32.totalorder %s210, 0
      %s213 = sadd.s32 %s212, 1
      %s214 = scalar_select %p211, %s212, %s213
      %p217 = pneg %p211
      %p218 = scmp.eq.s32.totalorder %s33, 3
      %p219 = por %p217, %p218
      %p220 = scmp.ne.s32.totalorder %s212, %s215
      %p221 = scmp.eq.s32.totalorder %s33, 0
      %p222 = por %p220, %p221
      %p223 = scmp.ne.s32.totalorder %s212, %s215
      %p224 = scmp.eq.s32.totalorder %s38, 3
      %p225 = por %p223, %p224
      %p226 = scmp.ne.s32.totalorder %s215, %s216
      %p227 = scmp.eq.s32.totalorder %s38, 0
      %p228 = por %p226, %p227
      %p229 = scmp.ne.s32.totalorder %s215, %s216
      %p230 = scmp.eq.s32.totalorder %s39, 3
      %p231 = por %p229, %p230
      %p233 = scmp.ne.s32.totalorder %s216, %s232
      %p234 = scmp.eq.s32.totalorder %s39, 0
      %p235 = por %p233, %p234
      %s236 = ssub.s32 %s41, %s48
      %p237 = scmp.eq.s32.totalorder %s236, 0
      %s239 = sadd.s32 %s238, 1
      %s240 = scalar_select %p237, %s238, %s239
      %p243 = pneg %p237
      %p244 = scmp.eq.s32.totalorder %s33, 3
      %p245 = por %p243, %p244
      %p246 = scmp.ne.s32.totalorder %s238, %s241
      %p247 = scmp.eq.s32.totalorder %s33, 0
      %p248 = por %p246, %p247
      %p249 = scmp.ne.s32.totalorder %s238, %s241
      %p250 = scmp.eq.s32.totalorder %s38, 3
      %p251 = por %p249, %p250
      %p252 = scmp.ne.s32.totalorder %s241, %s242
      %p253 = scmp.eq.s32.totalorder %s38, 0
      %p254 = por %p252, %p253
      %p255 = scmp.ne.s32.totalorder %s241, %s242
      %p256 = scmp.eq.s32.totalorder %s39, 3
      %p257 = por %p255, %p256
      %p259 = scmp.ne.s32.totalorder %s242, %s258
      %p260 = scmp.eq.s32.totalorder %s39, 0
      %p261 = por %p259, %p260
      %s262 = ssub.s32 %s41, %s48
      %p263 = scmp.eq.s32.totalorder %s262, 0
      %s265 = sadd.s32 %s264, 1
      %s266 = scalar_select %p263, %s264, %s265
      %p269 = pneg %p263
      %p270 = scmp.eq.s32.totalorder %s33, 3
      %p271 = por %p269, %p270
      %p272 = scmp.ne.s32.totalorder %s264, %s267
      %p273 = scmp.eq.s32.totalorder %s33, 0
      %p274 = por %p272, %p273
      %p275 = scmp.ne.s32.totalorder %s264, %s267
      %p276 = scmp.eq.s32.totalorder %s38, 3
      %p277 = por %p275, %p276
      %p278 = scmp.ne.s32.totalorder %s267, %s268
      %p279 = scmp.eq.s32.totalorder %s38, 0
      %p280 = por %p278, %p279
      %p281 = scmp.ne.s32.totalorder %s267, %s268
      %p282 = scmp.eq.s32.totalorder %s39, 3
      %p283 = por %p281, %p282
      %p285 = scmp.ne.s32.totalorder %s268, %s284
      %p286 = scmp.eq.s32.totalorder %s39, 0
      %p287 = por %p285, %p286
      %s288 = ssub.s32 %s41, %s48
      %p289 = scmp.eq.s32.totalorder %s288, 0
      %s291 = sadd.s32 %s290, 1
      %s292 = scalar_select %p289, %s290, %s291
      %p295 = pneg %p289
      %p296 = scmp.eq.s32.totalorder %s33, 3
      %p297 = por %p295, %p296
      %p298 = scmp.ne.s32.totalorder %s290, %s293
      %p299 = scmp.eq.s32.totalorder %s33, 0
      %p300 = por %p298, %p299
      %p301 = scmp.ne.s32.totalorder %s290, %s293
      %p302 = scmp.eq.s32.totalorder %s38, 3
      %p303 = por %p301, %p302
      %p304 = scmp.ne.s32.totalorder %s293, %s294
      %p305 = scmp.eq.s32.totalorder %s38, 0
      %p306 = por %p304, %p305
      %p307 = scmp.ne.s32.totalorder %s293, %s294
      %p308 = scmp.eq.s32.totalorder %s39, 3
      %p309 = por %p307, %p308
      %p311 = scmp.ne.s32.totalorder %s294, %s310
      %p312 = scmp.eq.s32.totalorder %s39, 0
      %p313 = por %p311, %p312
      %s314 = ssub.s32 %s41, %s48
      %p315 = scmp.eq.s32.totalorder %s314, 0
      %s317 = sadd.s32 %s316, 1
      %s318 = scalar_select %p315, %s316, %s317
      %p321 = pneg %p315
      %p322 = scmp.eq.s32.totalorder %s33, 3
      %p323 = por %p321, %p322
      %p324 = scmp.ne.s32.totalorder %s316, %s319
      %p325 = scmp.eq.s32.totalorder %s33, 0
      %p326 = por %p324, %p325
      %p327 = scmp.ne.s32.totalorder %s316, %s319
      %p328 = scmp.eq.s32.totalorder %s38, 3
      %p329 = por %p327, %p328
      %p330 = scmp.ne.s32.totalorder %s319, %s320
      %p331 = scmp.eq.s32.totalorder %s38, 0
      %p332 = por %p330, %p331
      %p333 = scmp.ne.s32.totalorder %s319, %s320
      %p334 = scmp.eq.s32.totalorder %s39, 3
      %p335 = por %p333, %p334
      %p337 = scmp.ne.s32.totalorder %s320, %s336
      %p338 = scmp.eq.s32.totalorder %s39, 0
      %p339 = por %p337, %p338
      %s340 = ssub.s32 %s41, %s48
      %p341 = scmp.eq.s32.totalorder %s340, 0
      %s343 = sadd.s32 %s342, 1
      %s344 = scalar_select %p341, %s342, %s343
      %p347 = pneg %p341
      %p348 = scmp.eq.s32.totalorder %s33, 3
      %p349 = por %p347, %p348
      %p350 = scmp.ne.s32.totalorder %s342, %s345
      %p351 = scmp.eq.s32.totalorder %s33, 0
      %p352 = por %p350, %p351
      %p353 = scmp.ne.s32.totalorder %s342, %s345
      %p354 = scmp.eq.s32.totalorder %s38, 3
      %p355 = por %p353, %p354
      %p356 = scmp.ne.s32.totalorder %s345, %s346
      %p357 = scmp.eq.s32.totalorder %s38, 0
      %p358 = por %p356, %p357
      %p359 = scmp.ne.s32.totalorder %s345, %s346
      %p360 = scmp.eq.s32.totalorder %s39, 3
      %p361 = por %p359, %p360
      %p363 = scmp.ne.s32.totalorder %s346, %s362
      %p364 = scmp.eq.s32.totalorder %s39, 0
      %p365 = por %p363, %p364
      %s366 = ssub.s32 %s41, %s48
      %p367 = scmp.eq.s32.totalorder %s366, 0
      %s369 = sadd.s32 %s368, 1
      %s370 = scalar_select %p367, %s368, %s369
      %p373 = pneg %p367
      %p374 = scmp.eq.s32.totalorder %s33, 3
      %p375 = por %p373, %p374
      %p376 = scmp.ne.s32.totalorder %s368, %s371
      %p377 = scmp.eq.s32.totalorder %s33, 0
      %p378 = por %p376, %p377
      %p379 = scmp.ne.s32.totalorder %s368, %s371
      %p380 = scmp.eq.s32.totalorder %s38, 3
      %p381 = por %p379, %p380
      %p382 = scmp.ne.s32.totalorder %s371, %s372
      %p383 = scmp.eq.s32.totalorder %s38, 0
      %p384 = por %p382, %p383
      %p385 = scmp.ne.s32.totalorder %s371, %s372
      %p386 = scmp.eq.s32.totalorder %s39, 3
      %p387 = por %p385, %p386
      %p389 = scmp.ne.s32.totalorder %s372, %s388
      %p390 = scmp.eq.s32.totalorder %s39, 0
      %p391 = por %p389, %p390
      %s392 = ssub.s32 %s41, %s48
      %p393 = scmp.eq.s32.totalorder %s392, 0
      %s395 = sadd.s32 %s394, 1
      %s396 = scalar_select %p393, %s394, %s395
      %p399 = pneg %p393
      %p400 = scmp.eq.s32.totalorder %s33, 3
      %p401 = por %p399, %p400
      %p402 = scmp.ne.s32.totalorder %s394, %s397
      %p403 = scmp.eq.s32.totalorder %s33, 0
      %p404 = por %p402, %p403
      %p405 = scmp.ne.s32.totalorder %s394, %s397
      %p406 = scmp.eq.s32.totalorder %s38, 3
      %p407 = por %p405, %p406
      %p408 = scmp.ne.s32.totalorder %s397, %s398
      %p409 = scmp.eq.s32.totalorder %s38, 0
      %p410 = por %p408, %p409
      %p411 = scmp.ne.s32.totalorder %s397, %s398
      %p412 = scmp.eq.s32.totalorder %s39, 3
      %p413 = por %p411, %p412
      %p415 = scmp.ne.s32.totalorder %s398, %s414
      %p416 = scmp.eq.s32.totalorder %s39, 0
      %p417 = por %p415, %p416
      %s418 = ssub.s32 %s41, %s48
      %p419 = scmp.eq.s32.totalorder %s418, 0
      %s421 = sadd.s32 %s420, 1
      %s422 = scalar_select %p419, %s420, %s421
      %p425 = pneg %p419
      %p426 = scmp.eq.s32.totalorder %s33, 3
      %p427 = por %p425, %p426
      %p428 = scmp.ne.s32.totalorder %s420, %s423
      %p429 = scmp.eq.s32.totalorder %s33, 0
      %p430 = por %p428, %p429
      %p431 = scmp.ne.s32.totalorder %s420, %s423
      %p432 = scmp.eq.s32.totalorder %s38, 3
      %p433 = por %p431, %p432
      %p434 = scmp.ne.s32.totalorder %s423, %s424
      %p435 = scmp.eq.s32.totalorder %s38, 0
      %p436 = por %p434, %p435
      %p437 = scmp.ne.s32.totalorder %s423, %s424
      %p438 = scmp.eq.s32.totalorder %s39, 3
      %p439 = por %p437, %p438
      %p441 = scmp.ne.s32.totalorder %s424, %s440
      %p442 = scmp.eq.s32.totalorder %s39, 0
      %p443 = por %p441, %p442
      %s444 = ssub.s32 %s41, %s48
      %p445 = scmp.eq.s32.totalorder %s444, 0
      %s447 = sadd.s32 %s446, 1
      %s448 = scalar_select %p445, %s446, %s447
      %p451 = pneg %p445
      %p452 = scmp.eq.s32.totalorder %s33, 3
      %p453 = por %p451, %p452
      %p454 = scmp.ne.s32.totalorder %s446, %s449
      %p455 = scmp.eq.s32.totalorder %s33, 0
      %p456 = por %p454, %p455
      %p457 = scmp.ne.s32.totalorder %s446, %s449
      %p458 = scmp.eq.s32.totalorder %s38, 3
      %p459 = por %p457, %p458
      %p460 = scmp.ne.s32.totalorder %s449, %s450
      %p461 = scmp.eq.s32.totalorder %s38, 0
      %p462 = por %p460, %p461
      %p463 = scmp.ne.s32.totalorder %s449, %s450
      %p464 = scmp.eq.s32.totalorder %s39, 3
      %p465 = por %p463, %p464
      %p467 = scmp.ne.s32.totalorder %s450, %s466
      %p468 = scmp.eq.s32.totalorder %s39, 0
      %p469 = por %p467, %p468
      %s470 = ssub.s32 %s41, %s48
      %p471 = scmp.eq.s32.totalorder %s470, 0
      %s473 = sadd.s32 %s472, 1
      %s474 = scalar_select %p471, %s472, %s473
      %p477 = pneg %p471
      %p478 = scmp.eq.s32.totalorder %s33, 3
      %p479 = por %p477, %p478
      %p480 = scmp.ne.s32.totalorder %s472, %s475
      %p481 = scmp.eq.s32.totalorder %s33, 0
      %p482 = por %p480, %p481
      %p483 = scmp.ne.s32.totalorder %s472, %s475
      %p484 = scmp.eq.s32.totalorder %s38, 3
      %p485 = por %p483, %p484
      %p486 = scmp.ne.s32.totalorder %s475, %s476
      %p487 = scmp.eq.s32.totalorder %s38, 0
      %p488 = por %p486, %p487
      %p489 = scmp.ne.s32.totalorder %s475, %s476
      %p490 = scmp.eq.s32.totalorder %s39, 3
      %p491 = por %p489, %p490
      %p493 = scmp.ne.s32.totalorder %s476, %s492
      %p494 = scmp.eq.s32.totalorder %s39, 0
      %p495 = por %p493, %p494
      %s496 = ssub.s32 %s40, %s52
      %p497 = scmp.eq.s32.totalorder %s496, 0
      %s499 = sadd.s32 %s498, 1
      %s500 = scalar_select %p497, %s498, %s499
      %p503 = pneg %p497
      %p504 = scmp.eq.s32.totalorder %s33, 3
      %p505 = por %p503, %p504
      %p506 = scmp.ne.s32.totalorder %s498, %s501
      %p507 = scmp.eq.s32.totalorder %s33, 0
      %p508 = por %p506, %p507
      %p509 = scmp.ne.s32.totalorder %s498, %s501
      %p510 = scmp.eq.s32.totalorder %s38, 3
      %p511 = por %p509, %p510
      %p512 = scmp.ne.s32.totalorder %s501, %s502
      %p513 = scmp.eq.s32.totalorder %s38, 0
      %p514 = por %p512, %p513
      %p515 = scmp.ne.s32.totalorder %s501, %s502
      %p516 = scmp.eq.s32.totalorder %s39, 3
      %p517 = por %p515, %p516
      %p519 = scmp.ne.s32.totalorder %s502, %s518
      %p520 = scmp.eq.s32.totalorder %s39, 0
      %p521 = por %p519, %p520
      %p522 = scmp.le.s32.totalorder 1, %s33
      %p523 = scmp.lt.s32.totalorder %s33, 5
      %p524 = pnand %p522, %p523
      %p525 = pneg %p524
      // Predicated region
      $region9: #{tpu_custom_call.1} parent=5 // pred_check
        _
      $region10: #{tpu_custom_call.1} parent=5 // pred_check_branch
        %527 = sbr.rel (%p524) target = $region12
      $region11: #{tpu_custom_call.1} parent=5 // pred_region
        %s528 = ssub.s32 %s33, 1
        // Predicated region
        $region13: #{tpu_custom_call.1} parent=11 // pred_check
          %p529 = pneg %p92
        $region14: #{tpu_custom_call.1} parent=11 // pred_check_branch
          %531 = sbr.rel (%p529) target = $region16
        $region15: #{tpu_custom_call.1} parent=11 // pred_region
          %533 = vsyncadd [#allocation8], 0
          %s534 = sshll.u32 %s1, 4
          %s535 = int_to_ptr.hbm [resolvable:$true] %s534
          %s536 = sshll.u32 [#allocation7], 4
          %s537 = int_to_ptr.vmem [resolvable:$true] %s536
          %542 = dma.hbm_to_vmem [thread:$0]  %s535, 1024, %s537, [#allocation8], 64, 64, 4
        $region16: #{tpu_custom_call.1} parent=11 // pred_fallthru
          _
        // Predicated region
        $region17: #{tpu_custom_call.1} parent=11 // pred_check
          %p543 = pneg %p113
        $region18: #{tpu_custom_call.1} parent=11 // pred_check_branch
          %545 = sbr.rel (%p543) target = $region20
        $region19: #{tpu_custom_call.1} parent=11 // pred_region
          %547 = vsyncadd [#allocation8], 0
          %s549 = sshll.u32 %s2, 4
          %s550 = int_to_ptr.hbm [resolvable:$true] %s549
          %s551 = sshll.u32 [#allocation9], 4
          %s552 = int_to_ptr.vmem [resolvable:$true] %s551
          %554 = dma.hbm_to_vmem [thread:$0]  %s550, 16, %s552, [#allocation8]
        $region20: #{tpu_custom_call.1} parent=11 // pred_fallthru
          _
        // Predicated region
        $region21: #{tpu_custom_call.1} parent=11 // pred_check
          %p555 = pneg %p134
        $region22: #{tpu_custom_call.1} parent=11 // pred_check_branch
          %557 = sbr.rel (%p555) target = $region24
        $region23: #{tpu_custom_call.1} parent=11 // pred_region
          %559 = vsyncadd [#allocation11], 0
          %s560 = sshll.u32 %s3, 4
          %s561 = int_to_ptr.hbm [resolvable:$true] %s560
          %s562 = sshll.u32 [#allocation10], 4
          %s563 = int_to_ptr.vmem [resolvable:$true] %s562
          %568 = dma.hbm_to_vmem [thread:$0]  %s561, 256, %s563, [#allocation11], 128, 128, 8
        $region24: #{tpu_custom_call.1} parent=11 // pred_fallthru
          _
        // Predicated region
        $region25: #{tpu_custom_call.1} parent=11 // pred_check
          %p569 = pneg %p155
        $region26: #{tpu_custom_call.1} parent=11 // pred_check_branch
          %571 = sbr.rel (%p569) target = $region28
        $region27: #{tpu_custom_call.1} parent=11 // pred_region
          %573 = vsyncadd [#allocation11], 0
          %s575 = sshll.u32 %s4, 4
          %s576 = int_to_ptr.hbm [resolvable:$true] %s575
          %s577 = sshll.u32 [#allocation12], 4
          %s578 = int_to_ptr.vmem [resolvable:$true] %s577
          %580 = dma.hbm_to_vmem [thread:$0]  %s576, 16, %s578, [#allocation11]
        $region28: #{tpu_custom_call.1} parent=11 // pred_fallthru
          _
        // Predicated region
        $region29: #{tpu_custom_call.1} parent=11 // pred_check
          %p581 = pneg %p176
        $region30: #{tpu_custom_call.1} parent=11 // pred_check_branch
          %583 = sbr.rel (%p581) target = $region32
        $region31: #{tpu_custom_call.1} parent=11 // pred_region
          %585 = vsyncadd [#allocation14], 0
          %s587 = sshll.u32 %s5, 4
          %s588 = int_to_ptr.hbm [resolvable:$true] %s587
          %s589 = sshll.u32 [#allocation13], 4
          %s590 = int_to_ptr.vmem [resolvable:$true] %s589
          %592 = dma.hbm_to_vmem [thread:$0]  %s588, 16, %s590, [#allocation14]
        $region32: #{tpu_custom_call.1} parent=11 // pred_fallthru
          _
      $region12: #{tpu_custom_call.1} parent=5 // pred_fallthru
        _
      %p593 = scmp.lt.s32.totalorder %s33, 4
      // Predicated region
      $region33: #{tpu_custom_call.1} parent=5 // pred_check
        %p594 = pneg %p593
      $region34: #{tpu_custom_call.1} parent=5 // pred_check_branch
        %596 = sbr.rel (%p594) target = $region36
      $region35: #{tpu_custom_call.1} parent=5 // pred_region
        // Predicated region
        $region37: #{tpu_custom_call.1} parent=35 // pred_check
          %p597 = pneg %p65
        $region38: #{tpu_custom_call.1} parent=35 // pred_check_branch
          %599 = sbr.rel (%p597) target = $region40
        $region39: #{tpu_custom_call.1} parent=35 // pred_region
          %s600 = sand.u32 %s33, 1
          %s601 = scalar_lea.sflag [#allocation5], %s600
          %s602 = sand.u32 %s55, 1
          %s603 = smul.addr %s602, 8
          %s604 = scalar_lea.vmem [#allocation4], %s603
          %606 = vsyncadd %s601, 0
          %s607 = smul.addr %s40, 2
          %s608 = smul.addr %s607, 4
          %s609 = scalar_lea.hbm %s0, %s608
          %s610 = sshll.u32 %s609, 4
          %s611 = int_to_ptr.hbm [resolvable:$true] %s610
          %s612 = sshll.u32 %s604, 4
          %s613 = int_to_ptr.vmem [resolvable:$true] %s612
          %618 = dma.hbm_to_vmem [thread:$0]  %s611, 128, %s613, %s601, 64, 64, 4
        $region40: #{tpu_custom_call.1} parent=35 // pred_fallthru
          _
        // Predicated region
        $region41: #{tpu_custom_call.1} parent=35 // pred_check
          %p619 = pneg %p196
        $region42: #{tpu_custom_call.1} parent=35 // pred_check_branch
          %621 = sbr.rel (%p619) target = $region44
        $region43: #{tpu_custom_call.1} parent=35 // pred_region
          %p622 = scmp.lt.s32.totalorder %s41, 1
          %s623 = scalar_select %p622, %s41, 1
          %s624 = scalar_lea.vmem %s6, %s623
        $region44: #{tpu_custom_call.1} parent=35 // pred_fallthru
          _
        // Predicated region
        $region45: #{tpu_custom_call.1} parent=35 // pred_check
          %p625 = pneg %p222
        $region46: #{tpu_custom_call.1} parent=35 // pred_check_branch
          %627 = sbr.rel (%p625) target = $region48
        $region47: #{tpu_custom_call.1} parent=35 // pred_region
          %p628 = scmp.lt.s32.totalorder %s41, 1
          %s629 = scalar_select %p628, %s41, 1
          %s630 = scalar_lea.vmem %s7, %s629
        $region48: #{tpu_custom_call.1} parent=35 // pred_fallthru
          _
        // Predicated region
        $region49: #{tpu_custom_call.1} parent=35 // pred_check
          %p631 = pneg %p248
        $region50: #{tpu_custom_call.1} parent=35 // pred_check_branch
          %633 = sbr.rel (%p631) target = $region52
        $region51: #{tpu_custom_call.1} parent=35 // pred_region
          %s634 = sand.u32 %s33, 1
          %s635 = scalar_lea.sflag [#allocation5], %s634
          %s636 = sand.u32 %s238, 1
          %s637 = smul.addr %s636, 768
          %s638 = scalar_lea.vmem [#allocation15], %s637
          %640 = vsyncadd %s635, 0
          %s641 = smul.addr %s41, 192
          %s642 = smul.addr %s641, 4
          %s643 = scalar_lea.hbm %s8, %s642
          %s644 = sshll.u32 %s643, 4
          %s645 = int_to_ptr.hbm [resolvable:$true] %s644
          %s646 = sshll.u32 %s638, 4
          %s647 = int_to_ptr.vmem [resolvable:$true] %s646
          %652 = dma.hbm_to_vmem [thread:$0]  %s645, 12288, %s647, %s635, 768, 768, 48
        $region52: #{tpu_custom_call.1} parent=35 // pred_fallthru
          _
        // Predicated region
        $region53: #{tpu_custom_call.1} parent=35 // pred_check
          %p653 = pneg %p274
        $region54: #{tpu_custom_call.1} parent=35 // pred_check_branch
          %655 = sbr.rel (%p653) target = $region56
        $region55: #{tpu_custom_call.1} parent=35 // pred_region
          %s656 = sand.u32 %s33, 1
          %s657 = scalar_lea.sflag [#allocation5], %s656
          %s658 = sand.u32 %s264, 1
          %s659 = smul.addr %s658, 12
          %s660 = scalar_lea.vmem [#allocation16], %s659
          %662 = vsyncadd %s657, 0
          %s663 = smul.addr %s41, 12
          %s664 = scalar_lea.hbm %s9, %s663
          %s666 = sshll.u32 %s664, 4
          %s667 = int_to_ptr.hbm [resolvable:$true] %s666
          %s668 = sshll.u32 %s660, 4
          %s669 = int_to_ptr.vmem [resolvable:$true] %s668
          %671 = dma.hbm_to_vmem [thread:$0]  %s667, 192, %s669, %s657
        $region56: #{tpu_custom_call.1} parent=35 // pred_fallthru
          _
        // Predicated region
        $region57: #{tpu_custom_call.1} parent=35 // pred_check
          %p672 = pneg %p300
        $region58: #{tpu_custom_call.1} parent=35 // pred_check_branch
          %674 = sbr.rel (%p672) target = $region60
        $region59: #{tpu_custom_call.1} parent=35 // pred_region
          %s675 = sand.u32 %s33, 1
          %s676 = scalar_lea.sflag [#allocation5], %s675
          %s677 = sand.u32 %s290, 1
          %s678 = smul.addr %s677, 256
          %s679 = scalar_lea.vmem [#allocation17], %s678
          %681 = vsyncadd %s676, 0
          %s682 = smul.addr %s41, 64
          %s683 = smul.addr %s682, 4
          %s684 = scalar_lea.hbm %s10, %s683
          %s685 = sshll.u32 %s684, 4
          %s686 = int_to_ptr.hbm [resolvable:$true] %s685
          %s687 = sshll.u32 %s679, 4
          %s688 = int_to_ptr.vmem [resolvable:$true] %s687
          %693 = dma.hbm_to_vmem [thread:$0]  %s686, 4096, %s688, %s676, 64, 64, 4
        $region60: #{tpu_custom_call.1} parent=35 // pred_fallthru
          _
        // Predicated region
        $region61: #{tpu_custom_call.1} parent=35 // pred_check
          %p694 = pneg %p326
        $region62: #{tpu_custom_call.1} parent=35 // pred_check_branch
          %696 = sbr.rel (%p694) target = $region64
        $region63: #{tpu_custom_call.1} parent=35 // pred_region
          %p697 = scmp.lt.s32.totalorder %s41, 1
          %s698 = scalar_select %p697, %s41, 1
          %s699 = scalar_lea.vmem %s11, %s698
        $region64: #{tpu_custom_call.1} parent=35 // pred_fallthru
          _
        // Predicated region
        $region65: #{tpu_custom_call.1} parent=35 // pred_check
          %p700 = pneg %p352
        $region66: #{tpu_custom_call.1} parent=35 // pred_check_branch
          %702 = sbr.rel (%p700) target = $region68
        $region67: #{tpu_custom_call.1} parent=35 // pred_region
          %p703 = scmp.lt.s32.totalorder %s41, 1
          %s704 = scalar_select %p703, %s41, 1
          %s705 = scalar_lea.vmem %s12, %s704
        $region68: #{tpu_custom_call.1} parent=35 // pred_fallthru
          _
        // Predicated region
        $region69: #{tpu_custom_call.1} parent=35 // pred_check
          %p706 = pneg %p378
        $region70: #{tpu_custom_call.1} parent=35 // pred_check_branch
          %708 = sbr.rel (%p706) target = $region72
        $region71: #{tpu_custom_call.1} parent=35 // pred_region
          %p709 = scmp.lt.s32.totalorder %s41, 1
          %s710 = scalar_select %p709, %s41, 1
          %s711 = scalar_lea.vmem %s13, %s710
        $region72: #{tpu_custom_call.1} parent=35 // pred_fallthru
          _
        // Predicated region
        $region73: #{tpu_custom_call.1} parent=35 // pred_check
          %p712 = pneg %p404
        $region74: #{tpu_custom_call.1} parent=35 // pred_check_branch
          %714 = sbr.rel (%p712) target = $region76
        $region75: #{tpu_custom_call.1} parent=35 // pred_region
          %s715 = sand.u32 %s33, 1
          %s716 = scalar_lea.sflag [#allocation5], %s715
          %s717 = sand.u32 %s394, 1
          %s718 = smul.addr %s717, 64
          %s719 = scalar_lea.vmem [#allocation18], %s718
          %721 = vsyncadd %s716, 0
          %s722 = smul.addr %s41, 16
          %s723 = smul.addr %s722, 4
          %s724 = scalar_lea.hbm %s14, %s723
          %s725 = sshll.u32 %s724, 4
          %s726 = int_to_ptr.hbm [resolvable:$true] %s725
          %s727 = sshll.u32 %s719, 4
          %s728 = int_to_ptr.vmem [resolvable:$true] %s727
          %733 = dma.hbm_to_vmem [thread:$0]  %s726, 1024, %s728, %s716, 64, 64, 4
        $region76: #{tpu_custom_call.1} parent=35 // pred_fallthru
          _
        // Predicated region
        $region77: #{tpu_custom_call.1} parent=35 // pred_check
          %p734 = pneg %p430
        $region78: #{tpu_custom_call.1} parent=35 // pred_check_branch
          %736 = sbr.rel (%p734) target = $region80
        $region79: #{tpu_custom_call.1} parent=35 // pred_region
          %p737 = scmp.lt.s32.totalorder %s41, 1
          %s738 = scalar_select %p737, %s41, 1
          %s739 = scalar_lea.vmem %s15, %s738
        $region80: #{tpu_custom_call.1} parent=35 // pred_fallthru
          _
        // Predicated region
        $region81: #{tpu_custom_call.1} parent=35 // pred_check
          %p740 = pneg %p456
        $region82: #{tpu_custom_call.1} parent=35 // pred_check_branch
          %742 = sbr.rel (%p740) target = $region84
        $region83: #{tpu_custom_call.1} parent=35 // pred_region
          %s743 = sand.u32 %s33, 1
          %s744 = scalar_lea.sflag [#allocation5], %s743
          %s745 = sand.u32 %s446, 1
          %s746 = smul.addr %s745, 64
          %s747 = scalar_lea.vmem [#allocation19], %s746
          %749 = vsyncadd %s744, 0
          %s750 = smul.addr %s41, 16
          %s751 = smul.addr %s750, 4
          %s752 = scalar_lea.hbm %s16, %s751
          %s753 = sshll.u32 %s752, 4
          %s754 = int_to_ptr.hbm [resolvable:$true] %s753
          %s755 = sshll.u32 %s747, 4
          %s756 = int_to_ptr.vmem [resolvable:$true] %s755
          %761 = dma.hbm_to_vmem [thread:$0]  %s754, 1024, %s756, %s744, 64, 64, 4
        $region84: #{tpu_custom_call.1} parent=35 // pred_fallthru
          _
        // Predicated region
        $region85: #{tpu_custom_call.1} parent=35 // pred_check
          %p762 = pneg %p482
        $region86: #{tpu_custom_call.1} parent=35 // pred_check_branch
          %764 = sbr.rel (%p762) target = $region88
        $region87: #{tpu_custom_call.1} parent=35 // pred_region
          %p765 = scmp.lt.s32.totalorder %s41, 1
          %s766 = scalar_select %p765, %s41, 1
          %s767 = scalar_lea.vmem %s17, %s766
        $region88: #{tpu_custom_call.1} parent=35 // pred_fallthru
          _
      $region36: #{tpu_custom_call.1} parent=5 // pred_fallthru
        _
      %p768 = scmp.le.s32.totalorder 1, %s33
      %p769 = scmp.lt.s32.totalorder %s33, 5
      %p770 = pnand %p768, %p769
      %p771 = pneg %p770
      // Predicated region
      $region89: #{tpu_custom_call.1} parent=5 // pred_check
        _
      $region90: #{tpu_custom_call.1} parent=5 // pred_check_branch
        %773 = sbr.rel (%p770) target = $region92
      $region91: #{tpu_custom_call.1} parent=5 // pred_region
        %s774 = ssub.s32 %s33, 1
        %s775 = sand.u32 %s38, 1
        %s776 = scalar_lea.sflag [#allocation5], %s775
        %s777 = sand.u32 %s58, 1
        %s778 = smul.addr %s777, 8
        %s779 = scalar_lea.vmem [#allocation4], %s778
        // Predicated region
        $region93: #{tpu_custom_call.1} parent=91 // pred_check
          %p780 = pneg %p71
        $region94: #{tpu_custom_call.1} parent=91 // pred_check_branch
          %782 = sbr.rel (%p780) target = $region96
        $region95: #{tpu_custom_call.1} parent=91 // pred_region
          %784 = dma.done %s776, 128
        $region96: #{tpu_custom_call.1} parent=91 // pred_fallthru
          _
        // Predicated region
        $region97: #{tpu_custom_call.1} parent=91 // pred_check
          %p785 = pneg %p92
        $region98: #{tpu_custom_call.1} parent=91 // pred_check_branch
          %787 = sbr.rel (%p785) target = $region100
        $region99: #{tpu_custom_call.1} parent=91 // pred_region
          %789 = dma.done [#allocation8], 1024
        $region100: #{tpu_custom_call.1} parent=91 // pred_fallthru
          _
        // Predicated region
        $region101: #{tpu_custom_call.1} parent=91 // pred_check
          %p790 = pneg %p113
        $region102: #{tpu_custom_call.1} parent=91 // pred_check_branch
          %792 = sbr.rel (%p790) target = $region104
        $region103: #{tpu_custom_call.1} parent=91 // pred_region
          %794 = dma.done [#allocation8], 16
        $region104: #{tpu_custom_call.1} parent=91 // pred_fallthru
          _
        // Predicated region
        $region105: #{tpu_custom_call.1} parent=91 // pred_check
          %p795 = pneg %p134
        $region106: #{tpu_custom_call.1} parent=91 // pred_check_branch
          %797 = sbr.rel (%p795) target = $region108
        $region107: #{tpu_custom_call.1} parent=91 // pred_region
          %799 = dma.done [#allocation11], 256
        $region108: #{tpu_custom_call.1} parent=91 // pred_fallthru
          _
        // Predicated region
        $region109: #{tpu_custom_call.1} parent=91 // pred_check
          %p800 = pneg %p155
        $region110: #{tpu_custom_call.1} parent=91 // pred_check_branch
          %802 = sbr.rel (%p800) target = $region112
        $region111: #{tpu_custom_call.1} parent=91 // pred_region
          %804 = dma.done [#allocation11], 16
        $region112: #{tpu_custom_call.1} parent=91 // pred_fallthru
          _
        // Predicated region
        $region113: #{tpu_custom_call.1} parent=91 // pred_check
          %p805 = pneg %p176
        $region114: #{tpu_custom_call.1} parent=91 // pred_check_branch
          %807 = sbr.rel (%p805) target = $region116
        $region115: #{tpu_custom_call.1} parent=91 // pred_region
          %809 = dma.done [#allocation14], 16
        $region116: #{tpu_custom_call.1} parent=91 // pred_fallthru
          _
        %s810 = sand.u32 %s38, 1
        %s811 = scalar_lea.sflag [#allocation5], %s810
        %s812 = sand.u32 %s241, 1
        %s813 = smul.addr %s812, 768
        %s814 = scalar_lea.vmem [#allocation15], %s813
        // Predicated region
        $region117: #{tpu_custom_call.1} parent=91 // pred_check
          %p815 = pneg %p254
        $region118: #{tpu_custom_call.1} parent=91 // pred_check_branch
          %817 = sbr.rel (%p815) target = $region120
        $region119: #{tpu_custom_call.1} parent=91 // pred_region
          %819 = dma.done %s811, 12288
        $region120: #{tpu_custom_call.1} parent=91 // pred_fallthru
          _
        %s820 = sand.u32 %s38, 1
        %s821 = scalar_lea.sflag [#allocation5], %s820
        %s822 = sand.u32 %s267, 1
        %s823 = smul.addr %s822, 12
        %s824 = scalar_lea.vmem [#allocation16], %s823
        // Predicated region
        $region121: #{tpu_custom_call.1} parent=91 // pred_check
          %p825 = pneg %p280
        $region122: #{tpu_custom_call.1} parent=91 // pred_check_branch
          %827 = sbr.rel (%p825) target = $region124
        $region123: #{tpu_custom_call.1} parent=91 // pred_region
          %829 = dma.done %s821, 192
        $region124: #{tpu_custom_call.1} parent=91 // pred_fallthru
          _
        %s830 = sand.u32 %s38, 1
        %s831 = scalar_lea.sflag [#allocation5], %s830
        %s832 = sand.u32 %s293, 1
        %s833 = smul.addr %s832, 256
        %s834 = scalar_lea.vmem [#allocation17], %s833
        // Predicated region
        $region125: #{tpu_custom_call.1} parent=91 // pred_check
          %p835 = pneg %p306
        $region126: #{tpu_custom_call.1} parent=91 // pred_check_branch
          %837 = sbr.rel (%p835) target = $region128
        $region127: #{tpu_custom_call.1} parent=91 // pred_region
          %839 = dma.done %s831, 4096
        $region128: #{tpu_custom_call.1} parent=91 // pred_fallthru
          _
        %s840 = sand.u32 %s38, 1
        %s841 = scalar_lea.sflag [#allocation5], %s840
        %s842 = sand.u32 %s397, 1
        %s843 = smul.addr %s842, 64
        %s844 = scalar_lea.vmem [#allocation18], %s843
        // Predicated region
        $region129: #{tpu_custom_call.1} parent=91 // pred_check
          %p845 = pneg %p410
        $region130: #{tpu_custom_call.1} parent=91 // pred_check_branch
          %847 = sbr.rel (%p845) target = $region132
        $region131: #{tpu_custom_call.1} parent=91 // pred_region
          %849 = dma.done %s841, 1024
        $region132: #{tpu_custom_call.1} parent=91 // pred_fallthru
          _
        %s850 = sand.u32 %s38, 1
        %s851 = scalar_lea.sflag [#allocation5], %s850
        %s852 = sand.u32 %s449, 1
        %s853 = smul.addr %s852, 64
        %s854 = scalar_lea.vmem [#allocation19], %s853
        // Predicated region
        $region133: #{tpu_custom_call.1} parent=91 // pred_check
          %p855 = pneg %p462
        $region134: #{tpu_custom_call.1} parent=91 // pred_check_branch
          %857 = sbr.rel (%p855) target = $region136
        $region135: #{tpu_custom_call.1} parent=91 // pred_region
          %859 = dma.done %s851, 1024
        $region136: #{tpu_custom_call.1} parent=91 // pred_fallthru
          _
        %s860 = sand.u32 %s38, 1
        %s861 = scalar_lea.sflag [#allocation5], %s860
        %s862 = sand.u32 %s58, 1
        %s863 = smul.addr %s862, 8
        %s864 = scalar_lea.vmem [#allocation4], %s863
        %p865 = pneg %p71
        %p866 = pneg %p68
        %p867 = pneg %p92
        %p868 = pneg %p89
        %p869 = pneg %p113
        %p870 = pneg %p110
        %p871 = pneg %p134
        %p872 = pneg %p131
        %p873 = pneg %p155
        %p874 = pneg %p152
        %p875 = pneg %p176
        %p876 = pneg %p173
        %p877 = scmp.lt.s32.totalorder %s43, 1
        %s878 = scalar_select %p877, %s43, 1
        %s879 = scalar_lea.vmem %s6, %s878
        %p880 = pneg %p202
        %p881 = pneg %p199
        %p882 = scmp.lt.s32.totalorder %s43, 1
        %s883 = scalar_select %p882, %s43, 1
        %s884 = scalar_lea.vmem %s7, %s883
        %p885 = pneg %p228
        %p886 = pneg %p225
        %s887 = sand.u32 %s38, 1
        %s888 = scalar_lea.sflag [#allocation5], %s887
        %s889 = sand.u32 %s241, 1
        %s890 = smul.addr %s889, 768
        %s891 = scalar_lea.vmem [#allocation15], %s890
        %p892 = pneg %p254
        %p893 = pneg %p251
        %s894 = sand.u32 %s38, 1
        %s895 = scalar_lea.sflag [#allocation5], %s894
        %s896 = sand.u32 %s267, 1
        %s897 = smul.addr %s896, 12
        %s898 = scalar_lea.vmem [#allocation16], %s897
        %p899 = pneg %p280
        %p900 = pneg %p277
        %s901 = sand.u32 %s38, 1
        %s902 = scalar_lea.sflag [#allocation5], %s901
        %s903 = sand.u32 %s293, 1
        %s904 = smul.addr %s903, 256
        %s905 = scalar_lea.vmem [#allocation17], %s904
        %p906 = pneg %p306
        %p907 = pneg %p303
        %p908 = scmp.lt.s32.totalorder %s43, 1
        %s909 = scalar_select %p908, %s43, 1
        %s910 = scalar_lea.vmem %s11, %s909
        %p911 = pneg %p332
        %p912 = pneg %p329
        %p913 = scmp.lt.s32.totalorder %s43, 1
        %s914 = scalar_select %p913, %s43, 1
        %s915 = scalar_lea.vmem %s12, %s914
        %p916 = pneg %p358
        %p917 = pneg %p355
        %p918 = scmp.lt.s32.totalorder %s43, 1
        %s919 = scalar_select %p918, %s43, 1
        %s920 = scalar_lea.vmem %s13, %s919
        %p921 = pneg %p384
        %p922 = pneg %p381
        %s923 = sand.u32 %s38, 1
        %s924 = scalar_lea.sflag [#allocation5], %s923
        %s925 = sand.u32 %s397, 1
        %s926 = smul.addr %s925, 64
        %s927 = scalar_lea.vmem [#allocation18], %s926
        %p928 = pneg %p410
        %p929 = pneg %p407
        %p930 = scmp.lt.s32.totalorder %s43, 1
        %s931 = scalar_select %p930, %s43, 1
        %s932 = scalar_lea.vmem %s15, %s931
        %p933 = pneg %p436
        %p934 = pneg %p433
        %s935 = sand.u32 %s38, 1
        %s936 = scalar_lea.sflag [#allocation5], %s935
        %s937 = sand.u32 %s449, 1
        %s938 = smul.addr %s937, 64
        %s939 = scalar_lea.vmem [#allocation19], %s938
        %p940 = pneg %p462
        %p941 = pneg %p459
        %p942 = scmp.lt.s32.totalorder %s43, 1
        %s943 = scalar_select %p942, %s43, 1
        %s944 = scalar_lea.vmem %s17, %s943
        %p945 = pneg %p488
        %p946 = pneg %p485
        %p947 = pneg %p514
        %p948 = pneg %p511
        %s949 = sand.u32 %s501, 1
        %s950 = scalar_lea.sflag [#allocation6], %s949
        %s951 = sand.u32 %s501, 1
        %s952 = smul.addr %s951, 16
        %s953 = scalar_lea.vmem [#allocation20], %s952
        %p954 = scmp.lt.s32.totalorder %s43, 1
        %s955 = scalar_select %p954, %s43, 1
        %s956 = scalar_lea.vmem %s6, %s955
        %p957 = scmp.lt.s32.totalorder %s43, 1
        %s958 = scalar_select %p957, %s43, 1
        %s959 = scalar_lea.vmem %s7, %s958
        %p960 = scmp.lt.s32.totalorder %s43, 1
        %s961 = scalar_select %p960, %s43, 1
        %s962 = scalar_lea.vmem %s11, %s961
        %p963 = scmp.lt.s32.totalorder %s43, 1
        %s964 = scalar_select %p963, %s43, 1
        %s965 = scalar_lea.vmem %s12, %s964
        %p966 = scmp.lt.s32.totalorder %s43, 1
        %s967 = scalar_select %p966, %s43, 1
        %s968 = scalar_lea.vmem %s13, %s967
        %p969 = scmp.lt.s32.totalorder %s43, 1
        %s970 = scalar_select %p969, %s43, 1
        %s971 = scalar_lea.vmem %s15, %s970
        %p972 = scmp.lt.s32.totalorder %s43, 1
        %s973 = scalar_select %p972, %s43, 1
        %s974 = scalar_lea.vmem %s17, %s973
        %p976 = scmp.eq.s32.totalorder %s43, 0
        // Predicated region
        $region137: #{tpu_custom_call.1} parent=91 // pred_check
          %p977 = pneg %p976
        $region138: #{tpu_custom_call.1} parent=91 // pred_check_branch
          %979 = sbr.rel (%p977) target = $region140
        $region139: #{tpu_custom_call.1} parent=91 // pred_region
          %v980 = vld [vmem:[%s779] sm:$0xf]
          %v981 = vld [vmem:[%s779 + $0x4] sm:$0xf]
          %v982 = vld [vmem:[#allocation7] sm:$0xf]
          %v983 = vld [vmem:[#allocation7 + $0x4] sm:$0xf]
          %v984 = vld [vmem:[#allocation7 + $0x8] sm:$0xf]
          %v985 = vld [vmem:[#allocation7 + $0xc] sm:$0xf]
          %v986 = vld [vmem:[#allocation7 + $0x10] sm:$0xf]
          %v987 = vld [vmem:[#allocation7 + $0x14] sm:$0xf]
          %v988 = vld [vmem:[#allocation7 + $0x18] sm:$0xf]
          %v989 = vld [vmem:[#allocation7 + $0x1c] sm:$0xf]
          %v990 = vld [vmem:[#allocation7 + $0x20] sm:$0xf]
          %v991 = vld [vmem:[#allocation7 + $0x24] sm:$0xf]
          %v992 = vld [vmem:[#allocation7 + $0x28] sm:$0xf]
          %v993 = vld [vmem:[#allocation7 + $0x2c] sm:$0xf]
          %v994 = vld [vmem:[#allocation7 + $0x30] sm:$0xf]
          %v995 = vld [vmem:[#allocation7 + $0x34] sm:$0xf]
          %v996 = vld [vmem:[#allocation7 + $0x38] sm:$0xf]
          %v997 = vld [vmem:[#allocation7 + $0x3c] sm:$0xf]
          %v998 = vld [vmem:[#allocation9] sm:$0x1]
          %v1000 = vperm.slane %v998, 0
          %v1004 = vunpack.c.l.b16 %v980
          %v1005 = vunpack.c.l.b16 %v981
          %v1006 = vpack.c.b16 %v1005, %v1004
          %v1024 = vunpack.c.l.b16 %v982
          %v1025 = vunpack.c.l.b16 %v983
          %v1026 = vunpack.c.l.b16 %v984
          %v1027 = vunpack.c.l.b16 %v985
          %v1028 = vunpack.c.l.b16 %v986
          %v1029 = vunpack.c.l.b16 %v987
          %v1030 = vunpack.c.l.b16 %v988
          %v1031 = vunpack.c.l.b16 %v989
          %v1032 = vunpack.c.l.b16 %v990
          %v1033 = vunpack.c.l.b16 %v991
          %v1034 = vunpack.c.l.b16 %v992
          %v1035 = vunpack.c.l.b16 %v993
          %v1036 = vunpack.c.l.b16 %v994
          %v1037 = vunpack.c.l.b16 %v995
          %v1038 = vunpack.c.l.b16 %v996
          %v1039 = vunpack.c.l.b16 %v997
          %v1040 = vpack.c.b16 %v1025, %v1024
          %v1041 = vpack.c.b16 %v1027, %v1026
          %v1042 = vpack.c.b16 %v1029, %v1028
          %v1043 = vpack.c.b16 %v1031, %v1030
          %v1044 = vpack.c.b16 %v1033, %v1032
          %v1045 = vpack.c.b16 %v1035, %v1034
          %v1046 = vpack.c.b16 %v1037, %v1036
          %v1047 = vpack.c.b16 %v1039, %v1038
          %1056 = vmatpush.bf16.msra.mxu0 %v1047
          %1057 = vmatpush.bf16.msra.mxu0 %v1046
          %1058 = vmatpush.bf16.msra.mxu0 %v1045
          %1059 = vmatpush.bf16.msra.mxu0 %v1044
          %1060 = vmatpush.bf16.msra.mxu0 %v1043
          %1061 = vmatpush.bf16.msra.mxu0 %v1042
          %1062 = vmatpush.bf16.msra.mxu0 %v1041
          %1063 = vmatpush.bf16.msra.mxu0 %v1040
          %1064 = vmatmul.bf16.gmra.mxu0 %v1006
          %v1065 = vpop.f32.mrf.mxu0
          %v1066 = vadd.f32 %v1000, %v1065
          %v1067 = vpop.f32.mrf.mxu0
          %v1068 = vadd.f32 %v1000, %v1067
          %1069 = vdwg.mxu0
          %v1070 = vld [vmem:[#allocation10] sm:$0xff]
          %v1071 = vld [vmem:[#allocation10 + $0x8] sm:$0xff]
          %v1072 = vadd.f32 %v1066, %v1070
          %v1073 = vadd.f32 %v1068, %v1071
          %1074 = vst [vmem:[#allocation2] sm:$0xff] %v1072
          %1075 = vst [vmem:[#allocation2 + $0x8] sm:$0xff] %v1073
          %1076 = vst [vmem:[#allocation3] sm:$0xff] %v1072
          %1077 = vst [vmem:[#allocation3 + $0x8] sm:$0xff] %v1073
        $region140: #{tpu_custom_call.1} parent=91 // pred_fallthru
          _
        %v1078 = vld [vmem:[#allocation2] sm:$0xff]
        %v1079 = vld [vmem:[#allocation2 + $0x8] sm:$0xff]
        %v1080 = vld [vmem:[%s956] sm:$0x1]
        %v1081 = vld [vmem:[%s959] sm:$0x1]
        %1082 = vadd.xlane.f32.xlu0 %v1078
        %v1083 = vpop.xlane.xlu0 %1082
        %1084 = vadd.xlane.f32.xlu0 %v1079
        %v1085 = vpop.xlane.xlu0 %1084
        %v1086 = vmul.f32 %v1083, 0.03125
        %v1087 = vmul.f32 %v1085, 0.03125
        %v1088 = vmul.f32 %v1078, %v1078
        %v1089 = vmul.f32 %v1079, %v1079
        %1090 = vadd.xlane.f32.xlu0 %v1088
        %v1091 = vpop.xlane.xlu0 %1090
        %1092 = vadd.xlane.f32.xlu0 %v1089
        %v1093 = vpop.xlane.xlu0 %1092
        %v1094 = vmul.f32 %v1091, 0.03125
        %v1095 = vmul.f32 %v1093, 0.03125
        %v1096 = vmul.f32 %v1086, %v1086
        %v1097 = vmul.f32 %v1087, %v1087
        %v1098 = vsub.f32 %v1094, %v1096
        %v1099 = vsub.f32 %v1095, %v1097
        %v1100 = vsub.f32 %v1078, %v1086
        %v1101 = vsub.f32 %v1079, %v1087
        %v1102 = vadd.f32 %v1098, 1e-05
        %v1103 = vadd.f32 %v1099, 1e-05
        %v1104 = vrsqrt.pop %v1102
        %v1105 = vmul.f32 %v1104, %v1102
        %v1106 = vmul.f32 %v1105, %v1104
        %v1107 = vmul.f32 0.5, %v1106
        %v1108 = vsub.f32 1.5, %v1107
        %v1109 = vmul.f32 %v1104, %v1108
        %vm1110 = vweird.f32 %v1102
        %vm1111 = vweird.f32 %v1104
        %vm1112 = vmor %vm1110, %vm1111
        %v1113 = vsel %vm1112, %v1104, %v1109
        %v1114 = vrsqrt.pop %v1103
        %v1115 = vmul.f32 %v1114, %v1103
        %v1116 = vmul.f32 %v1115, %v1114
        %v1117 = vmul.f32 0.5, %v1116
        %v1118 = vsub.f32 1.5, %v1117
        %v1119 = vmul.f32 %v1114, %v1118
        %vm1120 = vweird.f32 %v1103
        %vm1121 = vweird.f32 %v1114
        %vm1122 = vmor %vm1120, %vm1121
        %v1123 = vsel %vm1122, %v1114, %v1119
        %v1124 = vmul.f32 %v1100, %v1113
        %v1125 = vmul.f32 %v1101, %v1123
        %v1127 = vperm.slane %v1080, 0
        %v1129 = vmul.f32 %v1124, %v1127
        %v1130 = vmul.f32 %v1125, %v1127
        %v1132 = vperm.slane %v1081, 0
        %v1134 = vadd.f32 %v1129, %v1132
        %v1135 = vadd.f32 %v1130, %v1132
        %v1136 = vpack.c.bf16 %v1135, %v1134
        %v1137 = vld [vmem:[%s814] sm:$0xff]
        %v1138 = vld [vmem:[%s814 + $0x8] sm:$0xff]
        %v1139 = vld [vmem:[%s814 + $0x10] sm:$0xff]
        %v1140 = vld [vmem:[%s814 + $0x18] sm:$0xff]
        %v1141 = vld [vmem:[%s814 + $0x20] sm:$0xff]
        %v1142 = vld [vmem:[%s814 + $0x28] sm:$0xff]
        %v1143 = vld [vmem:[%s814 + $0x30] sm:$0xff]
        %v1144 = vld [vmem:[%s814 + $0x38] sm:$0xff]
        %v1145 = vld [vmem:[%s814 + $0x40] sm:$0xff]
        %v1146 = vld [vmem:[%s814 + $0x48] sm:$0xff]
        %v1147 = vld [vmem:[%s814 + $0x50] sm:$0xff]
        %v1148 = vld [vmem:[%s814 + $0x58] sm:$0xff]
        %v1149 = vld [vmem:[%s814 + $0x60] sm:$0xff]
        %v1150 = vld [vmem:[%s814 + $0x68] sm:$0xff]
        %v1151 = vld [vmem:[%s814 + $0x70] sm:$0xff]
        %v1152 = vld [vmem:[%s814 + $0x78] sm:$0xff]
        %v1153 = vld [vmem:[%s814 + $0x80] sm:$0xff]
        %v1154 = vld [vmem:[%s814 + $0x88] sm:$0xff]
        %v1155 = vld [vmem:[%s814 + $0x90] sm:$0xff]
        %v1156 = vld [vmem:[%s814 + $0x98] sm:$0xff]
        %v1157 = vld [vmem:[%s814 + $0xa0] sm:$0xff]
        %v1158 = vld [vmem:[%s814 + $0xa8] sm:$0xff]
        %v1159 = vld [vmem:[%s814 + $0xb0] sm:$0xff]
        %v1160 = vld [vmem:[%s814 + $0xb8] sm:$0xff]
        %v1161 = vld [vmem:[%s814 + $0xc0] sm:$0xff]
        %v1162 = vld [vmem:[%s814 + $0xc8] sm:$0xff]
        %v1163 = vld [vmem:[%s814 + $0xd0] sm:$0xff]
        %v1164 = vld [vmem:[%s814 + $0xd8] sm:$0xff]
        %v1165 = vld [vmem:[%s814 + $0xe0] sm:$0xff]
        %v1166 = vld [vmem:[%s814 + $0xe8] sm:$0xff]
        %v1167 = vld [vmem:[%s814 + $0xf0] sm:$0xff]
        %v1168 = vld [vmem:[%s814 + $0xf8] sm:$0xff]
        %v1169 = vld [vmem:[%s814 + $0x100] sm:$0xff]
        %v1170 = vld [vmem:[%s814 + $0x108] sm:$0xff]
        %v1171 = vld [vmem:[%s814 + $0x110] sm:$0xff]
        %v1172 = vld [vmem:[%s814 + $0x118] sm:$0xff]
        %v1173 = vld [vmem:[%s814 + $0x120] sm:$0xff]
        %v1174 = vld [vmem:[%s814 + $0x128] sm:$0xff]
        %v1175 = vld [vmem:[%s814 + $0x130] sm:$0xff]
        %v1176 = vld [vmem:[%s814 + $0x138] sm:$0xff]
        %v1177 = vld [vmem:[%s814 + $0x140] sm:$0xff]
        %v1178 = vld [vmem:[%s814 + $0x148] sm:$0xff]
        %v1179 = vld [vmem:[%s814 + $0x150] sm:$0xff]
        %v1180 = vld [vmem:[%s814 + $0x158] sm:$0xff]
        %v1181 = vld [vmem:[%s814 + $0x160] sm:$0xff]
        %v1182 = vld [vmem:[%s814 + $0x168] sm:$0xff]
        %v1183 = vld [vmem:[%s814 + $0x170] sm:$0xff]
        %v1184 = vld [vmem:[%s814 + $0x178] sm:$0xff]
        %v1185 = vld [vmem:[%s814 + $0x180] sm:$0xff]
        %v1186 = vld [vmem:[%s814 + $0x188] sm:$0xff]
        %v1187 = vld [vmem:[%s814 + $0x190] sm:$0xff]
        %v1188 = vld [vmem:[%s814 + $0x198] sm:$0xff]
        %v1189 = vld [vmem:[%s814 + $0x1a0] sm:$0xff]
        %v1190 = vld [vmem:[%s814 + $0x1a8] sm:$0xff]
        %v1191 = vld [vmem:[%s814 + $0x1b0] sm:$0xff]
        %v1192 = vld [vmem:[%s814 + $0x1b8] sm:$0xff]
        %v1193 = vld [vmem:[%s814 + $0x1c0] sm:$0xff]
        %v1194 = vld [vmem:[%s814 + $0x1c8] sm:$0xff]
        %v1195 = vld [vmem:[%s814 + $0x1d0] sm:$0xff]
        %v1196 = vld [vmem:[%s814 + $0x1d8] sm:$0xff]
        %v1197 = vld [vmem:[%s814 + $0x1e0] sm:$0xff]
        %v1198 = vld [vmem:[%s814 + $0x1e8] sm:$0xff]
        %v1199 = vld [vmem:[%s814 + $0x1f0] sm:$0xff]
        %v1200 = vld [vmem:[%s814 + $0x1f8] sm:$0xff]
        %v1201 = vld [vmem:[%s814 + $0x200] sm:$0xff]
        %v1202 = vld [vmem:[%s814 + $0x208] sm:$0xff]
        %v1203 = vld [vmem:[%s814 + $0x210] sm:$0xff]
        %v1204 = vld [vmem:[%s814 + $0x218] sm:$0xff]
        %v1205 = vld [vmem:[%s814 + $0x220] sm:$0xff]
        %v1206 = vld [vmem:[%s814 + $0x228] sm:$0xff]
        %v1207 = vld [vmem:[%s814 + $0x230] sm:$0xff]
        %v1208 = vld [vmem:[%s814 + $0x238] sm:$0xff]
        %v1209 = vld [vmem:[%s814 + $0x240] sm:$0xff]
        %v1210 = vld [vmem:[%s814 + $0x248] sm:$0xff]
        %v1211 = vld [vmem:[%s814 + $0x250] sm:$0xff]
        %v1212 = vld [vmem:[%s814 + $0x258] sm:$0xff]
        %v1213 = vld [vmem:[%s814 + $0x260] sm:$0xff]
        %v1214 = vld [vmem:[%s814 + $0x268] sm:$0xff]
        %v1215 = vld [vmem:[%s814 + $0x270] sm:$0xff]
        %v1216 = vld [vmem:[%s814 + $0x278] sm:$0xff]
        %v1217 = vld [vmem:[%s814 + $0x280] sm:$0xff]
        %v1218 = vld [vmem:[%s814 + $0x288] sm:$0xff]
        %v1219 = vld [vmem:[%s814 + $0x290] sm:$0xff]
        %v1220 = vld [vmem:[%s814 + $0x298] sm:$0xff]
        %v1221 = vld [vmem:[%s814 + $0x2a0] sm:$0xff]
        %v1222 = vld [vmem:[%s814 + $0x2a8] sm:$0xff]
        %v1223 = vld [vmem:[%s814 + $0x2b0] sm:$0xff]
        %v1224 = vld [vmem:[%s814 + $0x2b8] sm:$0xff]
        %v1225 = vld [vmem:[%s814 + $0x2c0] sm:$0xff]
        %v1226 = vld [vmem:[%s814 + $0x2c8] sm:$0xff]
        %v1227 = vld [vmem:[%s814 + $0x2d0] sm:$0xff]
        %v1228 = vld [vmem:[%s814 + $0x2d8] sm:$0xff]
        %v1229 = vld [vmem:[%s814 + $0x2e0] sm:$0xff]
        %v1230 = vld [vmem:[%s814 + $0x2e8] sm:$0xff]
        %v1231 = vld [vmem:[%s814 + $0x2f0] sm:$0xff]
        %v1232 = vld [vmem:[%s814 + $0x2f8] sm:$0xff]
        %v1233 = vld [vmem:[%s824] sm:$0xff]
        %v1234 = vld [vmem:[%s824 + $0x8] sm:$0xf]
        %v1237 = vperm.slane %v1233, 0
        %v1238 = vperm.slane %v1233, 1
        %v1239 = vperm.slane %v1233, 2
        %v1240 = vperm.slane %v1233, 3
        %v1241 = vperm.slane %v1233, 4
        %v1242 = vperm.slane %v1233, 5
        %v1243 = vperm.slane %v1233, 6
        %v1244 = vperm.slane %v1233, 7
        %v1245 = vperm.slane %v1234, 0
        %v1246 = vperm.slane %v1234, 1
        %v1247 = vperm.slane %v1234, 2
        %v1248 = vperm.slane %v1234, 3
        %v1357 = vunpack.c.l.b16 %v1137
        %v1358 = vunpack.c.h.b16 %v1137
        %v1359 = vunpack.c.l.b16 %v1138
        %v1360 = vunpack.c.h.b16 %v1138
        %v1361 = vunpack.c.l.b16 %v1139
        %v1362 = vunpack.c.h.b16 %v1139
        %v1363 = vunpack.c.l.b16 %v1140
        %v1364 = vunpack.c.h.b16 %v1140
        %v1365 = vunpack.c.l.b16 %v1141
        %v1366 = vunpack.c.h.b16 %v1141
        %v1367 = vunpack.c.l.b16 %v1142
        %v1368 = vunpack.c.h.b16 %v1142
        %v1369 = vunpack.c.l.b16 %v1143
        %v1370 = vunpack.c.h.b16 %v1143
        %v1371 = vunpack.c.l.b16 %v1144
        %v1372 = vunpack.c.h.b16 %v1144
        %v1373 = vunpack.c.l.b16 %v1145
        %v1374 = vunpack.c.h.b16 %v1145
        %v1375 = vunpack.c.l.b16 %v1146
        %v1376 = vunpack.c.h.b16 %v1146
        %v1377 = vunpack.c.l.b16 %v1147
        %v1378 = vunpack.c.h.b16 %v1147
        %v1379 = vunpack.c.l.b16 %v1148
        %v1380 = vunpack.c.h.b16 %v1148
        %v1381 = vunpack.c.l.b16 %v1149
        %v1382 = vunpack.c.h.b16 %v1149
        %v1383 = vunpack.c.l.b16 %v1150
        %v1384 = vunpack.c.h.b16 %v1150
        %v1385 = vunpack.c.l.b16 %v1151
        %v1386 = vunpack.c.h.b16 %v1151
        %v1387 = vunpack.c.l.b16 %v1152
        %v1388 = vunpack.c.h.b16 %v1152
        %v1389 = vunpack.c.l.b16 %v1153
        %v1390 = vunpack.c.h.b16 %v1153
        %v1391 = vunpack.c.l.b16 %v1154
        %v1392 = vunpack.c.h.b16 %v1154
        %v1393 = vunpack.c.l.b16 %v1155
        %v1394 = vunpack.c.h.b16 %v1155
        %v1395 = vunpack.c.l.b16 %v1156
        %v1396 = vunpack.c.h.b16 %v1156
        %v1397 = vunpack.c.l.b16 %v1157
        %v1398 = vunpack.c.h.b16 %v1157
        %v1399 = vunpack.c.l.b16 %v1158
        %v1400 = vunpack.c.h.b16 %v1158
        %v1401 = vunpack.c.l.b16 %v1159
        %v1402 = vunpack.c.h.b16 %v1159
        %v1403 = vunpack.c.l.b16 %v1160
        %v1404 = vunpack.c.h.b16 %v1160
        %v1405 = vunpack.c.l.b16 %v1161
        %v1406 = vunpack.c.h.b16 %v1161
        %v1407 = vunpack.c.l.b16 %v1162
        %v1408 = vunpack.c.h.b16 %v1162
        %v1409 = vunpack.c.l.b16 %v1163
        %v1410 = vunpack.c.h.b16 %v1163
        %v1411 = vunpack.c.l.b16 %v1164
        %v1412 = vunpack.c.h.b16 %v1164
        %v1413 = vunpack.c.l.b16 %v1165
        %v1414 = vunpack.c.h.b16 %v1165
        %v1415 = vunpack.c.l.b16 %v1166
        %v1416 = vunpack.c.h.b16 %v1166
        %v1417 = vunpack.c.l.b16 %v1167
        %v1418 = vunpack.c.h.b16 %v1167
        %v1419 = vunpack.c.l.b16 %v1168
        %v1420 = vunpack.c.h.b16 %v1168
        %v1421 = vunpack.c.l.b16 %v1169
        %v1422 = vunpack.c.h.b16 %v1169
        %v1423 = vunpack.c.l.b16 %v1170
        %v1424 = vunpack.c.h.b16 %v1170
        %v1425 = vunpack.c.l.b16 %v1171
        %v1426 = vunpack.c.h.b16 %v1171
        %v1427 = vunpack.c.l.b16 %v1172
        %v1428 = vunpack.c.h.b16 %v1172
        %v1429 = vunpack.c.l.b16 %v1173
        %v1430 = vunpack.c.h.b16 %v1173
        %v1431 = vunpack.c.l.b16 %v1174
        %v1432 = vunpack.c.h.b16 %v1174
        %v1433 = vunpack.c.l.b16 %v1175
        %v1434 = vunpack.c.h.b16 %v1175
        %v1435 = vunpack.c.l.b16 %v1176
        %v1436 = vunpack.c.h.b16 %v1176
        %v1437 = vunpack.c.l.b16 %v1177
        %v1438 = vunpack.c.h.b16 %v1177
        %v1439 = vunpack.c.l.b16 %v1178
        %v1440 = vunpack.c.h.b16 %v1178
        %v1441 = vunpack.c.l.b16 %v1179
        %v1442 = vunpack.c.h.b16 %v1179
        %v1443 = vunpack.c.l.b16 %v1180
        %v1444 = vunpack.c.h.b16 %v1180
        %v1445 = vunpack.c.l.b16 %v1181
        %v1446 = vunpack.c.h.b16 %v1181
        %v1447 = vunpack.c.l.b16 %v1182
        %v1448 = vunpack.c.h.b16 %v1182
        %v1449 = vunpack.c.l.b16 %v1183
        %v1450 = vunpack.c.h.b16 %v1183
        %v1451 = vunpack.c.l.b16 %v1184
        %v1452 = vunpack.c.h.b16 %v1184
        %v1453 = vunpack.c.l.b16 %v1185
        %v1454 = vunpack.c.h.b16 %v1185
        %v1455 = vunpack.c.l.b16 %v1186
        %v1456 = vunpack.c.h.b16 %v1186
        %v1457 = vunpack.c.l.b16 %v1187
        %v1458 = vunpack.c.h.b16 %v1187
        %v1459 = vunpack.c.l.b16 %v1188
        %v1460 = vunpack.c.h.b16 %v1188
        %v1461 = vunpack.c.l.b16 %v1189
        %v1462 = vunpack.c.h.b16 %v1189
        %v1463 = vunpack.c.l.b16 %v1190
        %v1464 = vunpack.c.h.b16 %v1190
        %v1465 = vunpack.c.l.b16 %v1191
        %v1466 = vunpack.c.h.b16 %v1191
        %v1467 = vunpack.c.l.b16 %v1192
        %v1468 = vunpack.c.h.b16 %v1192
        %v1469 = vunpack.c.l.b16 %v1193
        %v1470 = vunpack.c.h.b16 %v1193
        %v1471 = vunpack.c.l.b16 %v1194
        %v1472 = vunpack.c.h.b16 %v1194
        %v1473 = vunpack.c.l.b16 %v1195
        %v1474 = vunpack.c.h.b16 %v1195
        %v1475 = vunpack.c.l.b16 %v1196
        %v1476 = vunpack.c.h.b16 %v1196
        %v1477 = vunpack.c.l.b16 %v1197
        %v1478 = vunpack.c.h.b16 %v1197
        %v1479 = vunpack.c.l.b16 %v1198
        %v1480 = vunpack.c.h.b16 %v1198
        %v1481 = vunpack.c.l.b16 %v1199
        %v1482 = vunpack.c.h.b16 %v1199
        %v1483 = vunpack.c.l.b16 %v1200
        %v1484 = vunpack.c.h.b16 %v1200
        %v1485 = vunpack.c.l.b16 %v1201
        %v1486 = vunpack.c.h.b16 %v1201
        %v1487 = vunpack.c.l.b16 %v1202
        %v1488 = vunpack.c.h.b16 %v1202
        %v1489 = vunpack.c.l.b16 %v1203
        %v1490 = vunpack.c.h.b16 %v1203
        %v1491 = vunpack.c.l.b16 %v1204
        %v1492 = vunpack.c.h.b16 %v1204
        %v1493 = vunpack.c.l.b16 %v1205
        %v1494 = vunpack.c.h.b16 %v1205
        %v1495 = vunpack.c.l.b16 %v1206
        %v1496 = vunpack.c.h.b16 %v1206
        %v1497 = vunpack.c.l.b16 %v1207
        %v1498 = vunpack.c.h.b16 %v1207
        %v1499 = vunpack.c.l.b16 %v1208
        %v1500 = vunpack.c.h.b16 %v1208
        %v1501 = vunpack.c.l.b16 %v1209
        %v1502 = vunpack.c.h.b16 %v1209
        %v1503 = vunpack.c.l.b16 %v1210
        %v1504 = vunpack.c.h.b16 %v1210
        %v1505 = vunpack.c.l.b16 %v1211
        %v1506 = vunpack.c.h.b16 %v1211
        %v1507 = vunpack.c.l.b16 %v1212
        %v1508 = vunpack.c.h.b16 %v1212
        %v1509 = vunpack.c.l.b16 %v1213
        %v1510 = vunpack.c.h.b16 %v1213
        %v1511 = vunpack.c.l.b16 %v1214
        %v1512 = vunpack.c.h.b16 %v1214
        %v1513 = vunpack.c.l.b16 %v1215
        %v1514 = vunpack.c.h.b16 %v1215
        %v1515 = vunpack.c.l.b16 %v1216
        %v1516 = vunpack.c.h.b16 %v1216
        %v1517 = vunpack.c.l.b16 %v1217
        %v1518 = vunpack.c.h.b16 %v1217
        %v1519 = vunpack.c.l.b16 %v1218
        %v1520 = vunpack.c.h.b16 %v1218
        %v1521 = vunpack.c.l.b16 %v1219
        %v1522 = vunpack.c.h.b16 %v1219
        %v1523 = vunpack.c.l.b16 %v1220
        %v1524 = vunpack.c.h.b16 %v1220
        %v1525 = vunpack.c.l.b16 %v1221
        %v1526 = vunpack.c.h.b16 %v1221
        %v1527 = vunpack.c.l.b16 %v1222
        %v1528 = vunpack.c.h.b16 %v1222
        %v1529 = vunpack.c.l.b16 %v1223
        %v1530 = vunpack.c.h.b16 %v1223
        %v1531 = vunpack.c.l.b16 %v1224
        %v1532 = vunpack.c.h.b16 %v1224
        %v1533 = vunpack.c.l.b16 %v1225
        %v1534 = vunpack.c.h.b16 %v1225
        %v1535 = vunpack.c.l.b16 %v1226
        %v1536 = vunpack.c.h.b16 %v1226
        %v1537 = vunpack.c.l.b16 %v1227
        %v1538 = vunpack.c.h.b16 %v1227
        %v1539 = vunpack.c.l.b16 %v1228
        %v1540 = vunpack.c.h.b16 %v1228
        %v1541 = vunpack.c.l.b16 %v1229
        %v1542 = vunpack.c.h.b16 %v1229
        %v1543 = vunpack.c.l.b16 %v1230
        %v1544 = vunpack.c.h.b16 %v1230
        %v1545 = vunpack.c.l.b16 %v1231
        %v1546 = vunpack.c.h.b16 %v1231
        %v1547 = vunpack.c.l.b16 %v1232
        %v1548 = vunpack.c.h.b16 %v1232
        %v1549 = vpack.c.b16 %v1369, %v1357
        %v1550 = vpack.c.b16 %v1370, %v1358
        %v1551 = vpack.c.b16 %v1371, %v1359
        %v1552 = vpack.c.b16 %v1372, %v1360
        %v1553 = vpack.c.b16 %v1373, %v1361
        %v1554 = vpack.c.b16 %v1374, %v1362
        %v1555 = vpack.c.b16 %v1375, %v1363
        %v1556 = vpack.c.b16 %v1376, %v1364
        %v1557 = vpack.c.b16 %v1377, %v1365
        %v1558 = vpack.c.b16 %v1378, %v1366
        %v1559 = vpack.c.b16 %v1379, %v1367
        %v1560 = vpack.c.b16 %v1380, %v1368
        %v1561 = vpack.c.b16 %v1393, %v1381
        %v1562 = vpack.c.b16 %v1394, %v1382
        %v1563 = vpack.c.b16 %v1395, %v1383
        %v1564 = vpack.c.b16 %v1396, %v1384
        %v1565 = vpack.c.b16 %v1397, %v1385
        %v1566 = vpack.c.b16 %v1398, %v1386
        %v1567 = vpack.c.b16 %v1399, %v1387
        %v1568 = vpack.c.b16 %v1400, %v1388
        %v1569 = vpack.c.b16 %v1401, %v1389
        %v1570 = vpack.c.b16 %v1402, %v1390
        %v1571 = vpack.c.b16 %v1403, %v1391
        %v1572 = vpack.c.b16 %v1404, %v1392
        %v1573 = vpack.c.b16 %v1417, %v1405
        %v1574 = vpack.c.b16 %v1418, %v1406
        %v1575 = vpack.c.b16 %v1419, %v1407
        %v1576 = vpack.c.b16 %v1420, %v1408
        %v1577 = vpack.c.b16 %v1421, %v1409
        %v1578 = vpack.c.b16 %v1422, %v1410
        %v1579 = vpack.c.b16 %v1423, %v1411
        %v1580 = vpack.c.b16 %v1424, %v1412
        %v1581 = vpack.c.b16 %v1425, %v1413
        %v1582 = vpack.c.b16 %v1426, %v1414
        %v1583 = vpack.c.b16 %v1427, %v1415
        %v1584 = vpack.c.b16 %v1428, %v1416
        %v1585 = vpack.c.b16 %v1441, %v1429
        %v1586 = vpack.c.b16 %v1442, %v1430
        %v1587 = vpack.c.b16 %v1443, %v1431
        %v1588 = vpack.c.b16 %v1444, %v1432
        %v1589 = vpack.c.b16 %v1445, %v1433
        %v1590 = vpack.c.b16 %v1446, %v1434
        %v1591 = vpack.c.b16 %v1447, %v1435
        %v1592 = vpack.c.b16 %v1448, %v1436
        %v1593 = vpack.c.b16 %v1449, %v1437
        %v1594 = vpack.c.b16 %v1450, %v1438
        %v1595 = vpack.c.b16 %v1451, %v1439
        %v1596 = vpack.c.b16 %v1452, %v1440
        %v1597 = vpack.c.b16 %v1465, %v1453
        %v1598 = vpack.c.b16 %v1466, %v1454
        %v1599 = vpack.c.b16 %v1467, %v1455
        %v1600 = vpack.c.b16 %v1468, %v1456
        %v1601 = vpack.c.b16 %v1469, %v1457
        %v1602 = vpack.c.b16 %v1470, %v1458
        %v1603 = vpack.c.b16 %v1471, %v1459
        %v1604 = vpack.c.b16 %v1472, %v1460
        %v1605 = vpack.c.b16 %v1473, %v1461
        %v1606 = vpack.c.b16 %v1474, %v1462
        %v1607 = vpack.c.b16 %v1475, %v1463
        %v1608 = vpack.c.b16 %v1476, %v1464
        %v1609 = vpack.c.b16 %v1489, %v1477
        %v1610 = vpack.c.b16 %v1490, %v1478
        %v1611 = vpack.c.b16 %v1491, %v1479
        %v1612 = vpack.c.b16 %v1492, %v1480
        %v1613 = vpack.c.b16 %v1493, %v1481
        %v1614 = vpack.c.b16 %v1494, %v1482
        %v1615 = vpack.c.b16 %v1495, %v1483
        %v1616 = vpack.c.b16 %v1496, %v1484
        %v1617 = vpack.c.b16 %v1497, %v1485
        %v1618 = vpack.c.b16 %v1498, %v1486
        %v1619 = vpack.c.b16 %v1499, %v1487
        %v1620 = vpack.c.b16 %v1500, %v1488
        %v1621 = vpack.c.b16 %v1513, %v1501
        %v1622 = vpack.c.b16 %v1514, %v1502
        %v1623 = vpack.c.b16 %v1515, %v1503
        %v1624 = vpack.c.b16 %v1516, %v1504
        %v1625 = vpack.c.b16 %v1517, %v1505
        %v1626 = vpack.c.b16 %v1518, %v1506
        %v1627 = vpack.c.b16 %v1519, %v1507
        %v1628 = vpack.c.b16 %v1520, %v1508
        %v1629 = vpack.c.b16 %v1521, %v1509
        %v1630 = vpack.c.b16 %v1522, %v1510
        %v1631 = vpack.c.b16 %v1523, %v1511
        %v1632 = vpack.c.b16 %v1524, %v1512
        %v1633 = vpack.c.b16 %v1537, %v1525
        %v1634 = vpack.c.b16 %v1538, %v1526
        %v1635 = vpack.c.b16 %v1539, %v1527
        %v1636 = vpack.c.b16 %v1540, %v1528
        %v1637 = vpack.c.b16 %v1541, %v1529
        %v1638 = vpack.c.b16 %v1542, %v1530
        %v1639 = vpack.c.b16 %v1543, %v1531
        %v1640 = vpack.c.b16 %v1544, %v1532
        %v1641 = vpack.c.b16 %v1545, %v1533
        %v1642 = vpack.c.b16 %v1546, %v1534
        %v1643 = vpack.c.b16 %v1547, %v1535
        %v1644 = vpack.c.b16 %v1548, %v1536
        %1741 = vmatpush.bf16.msra.mxu0 %v1633
        %1742 = vmatpush.bf16.msra.mxu0 %v1621
        %1743 = vmatpush.bf16.msra.mxu0 %v1609
        %1744 = vmatpush.bf16.msra.mxu0 %v1597
        %1745 = vmatpush.bf16.msra.mxu0 %v1585
        %1746 = vmatpush.bf16.msra.mxu0 %v1573
        %1747 = vmatpush.bf16.msra.mxu0 %v1561
        %1748 = vmatpush.bf16.msra.mxu0 %v1549
        %1749 = vmatmul.bf16.gmra.mxu0 %v1136
        %v1750 = vpop.f32.mrf.mxu0
        %v1751 = vadd.f32 %v1237, %v1750
        %v1752 = vpop.f32.mrf.mxu0
        %v1753 = vadd.f32 %v1237, %v1752
        %1754 = vdwg.mxu0
        %1755 = vmatpush.bf16.msra.mxu0 %v1634
        %1756 = vmatpush.bf16.msra.mxu0 %v1622
        %1757 = vmatpush.bf16.msra.mxu0 %v1610
        %1758 = vmatpush.bf16.msra.mxu0 %v1598
        %1759 = vmatpush.bf16.msra.mxu0 %v1586
        %1760 = vmatpush.bf16.msra.mxu0 %v1574
        %1761 = vmatpush.bf16.msra.mxu0 %v1562
        %1762 = vmatpush.bf16.msra.mxu0 %v1550
        %1763 = vmatmul.bf16.gmra.mxu0 %v1136
        %v1764 = vpop.f32.mrf.mxu0
        %v1765 = vadd.f32 %v1238, %v1764
        %v1766 = vpop.f32.mrf.mxu0
        %v1767 = vadd.f32 %v1238, %v1766
        %1768 = vdwg.mxu0
        %1769 = vmatpush.bf16.msra.mxu0 %v1635
        %1770 = vmatpush.bf16.msra.mxu0 %v1623
        %1771 = vmatpush.bf16.msra.mxu0 %v1611
        %1772 = vmatpush.bf16.msra.mxu0 %v1599
        %1773 = vmatpush.bf16.msra.mxu0 %v1587
        %1774 = vmatpush.bf16.msra.mxu0 %v1575
        %1775 = vmatpush.bf16.msra.mxu0 %v1563
        %1776 = vmatpush.bf16.msra.mxu0 %v1551
        %1777 = vmatmul.bf16.gmra.mxu0 %v1136
        %v1778 = vpop.f32.mrf.mxu0
        %v1779 = vadd.f32 %v1239, %v1778
        %v1780 = vpop.f32.mrf.mxu0
        %v1781 = vadd.f32 %v1239, %v1780
        %1782 = vdwg.mxu0
        %1783 = vmatpush.bf16.msra.mxu0 %v1636
        %1784 = vmatpush.bf16.msra.mxu0 %v1624
        %1785 = vmatpush.bf16.msra.mxu0 %v1612
        %1786 = vmatpush.bf16.msra.mxu0 %v1600
        %1787 = vmatpush.bf16.msra.mxu0 %v1588
        %1788 = vmatpush.bf16.msra.mxu0 %v1576
        %1789 = vmatpush.bf16.msra.mxu0 %v1564
        %1790 = vmatpush.bf16.msra.mxu0 %v1552
        %1791 = vmatmul.bf16.gmra.mxu0 %v1136
        %v1792 = vpop.f32.mrf.mxu0
        %v1793 = vadd.f32 %v1240, %v1792
        %v1794 = vpop.f32.mrf.mxu0
        %v1795 = vadd.f32 %v1240, %v1794
        %1796 = vdwg.mxu0
        %1797 = vmatpush.bf16.msra.mxu0 %v1637
        %1798 = vmatpush.bf16.msra.mxu0 %v1625
        %1799 = vmatpush.bf16.msra.mxu0 %v1613
        %1800 = vmatpush.bf16.msra.mxu0 %v1601
        %1801 = vmatpush.bf16.msra.mxu0 %v1589
        %1802 = vmatpush.bf16.msra.mxu0 %v1577
        %1803 = vmatpush.bf16.msra.mxu0 %v1565
        %1804 = vmatpush.bf16.msra.mxu0 %v1553
        %1805 = vmatmul.bf16.gmra.mxu0 %v1136
        %v1806 = vpop.f32.mrf.mxu0
        %v1807 = vadd.f32 %v1241, %v1806
        %v1808 = vpop.f32.mrf.mxu0
        %v1809 = vadd.f32 %v1241, %v1808
        %1810 = vdwg.mxu0
        %1811 = vmatpush.bf16.msra.mxu0 %v1638
        %1812 = vmatpush.bf16.msra.mxu0 %v1626
        %1813 = vmatpush.bf16.msra.mxu0 %v1614
        %1814 = vmatpush.bf16.msra.mxu0 %v1602
        %1815 = vmatpush.bf16.msra.mxu0 %v1590
        %1816 = vmatpush.bf16.msra.mxu0 %v1578
        %1817 = vmatpush.bf16.msra.mxu0 %v1566
        %1818 = vmatpush.bf16.msra.mxu0 %v1554
        %1819 = vmatmul.bf16.gmra.mxu0 %v1136
        %v1820 = vpop.f32.mrf.mxu0
        %v1821 = vadd.f32 %v1242, %v1820
        %v1822 = vpop.f32.mrf.mxu0
        %v1823 = vadd.f32 %v1242, %v1822
        %1824 = vdwg.mxu0
        %1825 = vmatpush.bf16.msra.mxu0 %v1639
        %1826 = vmatpush.bf16.msra.mxu0 %v1627
        %1827 = vmatpush.bf16.msra.mxu0 %v1615
        %1828 = vmatpush.bf16.msra.mxu0 %v1603
        %1829 = vmatpush.bf16.msra.mxu0 %v1591
        %1830 = vmatpush.bf16.msra.mxu0 %v1579
        %1831 = vmatpush.bf16.msra.mxu0 %v1567
        %1832 = vmatpush.bf16.msra.mxu0 %v1555
        %1833 = vmatmul.bf16.gmra.mxu0 %v1136
        %v1834 = vpop.f32.mrf.mxu0
        %v1835 = vadd.f32 %v1243, %v1834
        %v1836 = vpop.f32.mrf.mxu0
        %v1837 = vadd.f32 %v1243, %v1836
        %1838 = vdwg.mxu0
        %1839 = vmatpush.bf16.msra.mxu0 %v1640
        %1840 = vmatpush.bf16.msra.mxu0 %v1628
        %1841 = vmatpush.bf16.msra.mxu0 %v1616
        %1842 = vmatpush.bf16.msra.mxu0 %v1604
        %1843 = vmatpush.bf16.msra.mxu0 %v1592
        %1844 = vmatpush.bf16.msra.mxu0 %v1580
        %1845 = vmatpush.bf16.msra.mxu0 %v1568
        %1846 = vmatpush.bf16.msra.mxu0 %v1556
        %1847 = vmatmul.bf16.gmra.mxu0 %v1136
        %v1848 = vpop.f32.mrf.mxu0
        %v1849 = vadd.f32 %v1244, %v1848
        %v1850 = vpop.f32.mrf.mxu0
        %v1851 = vadd.f32 %v1244, %v1850
        %1852 = vdwg.mxu0
        %1853 = vmatpush.bf16.msra.mxu0 %v1641
        %1854 = vmatpush.bf16.msra.mxu0 %v1629
        %1855 = vmatpush.bf16.msra.mxu0 %v1617
        %1856 = vmatpush.bf16.msra.mxu0 %v1605
        %1857 = vmatpush.bf16.msra.mxu0 %v1593
        %1858 = vmatpush.bf16.msra.mxu0 %v1581
        %1859 = vmatpush.bf16.msra.mxu0 %v1569
        %1860 = vmatpush.bf16.msra.mxu0 %v1557
        %1861 = vmatmul.bf16.gmra.mxu0 %v1136
        %v1862 = vpop.f32.mrf.mxu0
        %v1863 = vadd.f32 %v1245, %v1862
        %v1864 = vpop.f32.mrf.mxu0
        %v1865 = vadd.f32 %v1245, %v1864
        %1866 = vdwg.mxu0
        %1867 = vmatpush.bf16.msra.mxu0 %v1642
        %1868 = vmatpush.bf16.msra.mxu0 %v1630
        %1869 = vmatpush.bf16.msra.mxu0 %v1618
        %1870 = vmatpush.bf16.msra.mxu0 %v1606
        %1871 = vmatpush.bf16.msra.mxu0 %v1594
        %1872 = vmatpush.bf16.msra.mxu0 %v1582
        %1873 = vmatpush.bf16.msra.mxu0 %v1570
        %1874 = vmatpush.bf16.msra.mxu0 %v1558
        %1875 = vmatmul.bf16.gmra.mxu0 %v1136
        %v1876 = vpop.f32.mrf.mxu0
        %v1877 = vadd.f32 %v1246, %v1876
        %v1878 = vpop.f32.mrf.mxu0
        %v1879 = vadd.f32 %v1246, %v1878
        %1880 = vdwg.mxu0
        %1881 = vmatpush.bf16.msra.mxu0 %v1643
        %1882 = vmatpush.bf16.msra.mxu0 %v1631
        %1883 = vmatpush.bf16.msra.mxu0 %v1619
        %1884 = vmatpush.bf16.msra.mxu0 %v1607
        %1885 = vmatpush.bf16.msra.mxu0 %v1595
        %1886 = vmatpush.bf16.msra.mxu0 %v1583
        %1887 = vmatpush.bf16.msra.mxu0 %v1571
        %1888 = vmatpush.bf16.msra.mxu0 %v1559
        %1889 = vmatmul.bf16.gmra.mxu0 %v1136
        %v1890 = vpop.f32.mrf.mxu0
        %v1891 = vadd.f32 %v1247, %v1890
        %v1892 = vpop.f32.mrf.mxu0
        %v1893 = vadd.f32 %v1247, %v1892
        %1894 = vdwg.mxu0
        %1895 = vmatpush.bf16.msra.mxu0 %v1644
        %1896 = vmatpush.bf16.msra.mxu0 %v1632
        %1897 = vmatpush.bf16.msra.mxu0 %v1620
        %1898 = vmatpush.bf16.msra.mxu0 %v1608
        %1899 = vmatpush.bf16.msra.mxu0 %v1596
        %1900 = vmatpush.bf16.msra.mxu0 %v1584
        %1901 = vmatpush.bf16.msra.mxu0 %v1572
        %1902 = vmatpush.bf16.msra.mxu0 %v1560
        %1903 = vmatmul.bf16.gmra.mxu0 %v1136
        %v1904 = vpop.f32.mrf.mxu0
        %v1905 = vadd.f32 %v1248, %v1904
        %v1906 = vpop.f32.mrf.mxu0
        %v1907 = vadd.f32 %v1248, %v1906
        %1908 = vdwg.mxu0
        %v1909 = vpack.c.bf16 %v1751, %v1751
        %v1910 = vpack.c.bf16 %v1753, %v1753
        %v1911 = vpack.c.bf16 %v1765, %v1765
        %v1912 = vpack.c.bf16 %v1767, %v1767
        %v1913 = vpack.c.bf16 %v1779, %v1779
        %v1914 = vpack.c.bf16 %v1781, %v1781
        %v1915 = vpack.c.bf16 %v1793, %v1793
        %v1916 = vpack.c.bf16 %v1795, %v1795
        %v1917 = vpack.c.bf16 %v1807, %v1807
        %v1918 = vpack.c.bf16 %v1809, %v1809
        %v1919 = vpack.c.bf16 %v1821, %v1821
        %v1920 = vpack.c.bf16 %v1823, %v1823
        %v1921 = vpack.c.bf16 %v1835, %v1835
        %v1922 = vpack.c.bf16 %v1837, %v1837
        %v1923 = vpack.c.bf16 %v1849, %v1849
        %v1924 = vpack.c.bf16 %v1851, %v1851
        %v1925 = vpack.c.bf16 %v1863, %v1863
        %v1926 = vpack.c.bf16 %v1865, %v1865
        %v1927 = vpack.c.bf16 %v1877, %v1877
        %v1928 = vpack.c.bf16 %v1879, %v1879
        %v1929 = vpack.c.bf16 %v1891, %v1891
        %v1930 = vpack.c.bf16 %v1893, %v1893
        %v1931 = vpack.c.bf16 %v1905, %v1905
        %v1932 = vpack.c.bf16 %v1907, %v1907
        %v1935 = vunpack.c.l.b16 %v1909
        %v1936 = vunpack.c.l.b16 %v1910
        %v1937 = vpack.c.b16 %v1936, %v1935
        %v1941 = vunpack.c.l.b16 %v1917
        %v1942 = vunpack.c.l.b16 %v1918
        %v1943 = vpack.c.b16 %v1942, %v1941
        %1945 = vmatpush.bf16.xpose.msra.mxu0 0
        %1946 = vmatpush.bf16.xpose.msra.mxu0 0
        %1947 = vmatpush.bf16.xpose.msra.mxu0 0
        %1948 = vmatpush.bf16.xpose.msra.mxu0 0
        %1949 = vmatpush.bf16.xpose.msra.mxu0 0
        %1950 = vmatpush.bf16.xpose.msra.mxu0 0
        %1951 = vmatpush.bf16.xpose.msra.mxu0 0
        %1952 = vmatpush.bf16.xpose.msra.mxu0 %v1943
        %1953 = vmatmul.bf16.gmra.mxu0 %v1937
        %v1954 = vpop.f32.mrf.mxu0
        %v1955 = vadd.f32 0.0, %v1954
        %v1956 = vpop.f32.mrf.mxu0
        %v1957 = vadd.f32 0.0, %v1956
        %1958 = vdwg.mxu0
        %v1961 = vunpack.c.l.b16 %v1911
        %v1962 = vunpack.c.l.b16 %v1912
        %v1963 = vpack.c.b16 %v1962, %v1961
        %v1967 = vunpack.c.l.b16 %v1919
        %v1968 = vunpack.c.l.b16 %v1920
        %v1969 = vpack.c.b16 %v1968, %v1967
        %1971 = vmatpush.bf16.xpose.msra.mxu0 0
        %1972 = vmatpush.bf16.xpose.msra.mxu0 0
        %1973 = vmatpush.bf16.xpose.msra.mxu0 0
        %1974 = vmatpush.bf16.xpose.msra.mxu0 0
        %1975 = vmatpush.bf16.xpose.msra.mxu0 0
        %1976 = vmatpush.bf16.xpose.msra.mxu0 0
        %1977 = vmatpush.bf16.xpose.msra.mxu0 0
        %1978 = vmatpush.bf16.xpose.msra.mxu0 %v1969
        %1979 = vmatmul.bf16.gmra.mxu0 %v1963
        %v1980 = vpop.f32.mrf.mxu0
        %v1981 = vadd.f32 0.0, %v1980
        %v1982 = vpop.f32.mrf.mxu0
        %v1983 = vadd.f32 0.0, %v1982
        %1984 = vdwg.mxu0
        %v1987 = vunpack.c.l.b16 %v1913
        %v1988 = vunpack.c.l.b16 %v1914
        %v1989 = vpack.c.b16 %v1988, %v1987
        %v1993 = vunpack.c.l.b16 %v1921
        %v1994 = vunpack.c.l.b16 %v1922
        %v1995 = vpack.c.b16 %v1994, %v1993
        %1997 = vmatpush.bf16.xpose.msra.mxu0 0
        %1998 = vmatpush.bf16.xpose.msra.mxu0 0
        %1999 = vmatpush.bf16.xpose.msra.mxu0 0
        %2000 = vmatpush.bf16.xpose.msra.mxu0 0
        %2001 = vmatpush.bf16.xpose.msra.mxu0 0
        %2002 = vmatpush.bf16.xpose.msra.mxu0 0
        %2003 = vmatpush.bf16.xpose.msra.mxu0 0
        %2004 = vmatpush.bf16.xpose.msra.mxu0 %v1995
        %2005 = vmatmul.bf16.gmra.mxu0 %v1989
        %v2006 = vpop.f32.mrf.mxu0
        %v2007 = vadd.f32 0.0, %v2006
        %v2008 = vpop.f32.mrf.mxu0
        %v2009 = vadd.f32 0.0, %v2008
        %2010 = vdwg.mxu0
        %v2013 = vunpack.c.l.b16 %v1915
        %v2014 = vunpack.c.l.b16 %v1916
        %v2015 = vpack.c.b16 %v2014, %v2013
        %v2019 = vunpack.c.l.b16 %v1923
        %v2020 = vunpack.c.l.b16 %v1924
        %v2021 = vpack.c.b16 %v2020, %v2019
        %2023 = vmatpush.bf16.xpose.msra.mxu0 0
        %2024 = vmatpush.bf16.xpose.msra.mxu0 0
        %2025 = vmatpush.bf16.xpose.msra.mxu0 0
        %2026 = vmatpush.bf16.xpose.msra.mxu0 0
        %2027 = vmatpush.bf16.xpose.msra.mxu0 0
        %2028 = vmatpush.bf16.xpose.msra.mxu0 0
        %2029 = vmatpush.bf16.xpose.msra.mxu0 0
        %2030 = vmatpush.bf16.xpose.msra.mxu0 %v2021
        %2031 = vmatmul.bf16.gmra.mxu0 %v2015
        %v2032 = vpop.f32.mrf.mxu0
        %v2033 = vadd.f32 0.0, %v2032
        %v2034 = vpop.f32.mrf.mxu0
        %v2035 = vadd.f32 0.0, %v2034
        %2036 = vdwg.mxu0
        %vm2037 = vcmask 130048
        %v2038 = vsel %vm2037, %v1955, -inf
        %2039 = vmax.xlane.f32.xlu0 %v2038
        %v2040 = vpop.xlane.xlu0 %2039
        %v2041 = vsel %vm2037, %v1957, -inf
        %2042 = vmax.xlane.f32.xlu0 %v2041
        %v2043 = vpop.xlane.xlu0 %2042
        %v2044 = vsel %vm2037, %v1981, -inf
        %2045 = vmax.xlane.f32.xlu0 %v2044
        %v2046 = vpop.xlane.xlu0 %2045
        %v2047 = vsel %vm2037, %v1983, -inf
        %2048 = vmax.xlane.f32.xlu0 %v2047
        %v2049 = vpop.xlane.xlu0 %2048
        %v2050 = vsel %vm2037, %v2007, -inf
        %2051 = vmax.xlane.f32.xlu0 %v2050
        %v2052 = vpop.xlane.xlu0 %2051
        %v2053 = vsel %vm2037, %v2009, -inf
        %2054 = vmax.xlane.f32.xlu0 %v2053
        %v2055 = vpop.xlane.xlu0 %2054
        %v2056 = vsel %vm2037, %v2033, -inf
        %2057 = vmax.xlane.f32.xlu0 %v2056
        %v2058 = vpop.xlane.xlu0 %2057
        %v2059 = vsel %vm2037, %v2035, -inf
        %2060 = vmax.xlane.f32.xlu0 %v2059
        %v2061 = vpop.xlane.xlu0 %2060
        %v2062 = vsub.f32 %v1955, %v2040
        %v2063 = vsub.f32 %v1957, %v2043
        %v2064 = vsub.f32 %v1981, %v2046
        %v2065 = vsub.f32 %v1983, %v2049
        %v2066 = vsub.f32 %v2007, %v2052
        %v2067 = vsub.f32 %v2009, %v2055
        %v2068 = vsub.f32 %v2033, %v2058
        %v2069 = vsub.f32 %v2035, %v2061
        %v2070 = vmul.f32 %v2062, 1.442695
        %v2071 = vpow.pop %v2070
        %v2072 = vmul.f32 %v2063, 1.442695
        %v2073 = vpow.pop %v2072
        %v2074 = vmul.f32 %v2064, 1.442695
        %v2075 = vpow.pop %v2074
        %v2076 = vmul.f32 %v2065, 1.442695
        %v2077 = vpow.pop %v2076
        %v2078 = vmul.f32 %v2066, 1.442695
        %v2079 = vpow.pop %v2078
        %v2080 = vmul.f32 %v2067, 1.442695
        %v2081 = vpow.pop %v2080
        %v2082 = vmul.f32 %v2068, 1.442695
        %v2083 = vpow.pop %v2082
        %v2084 = vmul.f32 %v2069, 1.442695
        %v2085 = vpow.pop %v2084
        %v2086 = vsel %vm2037, %v2071, 0.0
        %2087 = vadd.xlane.f32.xlu0 %v2086
        %v2088 = vpop.xlane.xlu0 %2087
        %v2089 = vsel %vm2037, %v2073, 0.0
        %2090 = vadd.xlane.f32.xlu0 %v2089
        %v2091 = vpop.xlane.xlu0 %2090
        %v2092 = vsel %vm2037, %v2075, 0.0
        %2093 = vadd.xlane.f32.xlu0 %v2092
        %v2094 = vpop.xlane.xlu0 %2093
        %v2095 = vsel %vm2037, %v2077, 0.0
        %2096 = vadd.xlane.f32.xlu0 %v2095
        %v2097 = vpop.xlane.xlu0 %2096
        %v2098 = vsel %vm2037, %v2079, 0.0
        %2099 = vadd.xlane.f32.xlu0 %v2098
        %v2100 = vpop.xlane.xlu0 %2099
        %v2101 = vsel %vm2037, %v2081, 0.0
        %2102 = vadd.xlane.f32.xlu0 %v2101
        %v2103 = vpop.xlane.xlu0 %2102
        %v2104 = vsel %vm2037, %v2083, 0.0
        %2105 = vadd.xlane.f32.xlu0 %v2104
        %v2106 = vpop.xlane.xlu0 %2105
        %v2107 = vsel %vm2037, %v2085, 0.0
        %2108 = vadd.xlane.f32.xlu0 %v2107
        %v2109 = vpop.xlane.xlu0 %2108
        %v2110 = vrcp.pop %v2088
        %v2111 = vrcp.pop %v2091
        %v2112 = vrcp.pop %v2094
        %v2113 = vrcp.pop %v2097
        %v2114 = vrcp.pop %v2100
        %v2115 = vrcp.pop %v2103
        %v2116 = vrcp.pop %v2106
        %v2117 = vrcp.pop %v2109
        %v2118 = vmul.f32 %v2071, %v2110
        %v2119 = vmul.f32 %v2073, %v2111
        %v2120 = vmul.f32 %v2075, %v2112
        %v2121 = vmul.f32 %v2077, %v2113
        %v2122 = vmul.f32 %v2079, %v2114
        %v2123 = vmul.f32 %v2081, %v2115
        %v2124 = vmul.f32 %v2083, %v2116
        %v2125 = vmul.f32 %v2085, %v2117
        %v2126 = vpack.c.bf16 %v2118, %v2118
        %v2127 = vpack.c.bf16 %v2119, %v2119
        %v2128 = vpack.c.bf16 %v2120, %v2120
        %v2129 = vpack.c.bf16 %v2121, %v2121
        %v2130 = vpack.c.bf16 %v2122, %v2122
        %v2131 = vpack.c.bf16 %v2123, %v2123
        %v2132 = vpack.c.bf16 %v2124, %v2124
        %v2133 = vpack.c.bf16 %v2125, %v2125
        %v2136 = vunpack.c.l.b16 %v2126
        %v2137 = vunpack.c.l.b16 %v2127
        %v2138 = vpack.c.b16 %v2137, %v2136
        %v2141 = vunpack.c.l.b16 %v1925
        %v2142 = vunpack.c.l.b16 %v1926
        %v2143 = vpack.c.b16 %v2142, %v2141
        %v2146 = vsel %vm2037, %v2138, 0
        %2148 = vmatpush.bf16.msra.mxu0 0
        %2149 = vmatpush.bf16.msra.mxu0 0
        %2150 = vmatpush.bf16.msra.mxu0 0
        %2151 = vmatpush.bf16.msra.mxu0 0
        %2152 = vmatpush.bf16.msra.mxu0 0
        %2153 = vmatpush.bf16.msra.mxu0 0
        %2154 = vmatpush.bf16.msra.mxu0 0
        %2155 = vmatpush.bf16.msra.mxu0 %v2143
        %2156 = vmatmul.bf16.gmra.mxu0 %v2146
        %v2157 = vpop.f32.mrf.mxu0
        %v2158 = vadd.f32 0.0, %v2157
        %v2159 = vpop.f32.mrf.mxu0
        %v2160 = vadd.f32 0.0, %v2159
        %2161 = vdwg.mxu0
        %v2164 = vunpack.c.l.b16 %v2128
        %v2165 = vunpack.c.l.b16 %v2129
        %v2166 = vpack.c.b16 %v2165, %v2164
        %v2169 = vunpack.c.l.b16 %v1927
        %v2170 = vunpack.c.l.b16 %v1928
        %v2171 = vpack.c.b16 %v2170, %v2169
        %v2174 = vsel %vm2037, %v2166, 0
        %2176 = vmatpush.bf16.msra.mxu0 0
        %2177 = vmatpush.bf16.msra.mxu0 0
        %2178 = vmatpush.bf16.msra.mxu0 0
        %2179 = vmatpush.bf16.msra.mxu0 0
        %2180 = vmatpush.bf16.msra.mxu0 0
        %2181 = vmatpush.bf16.msra.mxu0 0
        %2182 = vmatpush.bf16.msra.mxu0 0
        %2183 = vmatpush.bf16.msra.mxu0 %v2171
        %2184 = vmatmul.bf16.gmra.mxu0 %v2174
        %v2185 = vpop.f32.mrf.mxu0
        %v2186 = vadd.f32 0.0, %v2185
        %v2187 = vpop.f32.mrf.mxu0
        %v2188 = vadd.f32 0.0, %v2187
        %2189 = vdwg.mxu0
        %v2192 = vunpack.c.l.b16 %v2130
        %v2193 = vunpack.c.l.b16 %v2131
        %v2194 = vpack.c.b16 %v2193, %v2192
        %v2197 = vunpack.c.l.b16 %v1929
        %v2198 = vunpack.c.l.b16 %v1930
        %v2199 = vpack.c.b16 %v2198, %v2197
        %v2202 = vsel %vm2037, %v2194, 0
        %2204 = vmatpush.bf16.msra.mxu0 0
        %2205 = vmatpush.bf16.msra.mxu0 0
        %2206 = vmatpush.bf16.msra.mxu0 0
        %2207 = vmatpush.bf16.msra.mxu0 0
        %2208 = vmatpush.bf16.msra.mxu0 0
        %2209 = vmatpush.bf16.msra.mxu0 0
        %2210 = vmatpush.bf16.msra.mxu0 0
        %2211 = vmatpush.bf16.msra.mxu0 %v2199
        %2212 = vmatmul.bf16.gmra.mxu0 %v2202
        %v2213 = vpop.f32.mrf.mxu0
        %v2214 = vadd.f32 0.0, %v2213
        %v2215 = vpop.f32.mrf.mxu0
        %v2216 = vadd.f32 0.0, %v2215
        %2217 = vdwg.mxu0
        %v2220 = vunpack.c.l.b16 %v2132
        %v2221 = vunpack.c.l.b16 %v2133
        %v2222 = vpack.c.b16 %v2221, %v2220
        %v2225 = vunpack.c.l.b16 %v1931
        %v2226 = vunpack.c.l.b16 %v1932
        %v2227 = vpack.c.b16 %v2226, %v2225
        %v2230 = vsel %vm2037, %v2222, 0
        %2232 = vmatpush.bf16.msra.mxu0 0
        %2233 = vmatpush.bf16.msra.mxu0 0
        %2234 = vmatpush.bf16.msra.mxu0 0
        %2235 = vmatpush.bf16.msra.mxu0 0
        %2236 = vmatpush.bf16.msra.mxu0 0
        %2237 = vmatpush.bf16.msra.mxu0 0
        %2238 = vmatpush.bf16.msra.mxu0 0
        %2239 = vmatpush.bf16.msra.mxu0 %v2227
        %2240 = vmatmul.bf16.gmra.mxu0 %v2230
        %v2241 = vpop.f32.mrf.mxu0
        %v2242 = vadd.f32 0.0, %v2241
        %v2243 = vpop.f32.mrf.mxu0
        %v2244 = vadd.f32 0.0, %v2243
        %2245 = vdwg.mxu0
        %v2246 = vpack.c.bf16 %v2160, %v2158
        %v2247 = vpack.c.bf16 %v2188, %v2186
        %v2248 = vpack.c.bf16 %v2216, %v2214
        %v2249 = vpack.c.bf16 %v2244, %v2242
        %v2250 = vld [vmem:[%s834] sm:$0xf]
        %v2251 = vld [vmem:[%s834 + $0x4] sm:$0xf]
        %v2252 = vld [vmem:[%s834 + $0x8] sm:$0xf]
        %v2253 = vld [vmem:[%s834 + $0xc] sm:$0xf]
        %v2254 = vld [vmem:[%s834 + $0x10] sm:$0xf]
        %v2255 = vld [vmem:[%s834 + $0x14] sm:$0xf]
        %v2256 = vld [vmem:[%s834 + $0x18] sm:$0xf]
        %v2257 = vld [vmem:[%s834 + $0x1c] sm:$0xf]
        %v2258 = vld [vmem:[%s834 + $0x20] sm:$0xf]
        %v2259 = vld [vmem:[%s834 + $0x24] sm:$0xf]
        %v2260 = vld [vmem:[%s834 + $0x28] sm:$0xf]
        %v2261 = vld [vmem:[%s834 + $0x2c] sm:$0xf]
        %v2262 = vld [vmem:[%s834 + $0x30] sm:$0xf]
        %v2263 = vld [vmem:[%s834 + $0x34] sm:$0xf]
        %v2264 = vld [vmem:[%s834 + $0x38] sm:$0xf]
        %v2265 = vld [vmem:[%s834 + $0x3c] sm:$0xf]
        %v2266 = vld [vmem:[%s834 + $0x40] sm:$0xf]
        %v2267 = vld [vmem:[%s834 + $0x44] sm:$0xf]
        %v2268 = vld [vmem:[%s834 + $0x48] sm:$0xf]
        %v2269 = vld [vmem:[%s834 + $0x4c] sm:$0xf]
        %v2270 = vld [vmem:[%s834 + $0x50] sm:$0xf]
        %v2271 = vld [vmem:[%s834 + $0x54] sm:$0xf]
        %v2272 = vld [vmem:[%s834 + $0x58] sm:$0xf]
        %v2273 = vld [vmem:[%s834 + $0x5c] sm:$0xf]
        %v2274 = vld [vmem:[%s834 + $0x60] sm:$0xf]
        %v2275 = vld [vmem:[%s834 + $0x64] sm:$0xf]
        %v2276 = vld [vmem:[%s834 + $0x68] sm:$0xf]
        %v2277 = vld [vmem:[%s834 + $0x6c] sm:$0xf]
        %v2278 = vld [vmem:[%s834 + $0x70] sm:$0xf]
        %v2279 = vld [vmem:[%s834 + $0x74] sm:$0xf]
        %v2280 = vld [vmem:[%s834 + $0x78] sm:$0xf]
        %v2281 = vld [vmem:[%s834 + $0x7c] sm:$0xf]
        %v2282 = vld [vmem:[%s834 + $0x80] sm:$0xf]
        %v2283 = vld [vmem:[%s834 + $0x84] sm:$0xf]
        %v2284 = vld [vmem:[%s834 + $0x88] sm:$0xf]
        %v2285 = vld [vmem:[%s834 + $0x8c] sm:$0xf]
        %v2286 = vld [vmem:[%s834 + $0x90] sm:$0xf]
        %v2287 = vld [vmem:[%s834 + $0x94] sm:$0xf]
        %v2288 = vld [vmem:[%s834 + $0x98] sm:$0xf]
        %v2289 = vld [vmem:[%s834 + $0x9c] sm:$0xf]
        %v2290 = vld [vmem:[%s834 + $0xa0] sm:$0xf]
        %v2291 = vld [vmem:[%s834 + $0xa4] sm:$0xf]
        %v2292 = vld [vmem:[%s834 + $0xa8] sm:$0xf]
        %v2293 = vld [vmem:[%s834 + $0xac] sm:$0xf]
        %v2294 = vld [vmem:[%s834 + $0xb0] sm:$0xf]
        %v2295 = vld [vmem:[%s834 + $0xb4] sm:$0xf]
        %v2296 = vld [vmem:[%s834 + $0xb8] sm:$0xf]
        %v2297 = vld [vmem:[%s834 + $0xbc] sm:$0xf]
        %v2298 = vld [vmem:[%s834 + $0xc0] sm:$0xf]
        %v2299 = vld [vmem:[%s834 + $0xc4] sm:$0xf]
        %v2300 = vld [vmem:[%s834 + $0xc8] sm:$0xf]
        %v2301 = vld [vmem:[%s834 + $0xcc] sm:$0xf]
        %v2302 = vld [vmem:[%s834 + $0xd0] sm:$0xf]
        %v2303 = vld [vmem:[%s834 + $0xd4] sm:$0xf]
        %v2304 = vld [vmem:[%s834 + $0xd8] sm:$0xf]
        %v2305 = vld [vmem:[%s834 + $0xdc] sm:$0xf]
        %v2306 = vld [vmem:[%s834 + $0xe0] sm:$0xf]
        %v2307 = vld [vmem:[%s834 + $0xe4] sm:$0xf]
        %v2308 = vld [vmem:[%s834 + $0xe8] sm:$0xf]
        %v2309 = vld [vmem:[%s834 + $0xec] sm:$0xf]
        %v2310 = vld [vmem:[%s834 + $0xf0] sm:$0xf]
        %v2311 = vld [vmem:[%s834 + $0xf4] sm:$0xf]
        %v2312 = vld [vmem:[%s834 + $0xf8] sm:$0xf]
        %v2313 = vld [vmem:[%s834 + $0xfc] sm:$0xf]
        %v2314 = vld [vmem:[%s962] sm:$0x1]
        %v2316 = vperm.slane %v2314, 0
        %v2382 = vunpack.c.l.b16 %v2250
        %v2383 = vunpack.c.l.b16 %v2251
        %v2384 = vunpack.c.l.b16 %v2252
        %v2385 = vunpack.c.l.b16 %v2253
        %v2386 = vunpack.c.l.b16 %v2254
        %v2387 = vunpack.c.l.b16 %v2255
        %v2388 = vunpack.c.l.b16 %v2256
        %v2389 = vunpack.c.l.b16 %v2257
        %v2390 = vunpack.c.l.b16 %v2258
        %v2391 = vunpack.c.l.b16 %v2259
        %v2392 = vunpack.c.l.b16 %v2260
        %v2393 = vunpack.c.l.b16 %v2261
        %v2394 = vunpack.c.l.b16 %v2262
        %v2395 = vunpack.c.l.b16 %v2263
        %v2396 = vunpack.c.l.b16 %v2264
        %v2397 = vunpack.c.l.b16 %v2265
        %v2398 = vunpack.c.l.b16 %v2266
        %v2399 = vunpack.c.l.b16 %v2267
        %v2400 = vunpack.c.l.b16 %v2268
        %v2401 = vunpack.c.l.b16 %v2269
        %v2402 = vunpack.c.l.b16 %v2270
        %v2403 = vunpack.c.l.b16 %v2271
        %v2404 = vunpack.c.l.b16 %v2272
        %v2405 = vunpack.c.l.b16 %v2273
        %v2406 = vunpack.c.l.b16 %v2274
        %v2407 = vunpack.c.l.b16 %v2275
        %v2408 = vunpack.c.l.b16 %v2276
        %v2409 = vunpack.c.l.b16 %v2277
        %v2410 = vunpack.c.l.b16 %v2278
        %v2411 = vunpack.c.l.b16 %v2279
        %v2412 = vunpack.c.l.b16 %v2280
        %v2413 = vunpack.c.l.b16 %v2281
        %v2414 = vunpack.c.l.b16 %v2282
        %v2415 = vunpack.c.l.b16 %v2283
        %v2416 = vunpack.c.l.b16 %v2284
        %v2417 = vunpack.c.l.b16 %v2285
        %v2418 = vunpack.c.l.b16 %v2286
        %v2419 = vunpack.c.l.b16 %v2287
        %v2420 = vunpack.c.l.b16 %v2288
        %v2421 = vunpack.c.l.b16 %v2289
        %v2422 = vunpack.c.l.b16 %v2290
        %v2423 = vunpack.c.l.b16 %v2291
        %v2424 = vunpack.c.l.b16 %v2292
        %v2425 = vunpack.c.l.b16 %v2293
        %v2426 = vunpack.c.l.b16 %v2294
        %v2427 = vunpack.c.l.b16 %v2295
        %v2428 = vunpack.c.l.b16 %v2296
        %v2429 = vunpack.c.l.b16 %v2297
        %v2430 = vunpack.c.l.b16 %v2298
        %v2431 = vunpack.c.l.b16 %v2299
        %v2432 = vunpack.c.l.b16 %v2300
        %v2433 = vunpack.c.l.b16 %v2301
        %v2434 = vunpack.c.l.b16 %v2302
        %v2435 = vunpack.c.l.b16 %v2303
        %v2436 = vunpack.c.l.b16 %v2304
        %v2437 = vunpack.c.l.b16 %v2305
        %v2438 = vunpack.c.l.b16 %v2306
        %v2439 = vunpack.c.l.b16 %v2307
        %v2440 = vunpack.c.l.b16 %v2308
        %v2441 = vunpack.c.l.b16 %v2309
        %v2442 = vunpack.c.l.b16 %v2310
        %v2443 = vunpack.c.l.b16 %v2311
        %v2444 = vunpack.c.l.b16 %v2312
        %v2445 = vunpack.c.l.b16 %v2313
        %v2446 = vpack.c.b16 %v2383, %v2382
        %v2447 = vpack.c.b16 %v2385, %v2384
        %v2448 = vpack.c.b16 %v2387, %v2386
        %v2449 = vpack.c.b16 %v2389, %v2388
        %v2450 = vpack.c.b16 %v2391, %v2390
        %v2451 = vpack.c.b16 %v2393, %v2392
        %v2452 = vpack.c.b16 %v2395, %v2394
        %v2453 = vpack.c.b16 %v2397, %v2396
        %v2454 = vpack.c.b16 %v2399, %v2398
        %v2455 = vpack.c.b16 %v2401, %v2400
        %v2456 = vpack.c.b16 %v2403, %v2402
        %v2457 = vpack.c.b16 %v2405, %v2404
        %v2458 = vpack.c.b16 %v2407, %v2406
        %v2459 = vpack.c.b16 %v2409, %v2408
        %v2460 = vpack.c.b16 %v2411, %v2410
        %v2461 = vpack.c.b16 %v2413, %v2412
        %v2462 = vpack.c.b16 %v2415, %v2414
        %v2463 = vpack.c.b16 %v2417, %v2416
        %v2464 = vpack.c.b16 %v2419, %v2418
        %v2465 = vpack.c.b16 %v2421, %v2420
        %v2466 = vpack.c.b16 %v2423, %v2422
        %v2467 = vpack.c.b16 %v2425, %v2424
        %v2468 = vpack.c.b16 %v2427, %v2426
        %v2469 = vpack.c.b16 %v2429, %v2428
        %v2470 = vpack.c.b16 %v2431, %v2430
        %v2471 = vpack.c.b16 %v2433, %v2432
        %v2472 = vpack.c.b16 %v2435, %v2434
        %v2473 = vpack.c.b16 %v2437, %v2436
        %v2474 = vpack.c.b16 %v2439, %v2438
        %v2475 = vpack.c.b16 %v2441, %v2440
        %v2476 = vpack.c.b16 %v2443, %v2442
        %v2477 = vpack.c.b16 %v2445, %v2444
        %2510 = vmatpush.bf16.msra.mxu0 %v2453
        %2511 = vmatpush.bf16.msra.mxu0 %v2452
        %2512 = vmatpush.bf16.msra.mxu0 %v2451
        %2513 = vmatpush.bf16.msra.mxu0 %v2450
        %2514 = vmatpush.bf16.msra.mxu0 %v2449
        %2515 = vmatpush.bf16.msra.mxu0 %v2448
        %2516 = vmatpush.bf16.msra.mxu0 %v2447
        %2517 = vmatpush.bf16.msra.mxu0 %v2446
        %2518 = vmatmul.bf16.gmra.mxu0 %v2246
        %v2519 = vpop.f32.mrf.mxu0
        %v2520 = vadd.f32 %v2316, %v2519
        %v2521 = vpop.f32.mrf.mxu0
        %v2522 = vadd.f32 %v2316, %v2521
        %2523 = vdwg.mxu0
        %2524 = vmatpush.bf16.msra.mxu0 %v2461
        %2525 = vmatpush.bf16.msra.mxu0 %v2460
        %2526 = vmatpush.bf16.msra.mxu0 %v2459
        %2527 = vmatpush.bf16.msra.mxu0 %v2458
        %2528 = vmatpush.bf16.msra.mxu0 %v2457
        %2529 = vmatpush.bf16.msra.mxu0 %v2456
        %2530 = vmatpush.bf16.msra.mxu0 %v2455
        %2531 = vmatpush.bf16.msra.mxu0 %v2454
        %2532 = vmatmul.bf16.gmra.mxu0 %v2247
        %v2533 = vpop.f32.mrf.mxu0
        %v2534 = vadd.f32 %v2520, %v2533
        %v2535 = vpop.f32.mrf.mxu0
        %v2536 = vadd.f32 %v2522, %v2535
        %2537 = vdwg.mxu0
        %2538 = vmatpush.bf16.msra.mxu0 %v2469
        %2539 = vmatpush.bf16.msra.mxu0 %v2468
        %2540 = vmatpush.bf16.msra.mxu0 %v2467
        %2541 = vmatpush.bf16.msra.mxu0 %v2466
        %2542 = vmatpush.bf16.msra.mxu0 %v2465
        %2543 = vmatpush.bf16.msra.mxu0 %v2464
        %2544 = vmatpush.bf16.msra.mxu0 %v2463
        %2545 = vmatpush.bf16.msra.mxu0 %v2462
        %2546 = vmatmul.bf16.gmra.mxu0 %v2248
        %v2547 = vpop.f32.mrf.mxu0
        %v2548 = vadd.f32 %v2534, %v2547
        %v2549 = vpop.f32.mrf.mxu0
        %v2550 = vadd.f32 %v2536, %v2549
        %2551 = vdwg.mxu0
        %2552 = vmatpush.bf16.msra.mxu0 %v2477
        %2553 = vmatpush.bf16.msra.mxu0 %v2476
        %2554 = vmatpush.bf16.msra.mxu0 %v2475
        %2555 = vmatpush.bf16.msra.mxu0 %v2474
        %2556 = vmatpush.bf16.msra.mxu0 %v2473
        %2557 = vmatpush.bf16.msra.mxu0 %v2472
        %2558 = vmatpush.bf16.msra.mxu0 %v2471
        %2559 = vmatpush.bf16.msra.mxu0 %v2470
        %2560 = vmatmul.bf16.gmra.mxu0 %v2249
        %v2561 = vpop.f32.mrf.mxu0
        %v2562 = vadd.f32 %v2548, %v2561
        %v2563 = vpop.f32.mrf.mxu0
        %v2564 = vadd.f32 %v2550, %v2563
        %2565 = vdwg.mxu0
        %v2566 = vadd.f32 %v1078, %v2562
        %v2567 = vadd.f32 %v1079, %v2564
        %v2568 = vld [vmem:[%s965] sm:$0x1]
        %v2569 = vld [vmem:[%s968] sm:$0x1]
        %2570 = vadd.xlane.f32.xlu0 %v2566
        %v2571 = vpop.xlane.xlu0 %2570
        %2572 = vadd.xlane.f32.xlu0 %v2567
        %v2573 = vpop.xlane.xlu0 %2572
        %v2574 = vmul.f32 %v2571, 0.03125
        %v2575 = vmul.f32 %v2573, 0.03125
        %v2576 = vmul.f32 %v2566, %v2566
        %v2577 = vmul.f32 %v2567, %v2567
        %2578 = vadd.xlane.f32.xlu0 %v2576
        %v2579 = vpop.xlane.xlu0 %2578
        %2580 = vadd.xlane.f32.xlu0 %v2577
        %v2581 = vpop.xlane.xlu0 %2580
        %v2582 = vmul.f32 %v2579, 0.03125
        %v2583 = vmul.f32 %v2581, 0.03125
        %v2584 = vmul.f32 %v2574, %v2574
        %v2585 = vmul.f32 %v2575, %v2575
        %v2586 = vsub.f32 %v2582, %v2584
        %v2587 = vsub.f32 %v2583, %v2585
        %v2588 = vsub.f32 %v2566, %v2574
        %v2589 = vsub.f32 %v2567, %v2575
        %v2590 = vadd.f32 %v2586, 1e-05
        %v2591 = vadd.f32 %v2587, 1e-05
        %v2592 = vrsqrt.pop %v2590
        %v2593 = vmul.f32 %v2592, %v2590
        %v2594 = vmul.f32 %v2593, %v2592
        %v2595 = vmul.f32 0.5, %v2594
        %v2596 = vsub.f32 1.5, %v2595
        %v2597 = vmul.f32 %v2592, %v2596
        %vm2598 = vweird.f32 %v2590
        %vm2599 = vweird.f32 %v2592
        %vm2600 = vmor %vm2598, %vm2599
        %v2601 = vsel %vm2600, %v2592, %v2597
        %v2602 = vrsqrt.pop %v2591
        %v2603 = vmul.f32 %v2602, %v2591
        %v2604 = vmul.f32 %v2603, %v2602
        %v2605 = vmul.f32 0.5, %v2604
        %v2606 = vsub.f32 1.5, %v2605
        %v2607 = vmul.f32 %v2602, %v2606
        %vm2608 = vweird.f32 %v2591
        %vm2609 = vweird.f32 %v2602
        %vm2610 = vmor %vm2608, %vm2609
        %v2611 = vsel %vm2610, %v2602, %v2607
        %v2612 = vmul.f32 %v2588, %v2601
        %v2613 = vmul.f32 %v2589, %v2611
        %v2615 = vperm.slane %v2568, 0
        %v2617 = vmul.f32 %v2612, %v2615
        %v2618 = vmul.f32 %v2613, %v2615
        %v2620 = vperm.slane %v2569, 0
        %v2622 = vadd.f32 %v2617, %v2620
        %v2623 = vadd.f32 %v2618, %v2620
        %v2624 = vpack.c.bf16 %v2623, %v2622
        %v2625 = vld [vmem:[%s844] sm:$0xf]
        %v2626 = vld [vmem:[%s844 + $0x4] sm:$0xf]
        %v2627 = vld [vmem:[%s844 + $0x8] sm:$0xf]
        %v2628 = vld [vmem:[%s844 + $0xc] sm:$0xf]
        %v2629 = vld [vmem:[%s844 + $0x10] sm:$0xf]
        %v2630 = vld [vmem:[%s844 + $0x14] sm:$0xf]
        %v2631 = vld [vmem:[%s844 + $0x18] sm:$0xf]
        %v2632 = vld [vmem:[%s844 + $0x1c] sm:$0xf]
        %v2633 = vld [vmem:[%s844 + $0x20] sm:$0xf]
        %v2634 = vld [vmem:[%s844 + $0x24] sm:$0xf]
        %v2635 = vld [vmem:[%s844 + $0x28] sm:$0xf]
        %v2636 = vld [vmem:[%s844 + $0x2c] sm:$0xf]
        %v2637 = vld [vmem:[%s844 + $0x30] sm:$0xf]
        %v2638 = vld [vmem:[%s844 + $0x34] sm:$0xf]
        %v2639 = vld [vmem:[%s844 + $0x38] sm:$0xf]
        %v2640 = vld [vmem:[%s844 + $0x3c] sm:$0xf]
        %v2641 = vld [vmem:[%s971] sm:$0x1]
        %v2643 = vperm.slane %v2641, 0
        %v2661 = vunpack.c.l.b16 %v2625
        %v2662 = vunpack.c.l.b16 %v2626
        %v2663 = vunpack.c.l.b16 %v2627
        %v2664 = vunpack.c.l.b16 %v2628
        %v2665 = vunpack.c.l.b16 %v2629
        %v2666 = vunpack.c.l.b16 %v2630
        %v2667 = vunpack.c.l.b16 %v2631
        %v2668 = vunpack.c.l.b16 %v2632
        %v2669 = vunpack.c.l.b16 %v2633
        %v2670 = vunpack.c.l.b16 %v2634
        %v2671 = vunpack.c.l.b16 %v2635
        %v2672 = vunpack.c.l.b16 %v2636
        %v2673 = vunpack.c.l.b16 %v2637
        %v2674 = vunpack.c.l.b16 %v2638
        %v2675 = vunpack.c.l.b16 %v2639
        %v2676 = vunpack.c.l.b16 %v2640
        %v2677 = vpack.c.b16 %v2662, %v2661
        %v2678 = vpack.c.b16 %v2664, %v2663
        %v2679 = vpack.c.b16 %v2666, %v2665
        %v2680 = vpack.c.b16 %v2668, %v2667
        %v2681 = vpack.c.b16 %v2670, %v2669
        %v2682 = vpack.c.b16 %v2672, %v2671
        %v2683 = vpack.c.b16 %v2674, %v2673
        %v2684 = vpack.c.b16 %v2676, %v2675
        %2693 = vmatpush.bf16.msra.mxu0 %v2684
        %2694 = vmatpush.bf16.msra.mxu0 %v2683
        %2695 = vmatpush.bf16.msra.mxu0 %v2682
        %2696 = vmatpush.bf16.msra.mxu0 %v2681
        %2697 = vmatpush.bf16.msra.mxu0 %v2680
        %2698 = vmatpush.bf16.msra.mxu0 %v2679
        %2699 = vmatpush.bf16.msra.mxu0 %v2678
        %2700 = vmatpush.bf16.msra.mxu0 %v2677
        %2701 = vmatmul.bf16.gmra.mxu0 %v2624
        %v2702 = vpop.f32.mrf.mxu0
        %v2703 = vadd.f32 %v2643, %v2702
        %v2704 = vpop.f32.mrf.mxu0
        %v2705 = vadd.f32 %v2643, %v2704
        %2706 = vdwg.mxu0
        %v2707 = vmul.f32 %v2703, 0.5
        %v2708 = vmul.f32 %v2705, 0.5
        %v2709 = vmul.f32 %v2703, 0.044715
        %v2710 = vmul.f32 %v2705, 0.044715
        %v2711 = vmul.f32 %v2709, %v2703
        %v2712 = vmul.f32 %v2710, %v2705
        %v2713 = vmul.f32 %v2711, %v2703
        %v2714 = vmul.f32 %v2712, %v2705
        %v2715 = vadd.f32 %v2703, %v2713
        %v2716 = vadd.f32 %v2705, %v2714
        %v2717 = vmul.f32 %v2715, 0.7978846
        %v2718 = vmul.f32 %v2716, 0.7978846
        %v2719 = vtanh.pop %v2717
        %v2720 = vtanh.pop %v2718
        %v2721 = vadd.f32 %v2719, 1.0
        %v2722 = vadd.f32 %v2720, 1.0
        %v2723 = vmul.f32 %v2707, %v2721
        %v2724 = vmul.f32 %v2708, %v2722
        %v2725 = vpack.c.bf16 %v2724, %v2723
        %v2726 = vld [vmem:[%s854] sm:$0xf]
        %v2727 = vld [vmem:[%s854 + $0x4] sm:$0xf]
        %v2728 = vld [vmem:[%s854 + $0x8] sm:$0xf]
        %v2729 = vld [vmem:[%s854 + $0xc] sm:$0xf]
        %v2730 = vld [vmem:[%s854 + $0x10] sm:$0xf]
        %v2731 = vld [vmem:[%s854 + $0x14] sm:$0xf]
        %v2732 = vld [vmem:[%s854 + $0x18] sm:$0xf]
        %v2733 = vld [vmem:[%s854 + $0x1c] sm:$0xf]
        %v2734 = vld [vmem:[%s854 + $0x20] sm:$0xf]
        %v2735 = vld [vmem:[%s854 + $0x24] sm:$0xf]
        %v2736 = vld [vmem:[%s854 + $0x28] sm:$0xf]
        %v2737 = vld [vmem:[%s854 + $0x2c] sm:$0xf]
        %v2738 = vld [vmem:[%s854 + $0x30] sm:$0xf]
        %v2739 = vld [vmem:[%s854 + $0x34] sm:$0xf]
        %v2740 = vld [vmem:[%s854 + $0x38] sm:$0xf]
        %v2741 = vld [vmem:[%s854 + $0x3c] sm:$0xf]
        %v2742 = vld [vmem:[%s974] sm:$0x1]
        %v2744 = vperm.slane %v2742, 0
        %v2762 = vunpack.c.l.b16 %v2726
        %v2763 = vunpack.c.l.b16 %v2727
        %v2764 = vunpack.c.l.b16 %v2728
        %v2765 = vunpack.c.l.b16 %v2729
        %v2766 = vunpack.c.l.b16 %v2730
        %v2767 = vunpack.c.l.b16 %v2731
        %v2768 = vunpack.c.l.b16 %v2732
        %v2769 = vunpack.c.l.b16 %v2733
        %v2770 = vunpack.c.l.b16 %v2734
        %v2771 = vunpack.c.l.b16 %v2735
        %v2772 = vunpack.c.l.b16 %v2736
        %v2773 = vunpack.c.l.b16 %v2737
        %v2774 = vunpack.c.l.b16 %v2738
        %v2775 = vunpack.c.l.b16 %v2739
        %v2776 = vunpack.c.l.b16 %v2740
        %v2777 = vunpack.c.l.b16 %v2741
        %v2778 = vpack.c.b16 %v2763, %v2762
        %v2779 = vpack.c.b16 %v2765, %v2764
        %v2780 = vpack.c.b16 %v2767, %v2766
        %v2781 = vpack.c.b16 %v2769, %v2768
        %v2782 = vpack.c.b16 %v2771, %v2770
        %v2783 = vpack.c.b16 %v2773, %v2772
        %v2784 = vpack.c.b16 %v2775, %v2774
        %v2785 = vpack.c.b16 %v2777, %v2776
        %2794 = vmatpush.bf16.msra.mxu0 %v2785
        %2795 = vmatpush.bf16.msra.mxu0 %v2784
        %2796 = vmatpush.bf16.msra.mxu0 %v2783
        %2797 = vmatpush.bf16.msra.mxu0 %v2782
        %2798 = vmatpush.bf16.msra.mxu0 %v2781
        %2799 = vmatpush.bf16.msra.mxu0 %v2780
        %2800 = vmatpush.bf16.msra.mxu0 %v2779
        %2801 = vmatpush.bf16.msra.mxu0 %v2778
        %2802 = vmatmul.bf16.gmra.mxu0 %v2725
        %v2803 = vpop.f32.mrf.mxu0
        %v2804 = vadd.f32 %v2744, %v2803
        %v2805 = vpop.f32.mrf.mxu0
        %v2806 = vadd.f32 %v2744, %v2805
        %2807 = vdwg.mxu0
        %v2808 = vadd.f32 %v2566, %v2804
        %v2809 = vadd.f32 %v2567, %v2806
        %2810 = vst [vmem:[#allocation2] sm:$0xff] %v2808
        %2811 = vst [vmem:[#allocation2 + $0x8] sm:$0xff] %v2809
        %p2812 = scmp.eq.s32.totalorder %s43, 1
        // Predicated region
        $region141: #{tpu_custom_call.1} parent=91 // pred_check
          %p2813 = pneg %p2812
        $region142: #{tpu_custom_call.1} parent=91 // pred_check_branch
          %2815 = sbr.rel (%p2813) target = $region144
        $region143: #{tpu_custom_call.1} parent=91 // pred_region
          %v2816 = vld [vmem:[#allocation3] sm:$0xff]
          %v2817 = vld [vmem:[#allocation3 + $0x8] sm:$0xff]
          %v2818 = vadd.f32 %v2808, %v2816
          %v2819 = vadd.f32 %v2809, %v2817
          %v2820 = vld [vmem:[#allocation12] sm:$0x1]
          %v2821 = vld [vmem:[#allocation13] sm:$0x1]
          %2822 = vadd.xlane.f32.xlu0 %v2818
          %v2823 = vpop.xlane.xlu0 %2822
          %2824 = vadd.xlane.f32.xlu0 %v2819
          %v2825 = vpop.xlane.xlu0 %2824
          %v2826 = vmul.f32 %v2823, 0.03125
          %v2827 = vmul.f32 %v2825, 0.03125
          %v2828 = vmul.f32 %v2818, %v2818
          %v2829 = vmul.f32 %v2819, %v2819
          %2830 = vadd.xlane.f32.xlu0 %v2828
          %v2831 = vpop.xlane.xlu0 %2830
          %2832 = vadd.xlane.f32.xlu0 %v2829
          %v2833 = vpop.xlane.xlu0 %2832
          %v2834 = vmul.f32 %v2831, 0.03125
          %v2835 = vmul.f32 %v2833, 0.03125
          %v2836 = vmul.f32 %v2826, %v2826
          %v2837 = vmul.f32 %v2827, %v2827
          %v2838 = vsub.f32 %v2834, %v2836
          %v2839 = vsub.f32 %v2835, %v2837
          %v2840 = vsub.f32 %v2818, %v2826
          %v2841 = vsub.f32 %v2819, %v2827
          %v2842 = vadd.f32 %v2838, 1e-05
          %v2843 = vadd.f32 %v2839, 1e-05
          %v2844 = vrsqrt.pop %v2842
          %v2845 = vmul.f32 %v2844, %v2842
          %v2846 = vmul.f32 %v2845, %v2844
          %v2847 = vmul.f32 0.5, %v2846
          %v2848 = vsub.f32 1.5, %v2847
          %v2849 = vmul.f32 %v2844, %v2848
          %vm2850 = vweird.f32 %v2842
          %vm2851 = vweird.f32 %v2844
          %vm2852 = vmor %vm2850, %vm2851
          %v2853 = vsel %vm2852, %v2844, %v2849
          %v2854 = vrsqrt.pop %v2843
          %v2855 = vmul.f32 %v2854, %v2843
          %v2856 = vmul.f32 %v2855, %v2854
          %v2857 = vmul.f32 0.5, %v2856
          %v2858 = vsub.f32 1.5, %v2857
          %v2859 = vmul.f32 %v2854, %v2858
          %vm2860 = vweird.f32 %v2843
          %vm2861 = vweird.f32 %v2854
          %vm2862 = vmor %vm2860, %vm2861
          %v2863 = vsel %vm2862, %v2854, %v2859
          %v2864 = vmul.f32 %v2840, %v2853
          %v2865 = vmul.f32 %v2841, %v2863
          %v2867 = vperm.slane %v2820, 0
          %v2869 = vmul.f32 %v2864, %v2867
          %v2870 = vmul.f32 %v2865, %v2867
          %v2872 = vperm.slane %v2821, 0
          %v2874 = vadd.f32 %v2869, %v2872
          %v2875 = vadd.f32 %v2870, %v2872
          %2876 = vst [vmem:[%s953] sm:$0xff] %v2874
          %2877 = vst [vmem:[%s953 + $0x8] sm:$0xff] %v2875
        $region144: #{tpu_custom_call.1} parent=91 // pred_fallthru
          _
        %s2878 = sand.u32 %s501, 1
        %s2879 = scalar_lea.sflag [#allocation6], %s2878
        %s2880 = sand.u32 %s501, 1
        %s2881 = smul.addr %s2880, 16
        %s2882 = scalar_lea.vmem [#allocation20], %s2881
        // Predicated region
        $region145: #{tpu_custom_call.1} parent=91 // pred_check
          %p2883 = pneg %p511
        $region146: #{tpu_custom_call.1} parent=91 // pred_check_branch
          %2885 = sbr.rel (%p2883) target = $region148
        $region147: #{tpu_custom_call.1} parent=91 // pred_region
          %2887 = vsyncadd %s2879, 0
          %s2888 = smul.addr %s42, 2
          %s2889 = smul.addr %s2888, 8
          %s2890 = scalar_lea.hbm %s18, %s2889
          %s2891 = sshll.u32 %s2882, 4
          %s2892 = int_to_ptr.vmem [resolvable:$true] %s2891
          %s2893 = sshll.u32 %s2890, 4
          %s2894 = int_to_ptr.hbm [resolvable:$true] %s2893
          %2899 = dma.vmem_to_hbm [thread:$0]  %s2892, 256, %s2894, %s2879, 128, 128, 8
        $region148: #{tpu_custom_call.1} parent=91 // pred_fallthru
          _
      $region92: #{tpu_custom_call.1} parent=5 // pred_fallthru
        _
      %p2900 = scmp.le.s32.totalorder 2, %s33
      // Predicated region
      $region149: #{tpu_custom_call.1} parent=5 // pred_check
        %p2901 = pneg %p2900
      $region150: #{tpu_custom_call.1} parent=5 // pred_check_branch
        %2903 = sbr.rel (%p2901) target = $region152
      $region151: #{tpu_custom_call.1} parent=5 // pred_region
        %s2904 = ssub.s32 %s33, 2
        // Predicated region
        $region153: #{tpu_custom_call.1} parent=151 // pred_check
          %p2905 = pneg %p517
        $region154: #{tpu_custom_call.1} parent=151 // pred_check_branch
          %2907 = sbr.rel (%p2905) target = $region156
        $region155: #{tpu_custom_call.1} parent=151 // pred_region
          %s2908 = sand.u32 %s502, 1
          %s2909 = scalar_lea.sflag [#allocation6], %s2908
          %s2910 = sand.u32 %s502, 1
          %s2911 = smul.addr %s2910, 16
          %s2912 = scalar_lea.vmem [#allocation20], %s2911
          %2914 = dma.done %s2909, 256
        $region156: #{tpu_custom_call.1} parent=151 // pred_fallthru
          _
      $region152: #{tpu_custom_call.1} parent=5 // pred_fallthru
        _
    $region6: #{tpu_custom_call.1} parent=1 // loop_footer
      %s37 = sadd.s32 1, %s33
    $region7: #{tpu_custom_call.1} parent=1 // loop_footer_branch
      %32 = sbr.rel target = $region3
    $region8: #{tpu_custom_call.1} parent=1 // loop_exit
      _
    %2915 = vsyncpa [#allocation5], 1
    %s2916 = scalar_lea.sflag [#allocation5], 1
    %2917 = vsyncpa %s2916, 1
    %2918 = vsyncpa [#allocation8], 1
    %2919 = vsyncpa [#allocation11], 1
    %2920 = vsyncpa [#allocation14], 1
    %2921 = vsyncpa [#allocation6], 1
    %s2922 = scalar_lea.sflag [#allocation6], 1
    %2923 = vsyncpa %s2922, 1

</llo_original>
